<compile_context>
chip_gen: v6e
topology: v6e:2x2x1
jax: 0.10.0
libtpu: 0.0.40
codegen_flags: <defaults>
</compile_context>

<pallas_src>
import jax
import jax.numpy as jnp
from jax.experimental import pallas as pl
from jax.experimental.pallas import tpu as pltpu

# ---- module hyper-parameters (scaled down where the original is huge) ------
NZ = 50            # nz from the reference script
EMB_SIZE = 14      # stand-in for class_embeddings.embedding_dim (from pickle)
NGF = 16           # original ngf=128, scaled down for a small runnable example
NC = 3
NUM_CLASSES = 10
BN_EPS = 1e-5

MXU_DTYPE = jnp.bfloat16        # bf16 operands, f32 accumulation on the MXU
MAX_TILE_N = 2048               # cap on the lane (N) tile of the GEMM output
VMEM_LIMIT = 48 * 1024 * 1024   # headroom for full-scale weights, < v7x physical

# stride-2 ConvT layers (K=4, stride=2, padding=1); l1 is handled separately.
LAYER_CFGS = (("l2", "relu"), ("l3", "relu"), ("l4", "relu"), ("l5", "tanh"))


# ------------------------------ Pallas kernels --------------------------------
def _make_gemm_kernel(activation):
    """Fused GEMM + folded-BatchNorm affine + activation.

      lhs_ref: (M, K)  bf16
      rhs_ref: (K, N)  bf16
      s_ref, b_ref: broadcastable f32 affine (per output channel)
      o_ref:  (M, N)   output block (bf16 for hidden layers, f32 for the last)
    """

    def kernel(lhs_ref, rhs_ref, s_ref, b_ref, o_ref):
        acc = jnp.dot(lhs_ref[...], rhs_ref[...],
                      preferred_element_type=jnp.float32)
        y = acc * s_ref[...] + b_ref[...]
        if activation == "relu":
            y = jnp.maximum(y, 0.0)
        else:  # "tanh"
            y = jnp.tanh(y)
        o_ref[...] = y.astype(o_ref.dtype)

    return kernel


def _pick_tile(n, cap=MAX_TILE_N):
    """Largest tile <= cap that divides n; multiple of 128 when tiling."""
    if n <= cap:
        return n
    t = (cap // 128) * 128
    while t >= 128:
        if n % t == 0:
            return t
        t -= 128
    return n


# ------------------------------ layer wrappers --------------------------------
def input_block(x2d, w_t, scale, bias):
    """l1: ConvTranspose2d(Cin -> Cout, 4, 1, 0) on a 1x1 input == one GEMM,
    fused with folded BN + ReLU.  x2d: (B, Cin); w_t: (Cin, Cout, 4, 4).
    Returns the activation in channel-major layout (Cout, B, 4, 4) bf16."""
    B, Cin = x2d.shape
    Cout, K = w_t.shape[1], w_t.shape[2]
    KK = K * K

    w2 = w_t.reshape(Cin, Cout * KK).astype(MXU_DTYPE)          # cols (co, kh, kw)
    s_row = jnp.repeat(scale.astype(jnp.float32), KK)[None, :]  # (1, Cout*KK)
    b_row = jnp.repeat(bias.astype(jnp.float32), KK)[None, :]
    x2d = x2d.astype(MXU_DTYPE)

    cost = pl.CostEstimate(
        flops=2 * B * Cin * Cout * KK, transcendentals=0,
        bytes_accessed=(x2d.size + w2.size) * 2 + (s_row.size + b_row.size) * 4
                       + B * Cout * KK * 2)

    out = pl.pallas_call(
        _make_gemm_kernel("relu"),
        out_shape=jax.ShapeDtypeStruct((B, Cout * KK), MXU_DTYPE),
        grid=(1,),
        in_specs=[
            pl.BlockSpec((B, Cin), lambda i: (0, 0)),
            pl.BlockSpec((Cin, Cout * KK), lambda i: (0, 0)),
            pl.BlockSpec((1, Cout * KK), lambda i: (0, 0)),
            pl.BlockSpec((1, Cout * KK), lambda i: (0, 0)),
        ],
        out_specs=pl.BlockSpec((B, Cout * KK), lambda i: (0, 0)),
        compiler_params=pltpu.CompilerParams(
            dimension_semantics=("arbitrary",),
            vmem_limit_bytes=VMEM_LIMIT),
        cost_estimate=cost,
    )(x2d, w2, s_row, b_row)

    # (B, Cout*KK) -> (Cout, B, 4, 4): channel-major activation layout.
    return out.reshape(B, Cout, K, K).transpose(1, 0, 2, 3)


def conv_t2_block(x, w_t, scale, bias, *, activation, out_dtype):
    """ConvTranspose2d(Cin, Cout, 4, stride=2, padding=1, bias=False)
       + per-channel affine (folded eval-mode BN) + activation,
       phase-decomposed into 4 stride-1 2x2 GEMMs on the un-dilated input.

    x: (Cin, B, H, W) bf16 (channel-major).  w_t: (Cin, Cout, 4, 4) PyTorch
    conv-transpose weight.  Returns (Cout, B, 2H, 2W) in out_dtype."""
    Cin, B, H, W = x.shape
    assert w_t.shape[0] == Cin and w_t.shape[2] == 4
    Cout = w_t.shape[1]
    N = B * H * W            # batch folded into the lane (N) dimension
    KKC = 4 * Cin            # 2x2 effective taps per output phase

    # ---- glue (plain XLA): per-phase patch matrices & effective weights ----
    # For output pixel (2*py+ry, 2*px+rx) the contributing ConvT taps are
    # kh = 3 - ry - 2j, kw = 3 - rx - 2i over the 2x2 input window starting at
    # padded position (py+ry, px+rx), j,i in {0,1}.
    xp = jnp.pad(x.astype(MXU_DTYPE), ((0, 0), (0, 0), (1, 1), (1, 1)))
    patches, weights = [], []
    for ry in range(2):
        for rx in range(2):
            taps_p = [xp[:, :, ry + j:ry + j + H, rx + i:rx + i + W].reshape(Cin, N)
                      for j in range(2) for i in range(2)]
            patches.append(jnp.concatenate(taps_p, axis=0))           # (KKC, N)
            taps_w = [w_t[:, :, 3 - ry - 2 * j, 3 - rx - 2 * i]
                      for j in range(2) for i in range(2)]            # (Cin, Cout)
            weights.append(jnp.concatenate(taps_w, axis=0).T)         # (Cout, KKC)
    patches = jnp.stack(patches, axis=0)                              # (4, KKC, N)
    weights = jnp.stack(weights, axis=0).astype(MXU_DTYPE)            # (4, Cout, KKC)
    # BN affine stays in the kernel epilogue (f32) to keep exact parity with the
    # reference; folding it into the bf16 weights is a minor further tweak.
    s2 = scale.reshape(Cout, 1).astype(jnp.float32)
    b2 = bias.reshape(Cout, 1).astype(jnp.float32)

    TN = _pick_tile(N)
    assert N % TN == 0
    grid = (4, N // TN)      # phases x spatial tiles, both parallel (v7x 2-TC)

    cost = pl.CostEstimate(
        flops=2 * 4 * Cout * KKC * N,
        transcendentals=(4 * Cout * N) if activation == "tanh" else 0,
        bytes_accessed=(weights.size + patches.size) * 2
                       + (s2.size + b2.size) * 4
                       + 4 * Cout * N * jnp.dtype(out_dtype).itemsize)

    out = pl.pallas_call(
        _make_gemm_kernel(activation),
        out_shape=jax.ShapeDtypeStruct((4, Cout, N), out_dtype),
        grid=grid,
        in_specs=[
            pl.BlockSpec((None, Cout, KKC), lambda p, j: (p, 0, 0)),   # phase weight
            pl.BlockSpec((None, KKC, TN), lambda p, j: (p, 0, j)),     # phase patches
            pl.BlockSpec((Cout, 1), lambda p, j: (0, 0)),              # BN scale
            pl.BlockSpec((Cout, 1), lambda p, j: (0, 0)),              # BN bias
        ],
        out_specs=pl.BlockSpec((None, Cout, TN), lambda p, j: (p, 0, j)),
        compiler_params=pltpu.CompilerParams(
            dimension_semantics=("parallel", "parallel"),
            vmem_limit_bytes=VMEM_LIMIT),
        cost_estimate=cost,
    )(weights, patches, s2, b2)

    # ---- glue: interleave the 4 phases into (Cout, B, 2H, 2W) ----
    out = out.reshape(2, 2, Cout, B, H, W).transpose(2, 3, 4, 0, 5, 1)
    return out.reshape(Cout, B, 2 * H, 2 * W)


# ------------------------------ model forward --------------------------------
def netG_forward(params, z, condition):
    """z: (B, nz, 1, 1) NCHW noise;  condition: (B,) int32 class ids."""
    B = z.shape[0]
    emb = params["emb_table"][condition]                           # (B, emb)
    x2d = jnp.concatenate([z.reshape(B, NZ), emb], axis=1)         # (B, nz+emb)

    # l1: ConvT(nz+emb -> ngf*8, 4, 1, 0) + BN + ReLU   (1x1 input -> pure GEMM)
    s1 = params["l1_gamma"] / jnp.sqrt(params["l1_var"] + BN_EPS)
    b1 = params["l1_beta"] - params["l1_mean"] * s1
    x = input_block(x2d, params["l1_w"], s1, b1)                   # (ngf*8, B, 4, 4)

    for name, act in LAYER_CFGS:
        w = params[name + "_w"]
        cout = w.shape[1]
        if act == "relu":
            s = params[name + "_gamma"] / jnp.sqrt(params[name + "_var"] + BN_EPS)
            b = params[name + "_beta"] - params[name + "_mean"] * s
            out_dtype = MXU_DTYPE                 # bf16 inter-layer activations
        else:
            s = jnp.ones((cout,), jnp.float32)
            b = jnp.zeros((cout,), jnp.float32)
            out_dtype = jnp.float32               # final tanh output in f32
        x = conv_t2_block(x, w, s, b, activation=act, out_dtype=out_dtype)

    return x.transpose(1, 0, 2, 3)                # NCHW (B, nc, 64, 64)


# ------------------------- pure-JAX reference (check) ------------------------
REF_CFGS = (("l1", 1, 0, "relu"), ("l2", 2, 1, "relu"), ("l3", 2, 1, "relu"),
            ("l4", 2, 1, "relu"), ("l5", 2, 1, "tanh"))


def _ref_conv_transpose(x_nchw, w_t, stride, padding):
    # Same bf16-operand / f32-accumulation numerics as the Pallas path.
    Cin, Cout, K, _ = w_t.shape
    w_flip = jnp.flip(w_t, axis=(2, 3)).transpose(1, 0, 2, 3)     # (Cout, Cin, K, K)
    p = K - 1 - padding
    return jax.lax.conv_general_dilated(
        x_nchw.astype(MXU_DTYPE), w_flip.astype(MXU_DTYPE),
        window_strides=(1, 1),
        padding=[(p, p), (p, p)], lhs_dilation=(stride, stride),
        dimension_numbers=("NCHW", "OIHW", "NCHW"),
        preferred_element_type=jnp.float32)


def netG_forward_reference(params, z, condition):
    B = z.shape[0]
    emb = params["emb_table"][condition].reshape(B, EMB_SIZE, 1, 1)
    x = jnp.concatenate([z, emb], axis=1)
    for name, stride, padding, act in REF_CFGS:
        x = _ref_conv_transpose(x, params[name + "_w"], stride, padding)
        if act == "relu":
            s = params[name + "_gamma"] / jnp.sqrt(params[name + "_var"] + BN_EPS)
            b = params[name + "_beta"] - params[name + "_mean"] * s
            x = jnp.maximum(x * s[None, :, None, None] + b[None, :, None, None], 0.0)
        else:
            x = jnp.tanh(x)
    return x


# --------------------------------- params ------------------------------------
def init_params(key):
    inserted_dim = NZ + EMB_SIZE
    layer_dims = [("l1", inserted_dim, NGF * 8),
                  ("l2", NGF * 8, NGF * 4),
                  ("l3", NGF * 4, NGF * 2),
                  ("l4", NGF * 2, NGF),
                  ("l5", NGF, NC)]
    keys = jax.random.split(key, 2 * len(layer_dims) + 1)
    params = {"emb_table": jax.random.normal(keys[0], (NUM_CLASSES, EMB_SIZE),
                                             jnp.float32)}
    ki = 1
    for name, cin, cout in layer_dims:
        params[name + "_w"] = 0.02 * jax.random.normal(
            keys[ki], (cin, cout, 4, 4), jnp.float32)   # ConvT weight (Cin,Cout,K,K)
        ki += 1
        if name != "l5":
            params[name + "_gamma"] = 1.0 + 0.02 * jax.random.normal(
                keys[ki], (cout,), jnp.float32)
            ki += 1
            params[name + "_beta"] = jnp.zeros((cout,), jnp.float32)
            params[name + "_mean"] = jnp.zeros((cout,), jnp.float32)
            params[name + "_var"] = jnp.ones((cout,), jnp.float32)
    return params


# ----------------------------------- main -------------------------------------
if __name__ == "__main__":
    B = 2
    key = jax.random.PRNGKey(0)
    kp, kz, kc = jax.random.split(key, 3)
    params = init_params(kp)
    z = jax.random.normal(kz, (B, NZ, 1, 1), jnp.float32)
    cond = jax.random.randint(kc, (B,), 0, NUM_CLASSES)

    out = jax.jit(netG_forward)(params, z, cond)
    out = jax.block_until_ready(out)
    assert out.shape == (B, NC, 64, 64), out.shape

    ref = netG_forward_reference(params, z, cond)
    err = float(jnp.max(jnp.abs(out - ref)))
    assert err < 5e-3, f"max abs err vs reference: {err}"
    print("KERNEL_OK")
</pallas_src>

<mosaic_0001>
module attributes {stable_mosaic.version = 11 : i64} {
  func.func @kernel(%arg0: i32, %arg1: memref<2x64xbf16, #tpu.memory_space<vmem>>, %arg2: memref<64x2048xbf16, #tpu.memory_space<vmem>>, %arg3: memref<1x2048xf32, #tpu.memory_space<vmem>>, %arg4: memref<1x2048xf32, #tpu.memory_space<vmem>>, %arg5: memref<2x2048xbf16, #tpu.memory_space<vmem>>) attributes {dimension_semantics = [#tpu.dimension_semantics<arbitrary>], iteration_bounds = array<i64: 1>, scalar_prefetch = 0 : i64, scratch_operands = 0 : i64, tpu.core_type = #tpu.core_type<tc>, window_params = [{pipeline_mode = #tpu.pipeline_mode<synchronous>, transform_indices = @transform_0, window_bounds = array<i64: 2, 64>}, {pipeline_mode = #tpu.pipeline_mode<synchronous>, transform_indices = @transform_1, window_bounds = array<i64: 64, 2048>}, {pipeline_mode = #tpu.pipeline_mode<synchronous>, transform_indices = @transform_2, window_bounds = array<i64: 1, 2048>}, {pipeline_mode = #tpu.pipeline_mode<synchronous>, transform_indices = @transform_3, window_bounds = array<i64: 1, 2048>}, {pipeline_mode = #tpu.pipeline_mode<synchronous>, transform_indices = @transform_4, window_bounds = array<i64: 2, 2048>}]} {
    %c0 = arith.constant 0 : index
    %c0_0 = arith.constant 0 : index
    %0 = vector.load %arg1[%c0, %c0_0] : memref<2x64xbf16, #tpu.memory_space<vmem>>, vector<2x64xbf16>
    %c0_1 = arith.constant 0 : index
    %c0_2 = arith.constant 0 : index
    %1 = vector.load %arg2[%c0_1, %c0_2] : memref<64x2048xbf16, #tpu.memory_space<vmem>>, vector<64x2048xbf16>
    %cst = arith.constant dense<0.000000e+00> : vector<2x2048xf32>
    %2 = tpu.matmul %0, %1, %cst {dimension_numbers = #tpu.dot_dimension_numbers<[1], [0], [0], [1], [0, 0, 1, 1], [], []>} : vector<2x64xbf16>, vector<64x2048xbf16>, vector<2x2048xf32> -> vector<2x2048xf32>
    %c0_3 = arith.constant 0 : index
    %c0_4 = arith.constant 0 : index
    %3 = vector.load %arg3[%c0_3, %c0_4] : memref<1x2048xf32, #tpu.memory_space<vmem>>, vector<1x2048xf32>
    %4 = vector.broadcast %3 : vector<1x2048xf32> to vector<2x2048xf32>
    %5 = arith.mulf %2, %4 : vector<2x2048xf32>
    %c0_5 = arith.constant 0 : index
    %c0_6 = arith.constant 0 : index
    %6 = vector.load %arg4[%c0_5, %c0_6] : memref<1x2048xf32, #tpu.memory_space<vmem>>, vector<1x2048xf32>
    %7 = vector.broadcast %6 : vector<1x2048xf32> to vector<2x2048xf32>
    %8 = arith.addf %5, %7 : vector<2x2048xf32>
    %cst_7 = arith.constant 0.000000e+00 : f32
    %9 = vector.broadcast %cst_7 : f32 to vector<2x2048xf32>
    %10 = arith.maximumf %8, %9 : vector<2x2048xf32>
    %11 = arith.truncf %10 : vector<2x2048xf32> to vector<2x2048xbf16>
    %c0_8 = arith.constant 0 : index
    %c0_9 = arith.constant 0 : index
    %12 = vector.load %arg5[%c0_8, %c0_9] : memref<2x2048xbf16, #tpu.memory_space<vmem>>, vector<2x2048xbf16>
    tpu.vector_store %arg5[%c0_8, %c0_9], %11 {strides = array<i32>} : memref<2x2048xbf16, #tpu.memory_space<vmem>>, vector<2x2048xbf16>,
    return
  }
  func.func @transform_0(%arg0: i32) -> (i32, i32) {
    %c0_i32 = arith.constant 0 : i32
    %c0_i32_0 = arith.constant 0 : i32
    %c0_i32_1 = arith.constant 0 : i32
    return %c0_i32, %c0_i32_0 : i32, i32
  }
  func.func @transform_1(%arg0: i32) -> (i32, i32) {
    %c0_i32 = arith.constant 0 : i32
    %c0_i32_0 = arith.constant 0 : i32
    %c0_i32_1 = arith.constant 0 : i32
    return %c0_i32, %c0_i32_0 : i32, i32
  }
  func.func @transform_2(%arg0: i32) -> (i32, i32) {
    %c0_i32 = arith.constant 0 : i32
    %c0_i32_0 = arith.constant 0 : i32
    %c0_i32_1 = arith.constant 0 : i32
    return %c0_i32, %c0_i32_0 : i32, i32
  }
  func.func @transform_3(%arg0: i32) -> (i32, i32) {
    %c0_i32 = arith.constant 0 : i32
    %c0_i32_0 = arith.constant 0 : i32
    %c0_i32_1 = arith.constant 0 : i32
    return %c0_i32, %c0_i32_0 : i32, i32
  }
  func.func @transform_4(%arg0: i32) -> (i32, i32) {
    %c0_i32 = arith.constant 0 : i32
    %c0_i32_0 = arith.constant 0 : i32
    %c0_i32_1 = arith.constant 0 : i32
    return %c0_i32, %c0_i32_0 : i32, i32
  }
}

module attributes {stable_mosaic.version = 11 : i64} {
  func.func @kernel(%arg0: i32, %arg1: i32, %arg2: memref<1x64x512xbf16, #tpu.memory_space<vmem>>, %arg3: memref<1x512x32xbf16, #tpu.memory_space<vmem>>, %arg4: memref<64x1xf32, #tpu.memory_space<vmem>>, %arg5: memref<64x1xf32, #tpu.memory_space<vmem>>, %arg6: memref<1x64x32xbf16, #tpu.memory_space<vmem>>) attributes {dimension_semantics = [#tpu.dimension_semantics<parallel>, #tpu.dimension_semantics<parallel>], iteration_bounds = array<i64: 4, 1>, scalar_prefetch = 0 : i64, scratch_operands = 0 : i64, tpu.core_type = #tpu.core_type<tc>, window_params = [{transform_indices = @transform_0, window_bounds = array<i64: 1, 64, 512>}, {transform_indices = @transform_1, window_bounds = array<i64: 1, 512, 32>}, {pipeline_mode = #tpu.pipeline_mode<synchronous>, transform_indices = @transform_2, window_bounds = array<i64: 64, 1>}, {pipeline_mode = #tpu.pipeline_mode<synchronous>, transform_indices = @transform_3, window_bounds = array<i64: 64, 1>}, {transform_indices = @transform_4, window_bounds = array<i64: 1, 64, 32>}]} {
    %c0 = arith.constant 0 : index
    %c0_0 = arith.constant 0 : index
    %c0_1 = arith.constant 0 : index
    %0 = vector.load %arg2[%c0, %c0_0, %c0_1] : memref<1x64x512xbf16, #tpu.memory_space<vmem>>, vector<1x64x512xbf16>
    %1 = vector.shape_cast %0 : vector<1x64x512xbf16> to vector<64x512xbf16>
    %c0_2 = arith.constant 0 : index
    %c0_3 = arith.constant 0 : index
    %c0_4 = arith.constant 0 : index
    %2 = vector.load %arg3[%c0_2, %c0_3, %c0_4] : memref<1x512x32xbf16, #tpu.memory_space<vmem>>, vector<1x512x32xbf16>
    %3 = vector.shape_cast %2 : vector<1x512x32xbf16> to vector<512x32xbf16>
    %cst = arith.constant dense<0.000000e+00> : vector<64x32xf32>
    %4 = tpu.matmul %1, %3, %cst {dimension_numbers = #tpu.dot_dimension_numbers<[1], [0], [0], [1], [0, 0, 1, 1], [], []>} : vector<64x512xbf16>, vector<512x32xbf16>, vector<64x32xf32> -> vector<64x32xf32>
    %c0_5 = arith.constant 0 : index
    %c0_6 = arith.constant 0 : index
    %5 = vector.load %arg4[%c0_5, %c0_6] : memref<64x1xf32, #tpu.memory_space<vmem>>, vector<64x1xf32>
    %6 = vector.broadcast %5 : vector<64x1xf32> to vector<64x32xf32>
    %7 = arith.mulf %4, %6 : vector<64x32xf32>
    %c0_7 = arith.constant 0 : index
    %c0_8 = arith.constant 0 : index
    %8 = vector.load %arg5[%c0_7, %c0_8] : memref<64x1xf32, #tpu.memory_space<vmem>>, vector<64x1xf32>
    %9 = vector.broadcast %8 : vector<64x1xf32> to vector<64x32xf32>
    %10 = arith.addf %7, %9 : vector<64x32xf32>
    %cst_9 = arith.constant 0.000000e+00 : f32
    %11 = vector.broadcast %cst_9 : f32 to vector<64x32xf32>
    %12 = arith.maximumf %10, %11 : vector<64x32xf32>
    %13 = arith.truncf %12 : vector<64x32xf32> to vector<64x32xbf16>
    %c0_10 = arith.constant 0 : index
    %c0_11 = arith.constant 0 : index
    %c0_12 = arith.constant 0 : index
    %14 = vector.load %arg6[%c0_10, %c0_11, %c0_12] : memref<1x64x32xbf16, #tpu.memory_space<vmem>>, vector<1x64x32xbf16>
    %15 = vector.shape_cast %14 : vector<1x64x32xbf16> to vector<64x32xbf16>
    %16 = vector.shape_cast %13 : vector<64x32xbf16> to vector<1x64x32xbf16>
    tpu.vector_store %arg6[%c0_10, %c0_11, %c0_12], %16 {strides = array<i32>} : memref<1x64x32xbf16, #tpu.memory_space<vmem>>, vector<1x64x32xbf16>,
    return
  }
  func.func @transform_0(%arg0: i32, %arg1: i32) -> (i32, i32, i32) {
    %c0_i32 = arith.constant 0 : i32
    %c0_i32_0 = arith.constant 0 : i32
    %c0_i32_1 = arith.constant 0 : i32
    return %arg0, %c0_i32, %c0_i32_0 : i32, i32, i32
  }
  func.func @transform_1(%arg0: i32, %arg1: i32) -> (i32, i32, i32) {
    %c0_i32 = arith.constant 0 : i32
    %c0_i32_0 = arith.constant 0 : i32
    return %arg0, %c0_i32, %arg1 : i32, i32, i32
  }
  func.func @transform_2(%arg0: i32, %arg1: i32) -> (i32, i32) {
    %c0_i32 = arith.constant 0 : i32
    %c0_i32_0 = arith.constant 0 : i32
    %c0_i32_1 = arith.constant 0 : i32
    return %c0_i32, %c0_i32_0 : i32, i32
  }
  func.func @transform_3(%arg0: i32, %arg1: i32) -> (i32, i32) {
    %c0_i32 = arith.constant 0 : i32
    %c0_i32_0 = arith.constant 0 : i32
    %c0_i32_1 = arith.constant 0 : i32
    return %c0_i32, %c0_i32_0 : i32, i32
  }
  func.func @transform_4(%arg0: i32, %arg1: i32) -> (i32, i32, i32) {
    %c0_i32 = arith.constant 0 : i32
    %c0_i32_0 = arith.constant 0 : i32
    return %arg0, %c0_i32, %arg1 : i32, i32, i32
  }
}

module attributes {stable_mosaic.version = 11 : i64} {
  func.func @kernel(%arg0: i32, %arg1: i32, %arg2: memref<1x32x256xbf16, #tpu.memory_space<vmem>>, %arg3: memref<1x256x128xbf16, #tpu.memory_space<vmem>>, %arg4: memref<32x1xf32, #tpu.memory_space<vmem>>, %arg5: memref<32x1xf32, #tpu.memory_space<vmem>>, %arg6: memref<1x32x128xbf16, #tpu.memory_space<vmem>>) attributes {dimension_semantics = [#tpu.dimension_semantics<parallel>, #tpu.dimension_semantics<parallel>], iteration_bounds = array<i64: 4, 1>, scalar_prefetch = 0 : i64, scratch_operands = 0 : i64, tpu.core_type = #tpu.core_type<tc>, window_params = [{transform_indices = @transform_0, window_bounds = array<i64: 1, 32, 256>}, {transform_indices = @transform_1, window_bounds = array<i64: 1, 256, 128>}, {pipeline_mode = #tpu.pipeline_mode<synchronous>, transform_indices = @transform_2, window_bounds = array<i64: 32, 1>}, {pipeline_mode = #tpu.pipeline_mode<synchronous>, transform_indices = @transform_3, window_bounds = array<i64: 32, 1>}, {transform_indices = @transform_4, window_bounds = array<i64: 1, 32, 128>}]} {
    %c0 = arith.constant 0 : index
    %c0_0 = arith.constant 0 : index
    %c0_1 = arith.constant 0 : index
    %0 = vector.load %arg2[%c0, %c0_0, %c0_1] : memref<1x32x256xbf16, #tpu.memory_space<vmem>>, vector<1x32x256xbf16>
    %1 = vector.shape_cast %0 : vector<1x32x256xbf16> to vector<32x256xbf16>
    %c0_2 = arith.constant 0 : index
    %c0_3 = arith.constant 0 : index
    %c0_4 = arith.constant 0 : index
    %2 = vector.load %arg3[%c0_2, %c0_3, %c0_4] : memref<1x256x128xbf16, #tpu.memory_space<vmem>>, vector<1x256x128xbf16>
    %3 = vector.shape_cast %2 : vector<1x256x128xbf16> to vector<256x128xbf16>
    %cst = arith.constant dense<0.000000e+00> : vector<32x128xf32>
    %4 = tpu.matmul %1, %3, %cst {dimension_numbers = #tpu.dot_dimension_numbers<[1], [0], [0], [1], [0, 0, 1, 1], [], []>} : vector<32x256xbf16>, vector<256x128xbf16>, vector<32x128xf32> -> vector<32x128xf32>
    %c0_5 = arith.constant 0 : index
    %c0_6 = arith.constant 0 : index
    %5 = vector.load %arg4[%c0_5, %c0_6] : memref<32x1xf32, #tpu.memory_space<vmem>>, vector<32x1xf32>
    %6 = vector.broadcast %5 : vector<32x1xf32> to vector<32x128xf32>
    %7 = arith.mulf %4, %6 : vector<32x128xf32>
    %c0_7 = arith.constant 0 : index
    %c0_8 = arith.constant 0 : index
    %8 = vector.load %arg5[%c0_7, %c0_8] : memref<32x1xf32, #tpu.memory_space<vmem>>, vector<32x1xf32>
    %9 = vector.broadcast %8 : vector<32x1xf32> to vector<32x128xf32>
    %10 = arith.addf %7, %9 : vector<32x128xf32>
    %cst_9 = arith.constant 0.000000e+00 : f32
    %11 = vector.broadcast %cst_9 : f32 to vector<32x128xf32>
    %12 = arith.maximumf %10, %11 : vector<32x128xf32>
    %13 = arith.truncf %12 : vector<32x128xf32> to vector<32x128xbf16>
    %c0_10 = arith.constant 0 : index
    %c0_11 = arith.constant 0 : index
    %c0_12 = arith.constant 0 : index
    %14 = vector.load %arg6[%c0_10, %c0_11, %c0_12] : memref<1x32x128xbf16, #tpu.memory_space<vmem>>, vector<1x32x128xbf16>
    %15 = vector.shape_cast %14 : vector<1x32x128xbf16> to vector<32x128xbf16>
    %16 = vector.shape_cast %13 : vector<32x128xbf16> to vector<1x32x128xbf16>
    tpu.vector_store %arg6[%c0_10, %c0_11, %c0_12], %16 {strides = array<i32>} : memref<1x32x128xbf16, #tpu.memory_space<vmem>>, vector<1x32x128xbf16>,
    return
  }
  func.func @transform_0(%arg0: i32, %arg1: i32) -> (i32, i32, i32) {
    %c0_i32 = arith.constant 0 : i32
    %c0_i32_0 = arith.constant 0 : i32
    %c0_i32_1 = arith.constant 0 : i32
    return %arg0, %c0_i32, %c0_i32_0 : i32, i32, i32
  }
  func.func @transform_1(%arg0: i32, %arg1: i32) -> (i32, i32, i32) {
    %c0_i32 = arith.constant 0 : i32
    %c0_i32_0 = arith.constant 0 : i32
    return %arg0, %c0_i32, %arg1 : i32, i32, i32
  }
  func.func @transform_2(%arg0: i32, %arg1: i32) -> (i32, i32) {
    %c0_i32 = arith.constant 0 : i32
    %c0_i32_0 = arith.constant 0 : i32
    %c0_i32_1 = arith.constant 0 : i32
    return %c0_i32, %c0_i32_0 : i32, i32
  }
  func.func @transform_3(%arg0: i32, %arg1: i32) -> (i32, i32) {
    %c0_i32 = arith.constant 0 : i32
    %c0_i32_0 = arith.constant 0 : i32
    %c0_i32_1 = arith.constant 0 : i32
    return %c0_i32, %c0_i32_0 : i32, i32
  }
  func.func @transform_4(%arg0: i32, %arg1: i32) -> (i32, i32, i32) {
    %c0_i32 = arith.constant 0 : i32
    %c0_i32_0 = arith.constant 0 : i32
    return %arg0, %c0_i32, %arg1 : i32, i32, i32
  }
}

module attributes {stable_mosaic.version = 11 : i64} {
  func.func @kernel(%arg0: i32, %arg1: i32, %arg2: memref<1x16x128xbf16, #tpu.memory_space<vmem>>, %arg3: memref<1x128x512xbf16, #tpu.memory_space<vmem>>, %arg4: memref<16x1xf32, #tpu.memory_space<vmem>>, %arg5: memref<16x1xf32, #tpu.memory_space<vmem>>, %arg6: memref<1x16x512xbf16, #tpu.memory_space<vmem>>) attributes {dimension_semantics = [#tpu.dimension_semantics<parallel>, #tpu.dimension_semantics<parallel>], iteration_bounds = array<i64: 4, 1>, scalar_prefetch = 0 : i64, scratch_operands = 0 : i64, tpu.core_type = #tpu.core_type<tc>, window_params = [{transform_indices = @transform_0, window_bounds = array<i64: 1, 16, 128>}, {transform_indices = @transform_1, window_bounds = array<i64: 1, 128, 512>}, {pipeline_mode = #tpu.pipeline_mode<synchronous>, transform_indices = @transform_2, window_bounds = array<i64: 16, 1>}, {pipeline_mode = #tpu.pipeline_mode<synchronous>, transform_indices = @transform_3, window_bounds = array<i64: 16, 1>}, {transform_indices = @transform_4, window_bounds = array<i64: 1, 16, 512>}]} {
    %c0 = arith.constant 0 : index
    %c0_0 = arith.constant 0 : index
    %c0_1 = arith.constant 0 : index
    %0 = vector.load %arg2[%c0, %c0_0, %c0_1] : memref<1x16x128xbf16, #tpu.memory_space<vmem>>, vector<1x16x128xbf16>
    %1 = vector.shape_cast %0 : vector<1x16x128xbf16> to vector<16x128xbf16>
    %c0_2 = arith.constant 0 : index
    %c0_3 = arith.constant 0 : index
    %c0_4 = arith.constant 0 : index
    %2 = vector.load %arg3[%c0_2, %c0_3, %c0_4] : memref<1x128x512xbf16, #tpu.memory_space<vmem>>, vector<1x128x512xbf16>
    %3 = vector.shape_cast %2 : vector<1x128x512xbf16> to vector<128x512xbf16>
    %cst = arith.constant dense<0.000000e+00> : vector<16x512xf32>
    %4 = tpu.matmul %1, %3, %cst {dimension_numbers = #tpu.dot_dimension_numbers<[1], [0], [0], [1], [0, 0, 1, 1], [], []>} : vector<16x128xbf16>, vector<128x512xbf16>, vector<16x512xf32> -> vector<16x512xf32>
    %c0_5 = arith.constant 0 : index
    %c0_6 = arith.constant 0 : index
    %5 = vector.load %arg4[%c0_5, %c0_6] : memref<16x1xf32, #tpu.memory_space<vmem>>, vector<16x1xf32>
    %6 = vector.broadcast %5 : vector<16x1xf32> to vector<16x512xf32>
    %7 = arith.mulf %4, %6 : vector<16x512xf32>
    %c0_7 = arith.constant 0 : index
    %c0_8 = arith.constant 0 : index
    %8 = vector.load %arg5[%c0_7, %c0_8] : memref<16x1xf32, #tpu.memory_space<vmem>>, vector<16x1xf32>
    %9 = vector.broadcast %8 : vector<16x1xf32> to vector<16x512xf32>
    %10 = arith.addf %7, %9 : vector<16x512xf32>
    %cst_9 = arith.constant 0.000000e+00 : f32
    %11 = vector.broadcast %cst_9 : f32 to vector<16x512xf32>
    %12 = arith.maximumf %10, %11 : vector<16x512xf32>
    %13 = arith.truncf %12 : vector<16x512xf32> to vector<16x512xbf16>
    %c0_10 = arith.constant 0 : index
    %c0_11 = arith.constant 0 : index
    %c0_12 = arith.constant 0 : index
    %14 = vector.load %arg6[%c0_10, %c0_11, %c0_12] : memref<1x16x512xbf16, #tpu.memory_space<vmem>>, vector<1x16x512xbf16>
    %15 = vector.shape_cast %14 : vector<1x16x512xbf16> to vector<16x512xbf16>
    %16 = vector.shape_cast %13 : vector<16x512xbf16> to vector<1x16x512xbf16>
    tpu.vector_store %arg6[%c0_10, %c0_11, %c0_12], %16 {strides = array<i32>} : memref<1x16x512xbf16, #tpu.memory_space<vmem>>, vector<1x16x512xbf16>,
    return
  }
  func.func @transform_0(%arg0: i32, %arg1: i32) -> (i32, i32, i32) {
    %c0_i32 = arith.constant 0 : i32
    %c0_i32_0 = arith.constant 0 : i32
    %c0_i32_1 = arith.constant 0 : i32
    return %arg0, %c0_i32, %c0_i32_0 : i32, i32, i32
  }
  func.func @transform_1(%arg0: i32, %arg1: i32) -> (i32, i32, i32) {
    %c0_i32 = arith.constant 0 : i32
    %c0_i32_0 = arith.constant 0 : i32
    return %arg0, %c0_i32, %arg1 : i32, i32, i32
  }
  func.func @transform_2(%arg0: i32, %arg1: i32) -> (i32, i32) {
    %c0_i32 = arith.constant 0 : i32
    %c0_i32_0 = arith.constant 0 : i32
    %c0_i32_1 = arith.constant 0 : i32
    return %c0_i32, %c0_i32_0 : i32, i32
  }
  func.func @transform_3(%arg0: i32, %arg1: i32) -> (i32, i32) {
    %c0_i32 = arith.constant 0 : i32
    %c0_i32_0 = arith.constant 0 : i32
    %c0_i32_1 = arith.constant 0 : i32
    return %c0_i32, %c0_i32_0 : i32, i32
  }
  func.func @transform_4(%arg0: i32, %arg1: i32) -> (i32, i32, i32) {
    %c0_i32 = arith.constant 0 : i32
    %c0_i32_0 = arith.constant 0 : i32
    return %arg0, %c0_i32, %arg1 : i32, i32, i32
  }
}

module attributes {stable_mosaic.version = 11 : i64} {
  func.func @kernel(%arg0: i32, %arg1: i32, %arg2: memref<1x3x64xbf16, #tpu.memory_space<vmem>>, %arg3: memref<1x64x2048xbf16, #tpu.memory_space<vmem>>, %arg4: memref<3x1xf32, #tpu.memory_space<vmem>>, %arg5: memref<3x1xf32, #tpu.memory_space<vmem>>, %arg6: memref<1x3x2048xf32, #tpu.memory_space<vmem>>) attributes {dimension_semantics = [#tpu.dimension_semantics<parallel>, #tpu.dimension_semantics<parallel>], iteration_bounds = array<i64: 4, 1>, scalar_prefetch = 0 : i64, scratch_operands = 0 : i64, tpu.core_type = #tpu.core_type<tc>, window_params = [{transform_indices = @transform_0, window_bounds = array<i64: 1, 3, 64>}, {transform_indices = @transform_1, window_bounds = array<i64: 1, 64, 2048>}, {pipeline_mode = #tpu.pipeline_mode<synchronous>, transform_indices = @transform_2, window_bounds = array<i64: 3, 1>}, {pipeline_mode = #tpu.pipeline_mode<synchronous>, transform_indices = @transform_3, window_bounds = array<i64: 3, 1>}, {transform_indices = @transform_4, window_bounds = array<i64: 1, 3, 2048>}]} {
    %c0 = arith.constant 0 : index
    %c0_0 = arith.constant 0 : index
    %c0_1 = arith.constant 0 : index
    %0 = vector.load %arg2[%c0, %c0_0, %c0_1] : memref<1x3x64xbf16, #tpu.memory_space<vmem>>, vector<1x3x64xbf16>
    %1 = vector.shape_cast %0 : vector<1x3x64xbf16> to vector<3x64xbf16>
    %c0_2 = arith.constant 0 : index
    %c0_3 = arith.constant 0 : index
    %c0_4 = arith.constant 0 : index
    %2 = vector.load %arg3[%c0_2, %c0_3, %c0_4] : memref<1x64x2048xbf16, #tpu.memory_space<vmem>>, vector<1x64x2048xbf16>
    %3 = vector.shape_cast %2 : vector<1x64x2048xbf16> to vector<64x2048xbf16>
    %cst = arith.constant dense<0.000000e+00> : vector<3x2048xf32>
    %4 = tpu.matmul %1, %3, %cst {dimension_numbers = #tpu.dot_dimension_numbers<[1], [0], [0], [1], [0, 0, 1, 1], [], []>} : vector<3x64xbf16>, vector<64x2048xbf16>, vector<3x2048xf32> -> vector<3x2048xf32>
    %c0_5 = arith.constant 0 : index
    %c0_6 = arith.constant 0 : index
    %5 = vector.load %arg4[%c0_5, %c0_6] : memref<3x1xf32, #tpu.memory_space<vmem>>, vector<3x1xf32>
    %6 = vector.broadcast %5 : vector<3x1xf32> to vector<3x2048xf32>
    %7 = arith.mulf %4, %6 : vector<3x2048xf32>
    %c0_7 = arith.constant 0 : index
    %c0_8 = arith.constant 0 : index
    %8 = vector.load %arg5[%c0_7, %c0_8] : memref<3x1xf32, #tpu.memory_space<vmem>>, vector<3x1xf32>
    %9 = vector.broadcast %8 : vector<3x1xf32> to vector<3x2048xf32>
    %10 = arith.addf %7, %9 : vector<3x2048xf32>
    %11 = math.tanh %10 : vector<3x2048xf32>
    %c0_9 = arith.constant 0 : index
    %c0_10 = arith.constant 0 : index
    %c0_11 = arith.constant 0 : index
    %12 = vector.load %arg6[%c0_9, %c0_10, %c0_11] : memref<1x3x2048xf32, #tpu.memory_space<vmem>>, vector<1x3x2048xf32>
    %13 = vector.shape_cast %12 : vector<1x3x2048xf32> to vector<3x2048xf32>
    %14 = vector.shape_cast %11 : vector<3x2048xf32> to vector<1x3x2048xf32>
    tpu.vector_store %arg6[%c0_9, %c0_10, %c0_11], %14 {strides = array<i32>} : memref<1x3x2048xf32, #tpu.memory_space<vmem>>, vector<1x3x2048xf32>,
    return
  }
  func.func @transform_0(%arg0: i32, %arg1: i32) -> (i32, i32, i32) {
    %c0_i32 = arith.constant 0 : i32
    %c0_i32_0 = arith.constant 0 : i32
    %c0_i32_1 = arith.constant 0 : i32
    return %arg0, %c0_i32, %c0_i32_0 : i32, i32, i32
  }
  func.func @transform_1(%arg0: i32, %arg1: i32) -> (i32, i32, i32) {
    %c0_i32 = arith.constant 0 : i32
    %c0_i32_0 = arith.constant 0 : i32
    return %arg0, %c0_i32, %arg1 : i32, i32, i32
  }
  func.func @transform_2(%arg0: i32, %arg1: i32) -> (i32, i32) {
    %c0_i32 = arith.constant 0 : i32
    %c0_i32_0 = arith.constant 0 : i32
    %c0_i32_1 = arith.constant 0 : i32
    return %c0_i32, %c0_i32_0 : i32, i32
  }
  func.func @transform_3(%arg0: i32, %arg1: i32) -> (i32, i32) {
    %c0_i32 = arith.constant 0 : i32
    %c0_i32_0 = arith.constant 0 : i32
    %c0_i32_1 = arith.constant 0 : i32
    return %c0_i32, %c0_i32_0 : i32, i32
  }
  func.func @transform_4(%arg0: i32, %arg1: i32) -> (i32, i32, i32) {
    %c0_i32 = arith.constant 0 : i32
    %c0_i32_0 = arith.constant 0 : i32
    return %arg0, %c0_i32, %arg1 : i32, i32, i32
  }
}

</mosaic_0001>

<llo_original>
// kernel: netG_forward.5
$region0: #{netG_forward.5}
  #allocation0 [shape = 'u32[]', space=smem, size = 0x4, offset = 0x4, fixed_abs, tag = 'smem constant byte address 0x4 - core index']
  #allocation1 [shape = 'u32[144,128]{1,0:T(1,128)}', space=vmem, size = 0x12000, scoped, tag = 'internal scratch']
  %s0 = inlined_call_operand.vmem [shape: bf16[2,64], index: 0, kind: input, shape index: {}]
  %s1 = inlined_call_operand.vmem [shape: bf16[64,2048], index: 1, kind: input, shape index: {}]
  %s2 = inlined_call_operand.vmem [shape: f32[1,2048], index: 2, kind: input, shape index: {}]
  %s3 = inlined_call_operand.vmem [shape: f32[1,2048], index: 3, kind: input, shape index: {}]
  %s4 = inlined_call_operand.vmem [shape: bf16[2,2048], index: 4, kind: output, shape index: {}]
  %s5 = sld [smem:[#allocation0]]
  $region26: #{netG_forward.5} parent=0
    _
  %s7 = ssub.s32 1, %s5
  %s8 = scalar_select 0, %s7, %s5
  // Predicated region
  $region2: #{netG_forward.5} parent=0 // pred_check
    _
  $region3: #{netG_forward.5} parent=0 // pred_check_branch
    %10 = sbr.rel (0) target = $region5
  $region4: #{netG_forward.5} parent=0 // pred_region
    _
  $region5: #{netG_forward.5} parent=0 // pred_fallthru
    _
  // Predicated region
  $region6: #{netG_forward.5} parent=0 // pred_check
    _
  $region7: #{netG_forward.5} parent=0 // pred_check_branch
    %12 = sbr.rel (0) target = $region9
  $region8: #{netG_forward.5} parent=0 // pred_region
    _
  $region9: #{netG_forward.5} parent=0 // pred_fallthru
    _
  // Predicated region
  $region10: #{netG_forward.5} parent=0 // pred_check
    _
  $region11: #{netG_forward.5} parent=0 // pred_check_branch
    %14 = sbr.rel (0) target = $region13
  $region12: #{netG_forward.5} parent=0 // pred_region
    _
  $region13: #{netG_forward.5} parent=0 // pred_fallthru
    _
  // Predicated region
  $region14: #{netG_forward.5} parent=0 // pred_check
    _
  $region15: #{netG_forward.5} parent=0 // pred_check_branch
    %16 = sbr.rel (0) target = $region17
  $region16: #{netG_forward.5} parent=0 // pred_region
    _
  $region17: #{netG_forward.5} parent=0 // pred_fallthru
    _
  %v18 = vld [vmem:[%s0] sm:$0x1]
  %v19 = vld [vmem:[%s1] sm:$0xff]
  %v20 = vld [vmem:[%s1 + $0x8] sm:$0xff]
  %v21 = vld [vmem:[%s1 + $0x10] sm:$0xff]
  %v22 = vld [vmem:[%s1 + $0x18] sm:$0xff]
  %v23 = vld [vmem:[%s1 + $0x20] sm:$0xff]
  %v24 = vld [vmem:[%s1 + $0x28] sm:$0xff]
  %v25 = vld [vmem:[%s1 + $0x30] sm:$0xff]
  %v26 = vld [vmem:[%s1 + $0x38] sm:$0xff]
  %v27 = vld [vmem:[%s1 + $0x40] sm:$0xff]
  %v28 = vld [vmem:[%s1 + $0x48] sm:$0xff]
  %v29 = vld [vmem:[%s1 + $0x50] sm:$0xff]
  %v30 = vld [vmem:[%s1 + $0x58] sm:$0xff]
  %v31 = vld [vmem:[%s1 + $0x60] sm:$0xff]
  %v32 = vld [vmem:[%s1 + $0x68] sm:$0xff]
  %v33 = vld [vmem:[%s1 + $0x70] sm:$0xff]
  %v34 = vld [vmem:[%s1 + $0x78] sm:$0xff]
  %v35 = vld [vmem:[%s1 + $0x80] sm:$0xff]
  %v36 = vld [vmem:[%s1 + $0x88] sm:$0xff]
  %v37 = vld [vmem:[%s1 + $0x90] sm:$0xff]
  %v38 = vld [vmem:[%s1 + $0x98] sm:$0xff]
  %v39 = vld [vmem:[%s1 + $0xa0] sm:$0xff]
  %v40 = vld [vmem:[%s1 + $0xa8] sm:$0xff]
  %v41 = vld [vmem:[%s1 + $0xb0] sm:$0xff]
  %v42 = vld [vmem:[%s1 + $0xb8] sm:$0xff]
  %v43 = vld [vmem:[%s1 + $0xc0] sm:$0xff]
  %v44 = vld [vmem:[%s1 + $0xc8] sm:$0xff]
  %v45 = vld [vmem:[%s1 + $0xd0] sm:$0xff]
  %v46 = vld [vmem:[%s1 + $0xd8] sm:$0xff]
  %v47 = vld [vmem:[%s1 + $0xe0] sm:$0xff]
  %v48 = vld [vmem:[%s1 + $0xe8] sm:$0xff]
  %v49 = vld [vmem:[%s1 + $0xf0] sm:$0xff]
  %v50 = vld [vmem:[%s1 + $0xf8] sm:$0xff]
  %v51 = vld [vmem:[%s1 + $0x100] sm:$0xff]
  %v52 = vld [vmem:[%s1 + $0x108] sm:$0xff]
  %v53 = vld [vmem:[%s1 + $0x110] sm:$0xff]
  %v54 = vld [vmem:[%s1 + $0x118] sm:$0xff]
  %v55 = vld [vmem:[%s1 + $0x120] sm:$0xff]
  %v56 = vld [vmem:[%s1 + $0x128] sm:$0xff]
  %v57 = vld [vmem:[%s1 + $0x130] sm:$0xff]
  %v58 = vld [vmem:[%s1 + $0x138] sm:$0xff]
  %v59 = vld [vmem:[%s1 + $0x140] sm:$0xff]
  %v60 = vld [vmem:[%s1 + $0x148] sm:$0xff]
  %v61 = vld [vmem:[%s1 + $0x150] sm:$0xff]
  %v62 = vld [vmem:[%s1 + $0x158] sm:$0xff]
  %v63 = vld [vmem:[%s1 + $0x160] sm:$0xff]
  %v64 = vld [vmem:[%s1 + $0x168] sm:$0xff]
  %v65 = vld [vmem:[%s1 + $0x170] sm:$0xff]
  %v66 = vld [vmem:[%s1 + $0x178] sm:$0xff]
  %v67 = vld [vmem:[%s1 + $0x180] sm:$0xff]
  %v68 = vld [vmem:[%s1 + $0x188] sm:$0xff]
  %v69 = vld [vmem:[%s1 + $0x190] sm:$0xff]
  %v70 = vld [vmem:[%s1 + $0x198] sm:$0xff]
  %v71 = vld [vmem:[%s1 + $0x1a0] sm:$0xff]
  %v72 = vld [vmem:[%s1 + $0x1a8] sm:$0xff]
  %v73 = vld [vmem:[%s1 + $0x1b0] sm:$0xff]
  %v74 = vld [vmem:[%s1 + $0x1b8] sm:$0xff]
  %v75 = vld [vmem:[%s1 + $0x1c0] sm:$0xff]
  %v76 = vld [vmem:[%s1 + $0x1c8] sm:$0xff]
  %v77 = vld [vmem:[%s1 + $0x1d0] sm:$0xff]
  %v78 = vld [vmem:[%s1 + $0x1d8] sm:$0xff]
  %v79 = vld [vmem:[%s1 + $0x1e0] sm:$0xff]
  %v80 = vld [vmem:[%s1 + $0x1e8] sm:$0xff]
  %v81 = vld [vmem:[%s1 + $0x1f0] sm:$0xff]
  %v82 = vld [vmem:[%s1 + $0x1f8] sm:$0xff]
  %v147 = vunpack.c.l.b16 %v19
  %v148 = vunpack.c.h.b16 %v19
  %v149 = vunpack.c.l.b16 %v20
  %v150 = vunpack.c.h.b16 %v20
  %v151 = vunpack.c.l.b16 %v21
  %v152 = vunpack.c.h.b16 %v21
  %v153 = vunpack.c.l.b16 %v22
  %v154 = vunpack.c.h.b16 %v22
  %v155 = vunpack.c.l.b16 %v23
  %v156 = vunpack.c.h.b16 %v23
  %v157 = vunpack.c.l.b16 %v24
  %v158 = vunpack.c.h.b16 %v24
  %v159 = vunpack.c.l.b16 %v25
  %v160 = vunpack.c.h.b16 %v25
  %v161 = vunpack.c.l.b16 %v26
  %v162 = vunpack.c.h.b16 %v26
  %v163 = vunpack.c.l.b16 %v27
  %v164 = vunpack.c.h.b16 %v27
  %v165 = vunpack.c.l.b16 %v28
  %v166 = vunpack.c.h.b16 %v28
  %v167 = vunpack.c.l.b16 %v29
  %v168 = vunpack.c.h.b16 %v29
  %v169 = vunpack.c.l.b16 %v30
  %v170 = vunpack.c.h.b16 %v30
  %v171 = vunpack.c.l.b16 %v31
  %v172 = vunpack.c.h.b16 %v31
  %v173 = vunpack.c.l.b16 %v32
  %v174 = vunpack.c.h.b16 %v32
  %v175 = vunpack.c.l.b16 %v33
  %v176 = vunpack.c.h.b16 %v33
  %v177 = vunpack.c.l.b16 %v34
  %v178 = vunpack.c.h.b16 %v34
  %v179 = vunpack.c.l.b16 %v35
  %v180 = vunpack.c.h.b16 %v35
  %v181 = vunpack.c.l.b16 %v36
  %v182 = vunpack.c.h.b16 %v36
  %v183 = vunpack.c.l.b16 %v37
  %v184 = vunpack.c.h.b16 %v37
  %v185 = vunpack.c.l.b16 %v38
  %v186 = vunpack.c.h.b16 %v38
  %v187 = vunpack.c.l.b16 %v39
  %v188 = vunpack.c.h.b16 %v39
  %v189 = vunpack.c.l.b16 %v40
  %v190 = vunpack.c.h.b16 %v40
  %v191 = vunpack.c.l.b16 %v41
  %v192 = vunpack.c.h.b16 %v41
  %v193 = vunpack.c.l.b16 %v42
  %v194 = vunpack.c.h.b16 %v42
  %v195 = vunpack.c.l.b16 %v43
  %v196 = vunpack.c.h.b16 %v43
  %v197 = vunpack.c.l.b16 %v44
  %v198 = vunpack.c.h.b16 %v44
  %v199 = vunpack.c.l.b16 %v45
  %v200 = vunpack.c.h.b16 %v45
  %v201 = vunpack.c.l.b16 %v46
  %v202 = vunpack.c.h.b16 %v46
  %v203 = vunpack.c.l.b16 %v47
  %v204 = vunpack.c.h.b16 %v47
  %v205 = vunpack.c.l.b16 %v48
  %v206 = vunpack.c.h.b16 %v48
  %v207 = vunpack.c.l.b16 %v49
  %v208 = vunpack.c.h.b16 %v49
  %v209 = vunpack.c.l.b16 %v50
  %v210 = vunpack.c.h.b16 %v50
  %v211 = vunpack.c.l.b16 %v51
  %v212 = vunpack.c.h.b16 %v51
  %v213 = vunpack.c.l.b16 %v52
  %v214 = vunpack.c.h.b16 %v52
  %v215 = vunpack.c.l.b16 %v53
  %v216 = vunpack.c.h.b16 %v53
  %v217 = vunpack.c.l.b16 %v54
  %v218 = vunpack.c.h.b16 %v54
  %v219 = vunpack.c.l.b16 %v55
  %v220 = vunpack.c.h.b16 %v55
  %v221 = vunpack.c.l.b16 %v56
  %v222 = vunpack.c.h.b16 %v56
  %v223 = vunpack.c.l.b16 %v57
  %v224 = vunpack.c.h.b16 %v57
  %v225 = vunpack.c.l.b16 %v58
  %v226 = vunpack.c.h.b16 %v58
  %v227 = vunpack.c.l.b16 %v59
  %v228 = vunpack.c.h.b16 %v59
  %v229 = vunpack.c.l.b16 %v60
  %v230 = vunpack.c.h.b16 %v60
  %v231 = vunpack.c.l.b16 %v61
  %v232 = vunpack.c.h.b16 %v61
  %v233 = vunpack.c.l.b16 %v62
  %v234 = vunpack.c.h.b16 %v62
  %v235 = vunpack.c.l.b16 %v63
  %v236 = vunpack.c.h.b16 %v63
  %v237 = vunpack.c.l.b16 %v64
  %v238 = vunpack.c.h.b16 %v64
  %v239 = vunpack.c.l.b16 %v65
  %v240 = vunpack.c.h.b16 %v65
  %v241 = vunpack.c.l.b16 %v66
  %v242 = vunpack.c.h.b16 %v66
  %v243 = vunpack.c.l.b16 %v67
  %v244 = vunpack.c.h.b16 %v67
  %v245 = vunpack.c.l.b16 %v68
  %v246 = vunpack.c.h.b16 %v68
  %v247 = vunpack.c.l.b16 %v69
  %v248 = vunpack.c.h.b16 %v69
  %v249 = vunpack.c.l.b16 %v70
  %v250 = vunpack.c.h.b16 %v70
  %v251 = vunpack.c.l.b16 %v71
  %v252 = vunpack.c.h.b16 %v71
  %v253 = vunpack.c.l.b16 %v72
  %v254 = vunpack.c.h.b16 %v72
  %v255 = vunpack.c.l.b16 %v73
  %v256 = vunpack.c.h.b16 %v73
  %v257 = vunpack.c.l.b16 %v74
  %v258 = vunpack.c.h.b16 %v74
  %v259 = vunpack.c.l.b16 %v75
  %v260 = vunpack.c.h.b16 %v75
  %v261 = vunpack.c.l.b16 %v76
  %v262 = vunpack.c.h.b16 %v76
  %v263 = vunpack.c.l.b16 %v77
  %v264 = vunpack.c.h.b16 %v77
  %v265 = vunpack.c.l.b16 %v78
  %v266 = vunpack.c.h.b16 %v78
  %v267 = vunpack.c.l.b16 %v79
  %v268 = vunpack.c.h.b16 %v79
  %v269 = vunpack.c.l.b16 %v80
  %v270 = vunpack.c.h.b16 %v80
  %v271 = vunpack.c.l.b16 %v81
  %v272 = vunpack.c.h.b16 %v81
  %v273 = vunpack.c.l.b16 %v82
  %v274 = vunpack.c.h.b16 %v82
  %v275 = vpack.c.b16 %v163, %v147
  %v276 = vpack.c.b16 %v164, %v148
  %v277 = vpack.c.b16 %v165, %v149
  %v278 = vpack.c.b16 %v166, %v150
  %v279 = vpack.c.b16 %v167, %v151
  %v280 = vpack.c.b16 %v168, %v152
  %v281 = vpack.c.b16 %v169, %v153
  %v282 = vpack.c.b16 %v170, %v154
  %v283 = vpack.c.b16 %v171, %v155
  %v284 = vpack.c.b16 %v172, %v156
  %v285 = vpack.c.b16 %v173, %v157
  %v286 = vpack.c.b16 %v174, %v158
  %v287 = vpack.c.b16 %v175, %v159
  %v288 = vpack.c.b16 %v176, %v160
  %v289 = vpack.c.b16 %v177, %v161
  %v290 = vpack.c.b16 %v178, %v162
  %v291 = vpack.c.b16 %v195, %v179
  %v292 = vpack.c.b16 %v196, %v180
  %v293 = vpack.c.b16 %v197, %v181
  %v294 = vpack.c.b16 %v198, %v182
  %v295 = vpack.c.b16 %v199, %v183
  %v296 = vpack.c.b16 %v200, %v184
  %v297 = vpack.c.b16 %v201, %v185
  %v298 = vpack.c.b16 %v202, %v186
  %v299 = vpack.c.b16 %v203, %v187
  %v300 = vpack.c.b16 %v204, %v188
  %v301 = vpack.c.b16 %v205, %v189
  %v302 = vpack.c.b16 %v206, %v190
  %v303 = vpack.c.b16 %v207, %v191
  %v304 = vpack.c.b16 %v208, %v192
  %v305 = vpack.c.b16 %v209, %v193
  %v306 = vpack.c.b16 %v210, %v194
  %v307 = vpack.c.b16 %v227, %v211
  %v308 = vpack.c.b16 %v228, %v212
  %v309 = vpack.c.b16 %v229, %v213
  %v310 = vpack.c.b16 %v230, %v214
  %v311 = vpack.c.b16 %v231, %v215
  %v312 = vpack.c.b16 %v232, %v216
  %v313 = vpack.c.b16 %v233, %v217
  %v314 = vpack.c.b16 %v234, %v218
  %v315 = vpack.c.b16 %v235, %v219
  %v316 = vpack.c.b16 %v236, %v220
  %v317 = vpack.c.b16 %v237, %v221
  %v318 = vpack.c.b16 %v238, %v222
  %v319 = vpack.c.b16 %v239, %v223
  %v320 = vpack.c.b16 %v240, %v224
  %v321 = vpack.c.b16 %v241, %v225
  %v322 = vpack.c.b16 %v242, %v226
  %v323 = vpack.c.b16 %v259, %v243
  %v324 = vpack.c.b16 %v260, %v244
  %v325 = vpack.c.b16 %v261, %v245
  %v326 = vpack.c.b16 %v262, %v246
  %v327 = vpack.c.b16 %v263, %v247
  %v328 = vpack.c.b16 %v264, %v248
  %v329 = vpack.c.b16 %v265, %v249
  %v330 = vpack.c.b16 %v266, %v250
  %v331 = vpack.c.b16 %v267, %v251
  %v332 = vpack.c.b16 %v268, %v252
  %v333 = vpack.c.b16 %v269, %v253
  %v334 = vpack.c.b16 %v270, %v254
  %v335 = vpack.c.b16 %v271, %v255
  %v336 = vpack.c.b16 %v272, %v256
  %v337 = vpack.c.b16 %v273, %v257
  %v338 = vpack.c.b16 %v274, %v258
  %vm403 = vcmask 523264
  %v405 = vsel %vm403, %v18, 0
  %407 = vmatprep.subr.bf16.mxu0 0
  %408 = vmatpush1.bf16.msra.mxu0 0
  %409 = vmatprep.subr.bf16.mxu0 0
  %410 = vmatpush1.bf16.msra.mxu0 0
  %411 = vmatprep.subr.bf16.mxu0 0
  %412 = vmatpush1.bf16.msra.mxu0 0
  %413 = vmatprep.subr.bf16.mxu0 0
  %414 = vmatpush1.bf16.msra.mxu0 0
  %415 = vmatprep.subr.bf16.mxu0 %v324
  %416 = vmatpush1.bf16.msra.mxu0 %v323
  %417 = vmatprep.subr.bf16.mxu0 %v308
  %418 = vmatpush1.bf16.msra.mxu0 %v307
  %419 = vmatprep.subr.bf16.mxu0 %v292
  %420 = vmatpush1.bf16.msra.mxu0 %v291
  %421 = vmatprep.subr.bf16.mxu0 %v276
  %422 = vmatpush1.bf16.msra.mxu0 %v275
  %423 = vmatprep.subr.bf16.mxu0 0
  %424 = vmatpush2.bf16.msra.mxu0 0
  %425 = vmatprep.subr.bf16.mxu0 0
  %426 = vmatpush2.bf16.msra.mxu0 0
  %427 = vmatprep.subr.bf16.mxu0 0
  %428 = vmatpush2.bf16.msra.mxu0 0
  %429 = vmatprep.subr.bf16.mxu0 0
  %430 = vmatpush2.bf16.msra.mxu0 0
  %431 = vmatprep.subr.bf16.mxu0 0
  %432 = vmatpush2.bf16.msra.mxu0 0
  %433 = vmatprep.subr.bf16.mxu0 0
  %434 = vmatpush2.bf16.msra.mxu0 0
  %435 = vmatprep.subr.bf16.mxu0 0
  %436 = vmatpush2.bf16.msra.mxu0 0
  %437 = vmatprep.subr.bf16.mxu0 0
  %438 = vmatpush2.bf16.msra.mxu0 0
  %439 = vmatprep.mubr.bf16.mxu0 0
  %440 = vmatmul.mubr.bf16.gmra.mxu0 %v405
  %v441 = vpop.f32.mrf.mxu0
  %v442 = vadd.f32 0.0, %v441
  %v443 = vpop.f32.mrf.mxu0
  %v444 = vadd.f32 0.0, %v443
  %v445 = vpop.f32.mrf.mxu0
  %v446 = vpop.f32.mrf.mxu0
  %447 = vdwg.mxu0
  %448 = vmatprep.subr.bf16.mxu0 0
  %449 = vmatpush1.bf16.msra.mxu0 0
  %450 = vmatprep.subr.bf16.mxu0 0
  %451 = vmatpush1.bf16.msra.mxu0 0
  %452 = vmatprep.subr.bf16.mxu0 0
  %453 = vmatpush1.bf16.msra.mxu0 0
  %454 = vmatprep.subr.bf16.mxu0 0
  %455 = vmatpush1.bf16.msra.mxu0 0
  %456 = vmatprep.subr.bf16.mxu0 %v326
  %457 = vmatpush1.bf16.msra.mxu0 %v325
  %458 = vmatprep.subr.bf16.mxu0 %v310
  %459 = vmatpush1.bf16.msra.mxu0 %v309
  %460 = vmatprep.subr.bf16.mxu0 %v294
  %461 = vmatpush1.bf16.msra.mxu0 %v293
  %462 = vmatprep.subr.bf16.mxu0 %v278
  %463 = vmatpush1.bf16.msra.mxu0 %v277
  %464 = vmatprep.subr.bf16.mxu0 0
  %465 = vmatpush2.bf16.msra.mxu0 0
  %466 = vmatprep.subr.bf16.mxu0 0
  %467 = vmatpush2.bf16.msra.mxu0 0
  %468 = vmatprep.subr.bf16.mxu0 0
  %469 = vmatpush2.bf16.msra.mxu0 0
  %470 = vmatprep.subr.bf16.mxu0 0
  %471 = vmatpush2.bf16.msra.mxu0 0
  %472 = vmatprep.subr.bf16.mxu0 0
  %473 = vmatpush2.bf16.msra.mxu0 0
  %474 = vmatprep.subr.bf16.mxu0 0
  %475 = vmatpush2.bf16.msra.mxu0 0
  %476 = vmatprep.subr.bf16.mxu0 0
  %477 = vmatpush2.bf16.msra.mxu0 0
  %478 = vmatprep.subr.bf16.mxu0 0
  %479 = vmatpush2.bf16.msra.mxu0 0
  %480 = vmatprep.mubr.bf16.mxu0 0
  %481 = vmatmul.mubr.bf16.gmra.mxu0 %v405
  %v482 = vpop.f32.mrf.mxu0
  %v483 = vadd.f32 0.0, %v482
  %v484 = vpop.f32.mrf.mxu0
  %v485 = vadd.f32 0.0, %v484
  %v486 = vpop.f32.mrf.mxu0
  %v487 = vpop.f32.mrf.mxu0
  %488 = vdwg.mxu0
  %489 = vmatprep.subr.bf16.mxu0 0
  %490 = vmatpush1.bf16.msra.mxu0 0
  %491 = vmatprep.subr.bf16.mxu0 0
  %492 = vmatpush1.bf16.msra.mxu0 0
  %493 = vmatprep.subr.bf16.mxu0 0
  %494 = vmatpush1.bf16.msra.mxu0 0
  %495 = vmatprep.subr.bf16.mxu0 0
  %496 = vmatpush1.bf16.msra.mxu0 0
  %497 = vmatprep.subr.bf16.mxu0 %v328
  %498 = vmatpush1.bf16.msra.mxu0 %v327
  %499 = vmatprep.subr.bf16.mxu0 %v312
  %500 = vmatpush1.bf16.msra.mxu0 %v311
  %501 = vmatprep.subr.bf16.mxu0 %v296
  %502 = vmatpush1.bf16.msra.mxu0 %v295
  %503 = vmatprep.subr.bf16.mxu0 %v280
  %504 = vmatpush1.bf16.msra.mxu0 %v279
  %505 = vmatprep.subr.bf16.mxu0 0
  %506 = vmatpush2.bf16.msra.mxu0 0
  %507 = vmatprep.subr.bf16.mxu0 0
  %508 = vmatpush2.bf16.msra.mxu0 0
  %509 = vmatprep.subr.bf16.mxu0 0
  %510 = vmatpush2.bf16.msra.mxu0 0
  %511 = vmatprep.subr.bf16.mxu0 0
  %512 = vmatpush2.bf16.msra.mxu0 0
  %513 = vmatprep.subr.bf16.mxu0 0
  %514 = vmatpush2.bf16.msra.mxu0 0
  %515 = vmatprep.subr.bf16.mxu0 0
  %516 = vmatpush2.bf16.msra.mxu0 0
  %517 = vmatprep.subr.bf16.mxu0 0
  %518 = vmatpush2.bf16.msra.mxu0 0
  %519 = vmatprep.subr.bf16.mxu0 0
  %520 = vmatpush2.bf16.msra.mxu0 0
  %521 = vmatprep.mubr.bf16.mxu0 0
  %522 = vmatmul.mubr.bf16.gmra.mxu0 %v405
  %v523 = vpop.f32.mrf.mxu0
  %v524 = vadd.f32 0.0, %v523
  %v525 = vpop.f32.mrf.mxu0
  %v526 = vadd.f32 0.0, %v525
  %v527 = vpop.f32.mrf.mxu0
  %v528 = vpop.f32.mrf.mxu0
  %529 = vdwg.mxu0
  %530 = vmatprep.subr.bf16.mxu0 0
  %531 = vmatpush1.bf16.msra.mxu0 0
  %532 = vmatprep.subr.bf16.mxu0 0
  %533 = vmatpush1.bf16.msra.mxu0 0
  %534 = vmatprep.subr.bf16.mxu0 0
  %535 = vmatpush1.bf16.msra.mxu0 0
  %536 = vmatprep.subr.bf16.mxu0 0
  %537 = vmatpush1.bf16.msra.mxu0 0
  %538 = vmatprep.subr.bf16.mxu0 %v330
  %539 = vmatpush1.bf16.msra.mxu0 %v329
  %540 = vmatprep.subr.bf16.mxu0 %v314
  %541 = vmatpush1.bf16.msra.mxu0 %v313
  %542 = vmatprep.subr.bf16.mxu0 %v298
  %543 = vmatpush1.bf16.msra.mxu0 %v297
  %544 = vmatprep.subr.bf16.mxu0 %v282
  %545 = vmatpush1.bf16.msra.mxu0 %v281
  %546 = vmatprep.subr.bf16.mxu0 0
  %547 = vmatpush2.bf16.msra.mxu0 0
  %548 = vmatprep.subr.bf16.mxu0 0
  %549 = vmatpush2.bf16.msra.mxu0 0
  %550 = vmatprep.subr.bf16.mxu0 0
  %551 = vmatpush2.bf16.msra.mxu0 0
  %552 = vmatprep.subr.bf16.mxu0 0
  %553 = vmatpush2.bf16.msra.mxu0 0
  %554 = vmatprep.subr.bf16.mxu0 0
  %555 = vmatpush2.bf16.msra.mxu0 0
  %556 = vmatprep.subr.bf16.mxu0 0
  %557 = vmatpush2.bf16.msra.mxu0 0
  %558 = vmatprep.subr.bf16.mxu0 0
  %559 = vmatpush2.bf16.msra.mxu0 0
  %560 = vmatprep.subr.bf16.mxu0 0
  %561 = vmatpush2.bf16.msra.mxu0 0
  %562 = vmatprep.mubr.bf16.mxu0 0
  %563 = vmatmul.mubr.bf16.gmra.mxu0 %v405
  %v564 = vpop.f32.mrf.mxu0
  %v565 = vadd.f32 0.0, %v564
  %v566 = vpop.f32.mrf.mxu0
  %v567 = vadd.f32 0.0, %v566
  %v568 = vpop.f32.mrf.mxu0
  %v569 = vpop.f32.mrf.mxu0
  %570 = vdwg.mxu0
  %571 = vmatprep.subr.bf16.mxu0 0
  %572 = vmatpush1.bf16.msra.mxu0 0
  %573 = vmatprep.subr.bf16.mxu0 0
  %574 = vmatpush1.bf16.msra.mxu0 0
  %575 = vmatprep.subr.bf16.mxu0 0
  %576 = vmatpush1.bf16.msra.mxu0 0
  %577 = vmatprep.subr.bf16.mxu0 0
  %578 = vmatpush1.bf16.msra.mxu0 0
  %579 = vmatprep.subr.bf16.mxu0 %v332
  %580 = vmatpush1.bf16.msra.mxu0 %v331
  %581 = vmatprep.subr.bf16.mxu0 %v316
  %582 = vmatpush1.bf16.msra.mxu0 %v315
  %583 = vmatprep.subr.bf16.mxu0 %v300
  %584 = vmatpush1.bf16.msra.mxu0 %v299
  %585 = vmatprep.subr.bf16.mxu0 %v284
  %586 = vmatpush1.bf16.msra.mxu0 %v283
  %587 = vmatprep.subr.bf16.mxu0 0
  %588 = vmatpush2.bf16.msra.mxu0 0
  %589 = vmatprep.subr.bf16.mxu0 0
  %590 = vmatpush2.bf16.msra.mxu0 0
  %591 = vmatprep.subr.bf16.mxu0 0
  %592 = vmatpush2.bf16.msra.mxu0 0
  %593 = vmatprep.subr.bf16.mxu0 0
  %594 = vmatpush2.bf16.msra.mxu0 0
  %595 = vmatprep.subr.bf16.mxu0 0
  %596 = vmatpush2.bf16.msra.mxu0 0
  %597 = vmatprep.subr.bf16.mxu0 0
  %598 = vmatpush2.bf16.msra.mxu0 0
  %599 = vmatprep.subr.bf16.mxu0 0
  %600 = vmatpush2.bf16.msra.mxu0 0
  %601 = vmatprep.subr.bf16.mxu0 0
  %602 = vmatpush2.bf16.msra.mxu0 0
  %603 = vmatprep.mubr.bf16.mxu0 0
  %604 = vmatmul.mubr.bf16.gmra.mxu0 %v405
  %v605 = vpop.f32.mrf.mxu0
  %v606 = vadd.f32 0.0, %v605
  %v607 = vpop.f32.mrf.mxu0
  %v608 = vadd.f32 0.0, %v607
  %v609 = vpop.f32.mrf.mxu0
  %v610 = vpop.f32.mrf.mxu0
  %611 = vdwg.mxu0
  %612 = vmatprep.subr.bf16.mxu0 0
  %613 = vmatpush1.bf16.msra.mxu0 0
  %614 = vmatprep.subr.bf16.mxu0 0
  %615 = vmatpush1.bf16.msra.mxu0 0
  %616 = vmatprep.subr.bf16.mxu0 0
  %617 = vmatpush1.bf16.msra.mxu0 0
  %618 = vmatprep.subr.bf16.mxu0 0
  %619 = vmatpush1.bf16.msra.mxu0 0
  %620 = vmatprep.subr.bf16.mxu0 %v334
  %621 = vmatpush1.bf16.msra.mxu0 %v333
  %622 = vmatprep.subr.bf16.mxu0 %v318
  %623 = vmatpush1.bf16.msra.mxu0 %v317
  %624 = vmatprep.subr.bf16.mxu0 %v302
  %625 = vmatpush1.bf16.msra.mxu0 %v301
  %626 = vmatprep.subr.bf16.mxu0 %v286
  %627 = vmatpush1.bf16.msra.mxu0 %v285
  %628 = vmatprep.subr.bf16.mxu0 0
  %629 = vmatpush2.bf16.msra.mxu0 0
  %630 = vmatprep.subr.bf16.mxu0 0
  %631 = vmatpush2.bf16.msra.mxu0 0
  %632 = vmatprep.subr.bf16.mxu0 0
  %633 = vmatpush2.bf16.msra.mxu0 0
  %634 = vmatprep.subr.bf16.mxu0 0
  %635 = vmatpush2.bf16.msra.mxu0 0
  %636 = vmatprep.subr.bf16.mxu0 0
  %637 = vmatpush2.bf16.msra.mxu0 0
  %638 = vmatprep.subr.bf16.mxu0 0
  %639 = vmatpush2.bf16.msra.mxu0 0
  %640 = vmatprep.subr.bf16.mxu0 0
  %641 = vmatpush2.bf16.msra.mxu0 0
  %642 = vmatprep.subr.bf16.mxu0 0
  %643 = vmatpush2.bf16.msra.mxu0 0
  %644 = vmatprep.mubr.bf16.mxu0 0
  %645 = vmatmul.mubr.bf16.gmra.mxu0 %v405
  %v646 = vpop.f32.mrf.mxu0
  %v647 = vadd.f32 0.0, %v646
  %v648 = vpop.f32.mrf.mxu0
  %v649 = vadd.f32 0.0, %v648
  %v650 = vpop.f32.mrf.mxu0
  %v651 = vpop.f32.mrf.mxu0
  %652 = vdwg.mxu0
  %653 = vmatprep.subr.bf16.mxu0 0
  %654 = vmatpush1.bf16.msra.mxu0 0
  %655 = vmatprep.subr.bf16.mxu0 0
  %656 = vmatpush1.bf16.msra.mxu0 0
  %657 = vmatprep.subr.bf16.mxu0 0
  %658 = vmatpush1.bf16.msra.mxu0 0
  %659 = vmatprep.subr.bf16.mxu0 0
  %660 = vmatpush1.bf16.msra.mxu0 0
  %661 = vmatprep.subr.bf16.mxu0 %v336
  %662 = vmatpush1.bf16.msra.mxu0 %v335
  %663 = vmatprep.subr.bf16.mxu0 %v320
  %664 = vmatpush1.bf16.msra.mxu0 %v319
  %665 = vmatprep.subr.bf16.mxu0 %v304
  %666 = vmatpush1.bf16.msra.mxu0 %v303
  %667 = vmatprep.subr.bf16.mxu0 %v288
  %668 = vmatpush1.bf16.msra.mxu0 %v287
  %669 = vmatprep.subr.bf16.mxu0 0
  %670 = vmatpush2.bf16.msra.mxu0 0
  %671 = vmatprep.subr.bf16.mxu0 0
  %672 = vmatpush2.bf16.msra.mxu0 0
  %673 = vmatprep.subr.bf16.mxu0 0
  %674 = vmatpush2.bf16.msra.mxu0 0
  %675 = vmatprep.subr.bf16.mxu0 0
  %676 = vmatpush2.bf16.msra.mxu0 0
  %677 = vmatprep.subr.bf16.mxu0 0
  %678 = vmatpush2.bf16.msra.mxu0 0
  %679 = vmatprep.subr.bf16.mxu0 0
  %680 = vmatpush2.bf16.msra.mxu0 0
  %681 = vmatprep.subr.bf16.mxu0 0
  %682 = vmatpush2.bf16.msra.mxu0 0
  %683 = vmatprep.subr.bf16.mxu0 0
  %684 = vmatpush2.bf16.msra.mxu0 0
  %685 = vmatprep.mubr.bf16.mxu0 0
  %686 = vmatmul.mubr.bf16.gmra.mxu0 %v405
  %v687 = vpop.f32.mrf.mxu0
  %v688 = vadd.f32 0.0, %v687
  %v689 = vpop.f32.mrf.mxu0
  %v690 = vadd.f32 0.0, %v689
  %v691 = vpop.f32.mrf.mxu0
  %v692 = vpop.f32.mrf.mxu0
  %693 = vdwg.mxu0
  %694 = vmatprep.subr.bf16.mxu0 0
  %695 = vmatpush1.bf16.msra.mxu0 0
  %696 = vmatprep.subr.bf16.mxu0 0
  %697 = vmatpush1.bf16.msra.mxu0 0
  %698 = vmatprep.subr.bf16.mxu0 0
  %699 = vmatpush1.bf16.msra.mxu0 0
  %700 = vmatprep.subr.bf16.mxu0 0
  %701 = vmatpush1.bf16.msra.mxu0 0
  %702 = vmatprep.subr.bf16.mxu0 %v338
  %703 = vmatpush1.bf16.msra.mxu0 %v337
  %704 = vmatprep.subr.bf16.mxu0 %v322
  %705 = vmatpush1.bf16.msra.mxu0 %v321
  %706 = vmatprep.subr.bf16.mxu0 %v306
  %707 = vmatpush1.bf16.msra.mxu0 %v305
  %708 = vmatprep.subr.bf16.mxu0 %v290
  %709 = vmatpush1.bf16.msra.mxu0 %v289
  %710 = vmatprep.subr.bf16.mxu0 0
  %711 = vmatpush2.bf16.msra.mxu0 0
  %712 = vmatprep.subr.bf16.mxu0 0
  %713 = vmatpush2.bf16.msra.mxu0 0
  %714 = vmatprep.subr.bf16.mxu0 0
  %715 = vmatpush2.bf16.msra.mxu0 0
  %716 = vmatprep.subr.bf16.mxu0 0
  %717 = vmatpush2.bf16.msra.mxu0 0
  %718 = vmatprep.subr.bf16.mxu0 0
  %719 = vmatpush2.bf16.msra.mxu0 0
  %720 = vmatprep.subr.bf16.mxu0 0
  %721 = vmatpush2.bf16.msra.mxu0 0
  %722 = vmatprep.subr.bf16.mxu0 0
  %723 = vmatpush2.bf16.msra.mxu0 0
  %724 = vmatprep.subr.bf16.mxu0 0
  %725 = vmatpush2.bf16.msra.mxu0 0
  %726 = vmatprep.mubr.bf16.mxu0 0
  %727 = vmatmul.mubr.bf16.gmra.mxu0 %v405
  %v728 = vpop.f32.mrf.mxu0
  %v729 = vadd.f32 0.0, %v728
  %v730 = vpop.f32.mrf.mxu0
  %v731 = vadd.f32 0.0, %v730
  %v732 = vpop.f32.mrf.mxu0
  %v733 = vpop.f32.mrf.mxu0
  %734 = vdwg.mxu0
  %v735 = vld [vmem:[%s2] sm:$0xff]
  %v736 = vld [vmem:[%s2 + $0x8] sm:$0xff]
  %v739 = vlaneseq
  %v740 = vshrl.u32 %v739, 7
  %v741 = vsub.s32 0, %v740
  %v742 = vrot.slane %v735, %v741
  %v743 = vlaneseq
  %v744 = vshrl.u32 %v743, 7
  %v745 = vsub.s32 1, %v744
  %v746 = vrot.slane %v735, %v745
  %v747 = vlaneseq
  %v748 = vshrl.u32 %v747, 7
  %v749 = vsub.s32 2, %v748
  %v750 = vrot.slane %v735, %v749
  %v751 = vlaneseq
  %v752 = vshrl.u32 %v751, 7
  %v753 = vsub.s32 3, %v752
  %v754 = vrot.slane %v735, %v753
  %v755 = vlaneseq
  %v756 = vshrl.u32 %v755, 7
  %v757 = vsub.s32 4, %v756
  %v758 = vrot.slane %v735, %v757
  %v759 = vlaneseq
  %v760 = vshrl.u32 %v759, 7
  %v761 = vsub.s32 5, %v760
  %v762 = vrot.slane %v735, %v761
  %v763 = vlaneseq
  %v764 = vshrl.u32 %v763, 7
  %v765 = vsub.s32 6, %v764
  %v766 = vrot.slane %v735, %v765
  %v767 = vlaneseq
  %v768 = vshrl.u32 %v767, 7
  %v769 = vsub.s32 7, %v768
  %v770 = vrot.slane %v735, %v769
  %v771 = vlaneseq
  %v772 = vshrl.u32 %v771, 7
  %v773 = vsub.s32 0, %v772
  %v774 = vrot.slane %v736, %v773
  %v775 = vlaneseq
  %v776 = vshrl.u32 %v775, 7
  %v777 = vsub.s32 1, %v776
  %v778 = vrot.slane %v736, %v777
  %v779 = vlaneseq
  %v780 = vshrl.u32 %v779, 7
  %v781 = vsub.s32 2, %v780
  %v782 = vrot.slane %v736, %v781
  %v783 = vlaneseq
  %v784 = vshrl.u32 %v783, 7
  %v785 = vsub.s32 3, %v784
  %v786 = vrot.slane %v736, %v785
  %v787 = vlaneseq
  %v788 = vshrl.u32 %v787, 7
  %v789 = vsub.s32 4, %v788
  %v790 = vrot.slane %v736, %v789
  %v791 = vlaneseq
  %v792 = vshrl.u32 %v791, 7
  %v793 = vsub.s32 5, %v792
  %v794 = vrot.slane %v736, %v793
  %v795 = vlaneseq
  %v796 = vshrl.u32 %v795, 7
  %v797 = vsub.s32 6, %v796
  %v798 = vrot.slane %v736, %v797
  %v799 = vlaneseq
  %v800 = vshrl.u32 %v799, 7
  %v801 = vsub.s32 7, %v800
  %v802 = vrot.slane %v736, %v801
  %v819 = vmul.f32 %v442, %v742
  %v820 = vmul.f32 %v444, %v746
  %v821 = vmul.f32 %v483, %v750
  %v822 = vmul.f32 %v485, %v754
  %v823 = vmul.f32 %v524, %v758
  %v824 = vmul.f32 %v526, %v762
  %v825 = vmul.f32 %v565, %v766
  %v826 = vmul.f32 %v567, %v770
  %v827 = vmul.f32 %v606, %v774
  %v828 = vmul.f32 %v608, %v778
  %v829 = vmul.f32 %v647, %v782
  %v830 = vmul.f32 %v649, %v786
  %v831 = vmul.f32 %v688, %v790
  %v832 = vmul.f32 %v690, %v794
  %v833 = vmul.f32 %v729, %v798
  %v834 = vmul.f32 %v731, %v802
  %v835 = vld [vmem:[%s3] sm:$0xff]
  %v836 = vld [vmem:[%s3 + $0x8] sm:$0xff]
  %v839 = vlaneseq
  %v840 = vshrl.u32 %v839, 7
  %v841 = vsub.s32 0, %v840
  %v842 = vrot.slane %v835, %v841
  %v843 = vlaneseq
  %v844 = vshrl.u32 %v843, 7
  %v845 = vsub.s32 1, %v844
  %v846 = vrot.slane %v835, %v845
  %v847 = vlaneseq
  %v848 = vshrl.u32 %v847, 7
  %v849 = vsub.s32 2, %v848
  %v850 = vrot.slane %v835, %v849
  %v851 = vlaneseq
  %v852 = vshrl.u32 %v851, 7
  %v853 = vsub.s32 3, %v852
  %v854 = vrot.slane %v835, %v853
  %v855 = vlaneseq
  %v856 = vshrl.u32 %v855, 7
  %v857 = vsub.s32 4, %v856
  %v858 = vrot.slane %v835, %v857
  %v859 = vlaneseq
  %v860 = vshrl.u32 %v859, 7
  %v861 = vsub.s32 5, %v860
  %v862 = vrot.slane %v835, %v861
  %v863 = vlaneseq
  %v864 = vshrl.u32 %v863, 7
  %v865 = vsub.s32 6, %v864
  %v866 = vrot.slane %v835, %v865
  %v867 = vlaneseq
  %v868 = vshrl.u32 %v867, 7
  %v869 = vsub.s32 7, %v868
  %v870 = vrot.slane %v835, %v869
  %v871 = vlaneseq
  %v872 = vshrl.u32 %v871, 7
  %v873 = vsub.s32 0, %v872
  %v874 = vrot.slane %v836, %v873
  %v875 = vlaneseq
  %v876 = vshrl.u32 %v875, 7
  %v877 = vsub.s32 1, %v876
  %v878 = vrot.slane %v836, %v877
  %v879 = vlaneseq
  %v880 = vshrl.u32 %v879, 7
  %v881 = vsub.s32 2, %v880
  %v882 = vrot.slane %v836, %v881
  %v883 = vlaneseq
  %v884 = vshrl.u32 %v883, 7
  %v885 = vsub.s32 3, %v884
  %v886 = vrot.slane %v836, %v885
  %v887 = vlaneseq
  %v888 = vshrl.u32 %v887, 7
  %v889 = vsub.s32 4, %v888
  %v890 = vrot.slane %v836, %v889
  %v891 = vlaneseq
  %v892 = vshrl.u32 %v891, 7
  %v893 = vsub.s32 5, %v892
  %v894 = vrot.slane %v836, %v893
  %v895 = vlaneseq
  %v896 = vshrl.u32 %v895, 7
  %v897 = vsub.s32 6, %v896
  %v898 = vrot.slane %v836, %v897
  %v899 = vlaneseq
  %v900 = vshrl.u32 %v899, 7
  %v901 = vsub.s32 7, %v900
  %v902 = vrot.slane %v836, %v901
  %v919 = vadd.f32 %v819, %v842
  %v920 = vadd.f32 %v820, %v846
  %v921 = vadd.f32 %v821, %v850
  %v922 = vadd.f32 %v822, %v854
  %v923 = vadd.f32 %v823, %v858
  %v924 = vadd.f32 %v824, %v862
  %v925 = vadd.f32 %v825, %v866
  %v926 = vadd.f32 %v826, %v870
  %v927 = vadd.f32 %v827, %v874
  %v928 = vadd.f32 %v828, %v878
  %v929 = vadd.f32 %v829, %v882
  %v930 = vadd.f32 %v830, %v886
  %v931 = vadd.f32 %v831, %v890
  %v932 = vadd.f32 %v832, %v894
  %v933 = vadd.f32 %v833, %v898
  %v934 = vadd.f32 %v834, %v902
  %v935 = vmax.f32 %v919, 0.0
  %v936 = vmax.f32 %v920, 0.0
  %v937 = vmax.f32 %v921, 0.0
  %v938 = vmax.f32 %v922, 0.0
  %v939 = vmax.f32 %v923, 0.0
  %v940 = vmax.f32 %v924, 0.0
  %v941 = vmax.f32 %v925, 0.0
  %v942 = vmax.f32 %v926, 0.0
  %v943 = vmax.f32 %v927, 0.0
  %v944 = vmax.f32 %v928, 0.0
  %v945 = vmax.f32 %v929, 0.0
  %v946 = vmax.f32 %v930, 0.0
  %v947 = vmax.f32 %v931, 0.0
  %v948 = vmax.f32 %v932, 0.0
  %v949 = vmax.f32 %v933, 0.0
  %v950 = vmax.f32 %v934, 0.0
  %v951 = vpack.c.bf16 %v935, %v935
  %v952 = vpack.c.bf16 %v936, %v936
  %v953 = vpack.c.bf16 %v937, %v937
  %v954 = vpack.c.bf16 %v938, %v938
  %v955 = vpack.c.bf16 %v939, %v939
  %v956 = vpack.c.bf16 %v940, %v940
  %v957 = vpack.c.bf16 %v941, %v941
  %v958 = vpack.c.bf16 %v942, %v942
  %v959 = vpack.c.bf16 %v943, %v943
  %v960 = vpack.c.bf16 %v944, %v944
  %v961 = vpack.c.bf16 %v945, %v945
  %v962 = vpack.c.bf16 %v946, %v946
  %v963 = vpack.c.bf16 %v947, %v947
  %v964 = vpack.c.bf16 %v948, %v948
  %v965 = vpack.c.bf16 %v949, %v949
  %v966 = vpack.c.bf16 %v950, %v950
  %v983 = vcombine.low %v951, %v952
  %v984 = vcombine.low %v953, %v954
  %v985 = vcombine.low %v955, %v956
  %v986 = vcombine.low %v957, %v958
  %v988 = vunpack.c.l.s4 1966171168
  %v989 = vunpack.c.0.s8 %v988
  %v990 = vlaneseq
  %v991 = vshrl.u32 %v990, 7
  %v992 = vsub.s32 %v989, %v991
  %v993 = vrot.slane %v983, %v992
  %v995 = vunpack.c.l.s4 1966171168
  %v996 = vunpack.c.0.s8 %v995
  %v997 = vlaneseq
  %v998 = vshrl.u32 %v997, 7
  %v999 = vsub.s32 %v996, %v998
  %v1000 = vrot.slane %v984, %v999
  %v1002 = vunpack.c.l.s4 1966171168
  %v1003 = vunpack.c.0.s8 %v1002
  %v1004 = vlaneseq
  %v1005 = vshrl.u32 %v1004, 7
  %v1006 = vsub.s32 %v1003, %v1005
  %v1007 = vrot.slane %v985, %v1006
  %v1009 = vunpack.c.l.s4 1966171168
  %v1010 = vunpack.c.0.s8 %v1009
  %v1011 = vlaneseq
  %v1012 = vshrl.u32 %v1011, 7
  %v1013 = vsub.s32 %v1010, %v1012
  %v1014 = vrot.slane %v986, %v1013
  %v1015 = vcombine.low %v993, %v1000
  %v1016 = vcombine.low %v1007, %v1014
  %v1018 = vunpack.c.l.s4 1966171168
  %v1019 = vunpack.c.0.s8 %v1018
  %v1020 = vlaneseq
  %v1021 = vshrl.u32 %v1020, 7
  %v1022 = vsub.s32 %v1019, %v1021
  %v1023 = vrot.slane %v1015, %v1022
  %v1025 = vunpack.c.l.s4 1966171168
  %v1026 = vunpack.c.0.s8 %v1025
  %v1027 = vlaneseq
  %v1028 = vshrl.u32 %v1027, 7
  %v1029 = vsub.s32 %v1026, %v1028
  %v1030 = vrot.slane %v1016, %v1029
  %v1031 = vcombine.low %v1023, %v1030
  %v1032 = vcombine.low %v959, %v960
  %v1033 = vcombine.low %v961, %v962
  %v1034 = vcombine.low %v963, %v964
  %v1035 = vcombine.low %v965, %v966
  %v1037 = vunpack.c.l.s4 1966171168
  %v1038 = vunpack.c.0.s8 %v1037
  %v1039 = vlaneseq
  %v1040 = vshrl.u32 %v1039, 7
  %v1041 = vsub.s32 %v1038, %v1040
  %v1042 = vrot.slane %v1032, %v1041
  %v1044 = vunpack.c.l.s4 1966171168
  %v1045 = vunpack.c.0.s8 %v1044
  %v1046 = vlaneseq
  %v1047 = vshrl.u32 %v1046, 7
  %v1048 = vsub.s32 %v1045, %v1047
  %v1049 = vrot.slane %v1033, %v1048
  %v1051 = vunpack.c.l.s4 1966171168
  %v1052 = vunpack.c.0.s8 %v1051
  %v1053 = vlaneseq
  %v1054 = vshrl.u32 %v1053, 7
  %v1055 = vsub.s32 %v1052, %v1054
  %v1056 = vrot.slane %v1034, %v1055
  %v1058 = vunpack.c.l.s4 1966171168
  %v1059 = vunpack.c.0.s8 %v1058
  %v1060 = vlaneseq
  %v1061 = vshrl.u32 %v1060, 7
  %v1062 = vsub.s32 %v1059, %v1061
  %v1063 = vrot.slane %v1035, %v1062
  %v1064 = vcombine.low %v1042, %v1049
  %v1065 = vcombine.low %v1056, %v1063
  %v1067 = vunpack.c.l.s4 1966171168
  %v1068 = vunpack.c.0.s8 %v1067
  %v1069 = vlaneseq
  %v1070 = vshrl.u32 %v1069, 7
  %v1071 = vsub.s32 %v1068, %v1070
  %v1072 = vrot.slane %v1064, %v1071
  %v1074 = vunpack.c.l.s4 1966171168
  %v1075 = vunpack.c.0.s8 %v1074
  %v1076 = vlaneseq
  %v1077 = vshrl.u32 %v1076, 7
  %v1078 = vsub.s32 %v1075, %v1077
  %v1079 = vrot.slane %v1065, %v1078
  %v1080 = vcombine.low %v1072, %v1079
  %1083 = vst [vmem:[%s4] sm:$0xff] %v1031
  %1084 = vst [vmem:[%s4 + $0x8] sm:$0xff] %v1080
  // Predicated region
  $region18: #{netG_forward.5} parent=0 // pred_check
    _
  $region19: #{netG_forward.5} parent=0 // pred_check_branch
    %1086 = sbr.rel (0) target = $region21
  $region20: #{netG_forward.5} parent=0 // pred_region
    _
  $region21: #{netG_forward.5} parent=0 // pred_fallthru
    _
  // Predicated region
  $region22: #{netG_forward.5} parent=0 // pred_check
    _
  $region23: #{netG_forward.5} parent=0 // pred_check_branch
    %1088 = sbr.rel (0) target = $region25
  $region24: #{netG_forward.5} parent=0 // pred_region
    _
  $region25: #{netG_forward.5} parent=0 // pred_fallthru
    _

// kernel: netG_forward.6
$region0: #{netG_forward.6}
  #allocation0 [shape = 'u32[]', space=smem, size = 0x4, offset = 0x4, fixed_abs, tag = 'smem constant byte address 0x4 - core index']
  #allocation1 [shape = 'u32[144,128]{1,0:T(1,128)}', space=vmem, size = 0x12000, scoped, tag = 'internal scratch']
  %s0 = inlined_call_operand.vmem [shape: bf16[4,64,512], index: 0, kind: input, shape index: {}]
  %s1 = inlined_call_operand.vmem [shape: bf16[4,512,32], index: 1, kind: input, shape index: {}]
  %s2 = inlined_call_operand.vmem [shape: f32[64,1], index: 2, kind: input, shape index: {}]
  %s3 = inlined_call_operand.vmem [shape: f32[64,1], index: 3, kind: input, shape index: {}]
  %s4 = inlined_call_operand.vmem [shape: bf16[4,64,32], index: 4, kind: output, shape index: {}]
  %s5 = sld [smem:[#allocation0]]
  $region49: #{netG_forward.6} parent=0
    _
  %s7 = ssub.s32 1, %s5
  %s8 = scalar_select 0, %s7, %s5
  loop: start=0, step=1, limit=6
  $region2: #{netG_forward.6} parent=0 // loop_pre_header
    _
  $region3: #{netG_forward.6} parent=0 // loop_header
    %s10 = sphi 0, %s14
    %p11 = scmp.ge.s32.totalorder %s10, 6
    %s17 = sphi 0, %s29
    %s18 = sphi 0, %s25
    %s19 = sphi 0, %s17
    %s20 = sphi 0, %s18
    %s21 = sphi 0, %s19
    %s22 = sphi 0, %s20
    %s32 = sphi 0, %s34
    %s35 = sphi 0, %s32
    %s36 = sphi 0, %s35
    %s52 = sphi 0, %s36
    %s60 = sphi 0, %s62
    %s63 = sphi 0, %s60
    %s64 = sphi 0, %s63
    %s80 = sphi 0, %s64
    %s84 = sphi 0, %s84
    %s86 = sphi 0, %s84
    %s87 = sphi 0, %s86
    %s101 = sphi 0, %s87
    %s105 = sphi 0, %s105
    %s107 = sphi 0, %s105
    %s108 = sphi 0, %s107
    %s122 = sphi 0, %s108
    %s130 = sphi 0, %s132
    %s133 = sphi 0, %s130
    %s134 = sphi 0, %s133
    %s150 = sphi 0, %s134
  $region4: #{netG_forward.6} parent=0 // loop_header_branch
    %13 = sbr.rel (%p11) target = $region8
  $region5: #{netG_forward.6} parent=0 // loop_body
    %s15 = ssub.s32 %s10, 1
    %s16 = ssub.s32 %s10, 2
    %s23 = sadd.s32 1, %s18
    %p24 = scmp.ge.s32.totalorder %s23, 1
    %s25 = scalar_select %p24, 0, %s23
    %s26 = sadd.s32 1, %s17
    %s27 = scalar_select %p24, %s26, %s17
    %p28 = scmp.ge.s32.totalorder %s27, 4
    %s29 = scalar_select %p28, 0, %s27
    %s30 = ssub.s32 %s17, %s29
    %p31 = scmp.eq.s32.totalorder %s30, 0
    %s33 = sadd.s32 %s32, 1
    %s34 = scalar_select %p31, %s32, %s33
    %p37 = pneg %p31
    %p38 = scmp.eq.s32.totalorder %s10, 3
    %p39 = por %p37, %p38
    %p40 = scmp.ne.s32.totalorder %s32, %s35
    %p41 = scmp.eq.s32.totalorder %s10, 0
    %p42 = por %p40, %p41
    %p43 = scmp.ne.s32.totalorder %s32, %s35
    %p44 = scmp.eq.s32.totalorder %s15, 3
    %p45 = por %p43, %p44
    %p46 = scmp.ne.s32.totalorder %s35, %s36
    %p47 = scmp.eq.s32.totalorder %s15, 0
    %p48 = por %p46, %p47
    %p49 = scmp.ne.s32.totalorder %s35, %s36
    %p50 = scmp.eq.s32.totalorder %s16, 3
    %p51 = por %p49, %p50
    %p53 = scmp.ne.s32.totalorder %s36, %s52
    %p54 = scmp.eq.s32.totalorder %s16, 0
    %p55 = por %p53, %p54
    %s56 = ssub.s32 %s17, %s29
    %s57 = ssub.s32 %s18, %s25
    %s58 = sor.u32 %s56, %s57
    %p59 = scmp.eq.s32.totalorder %s58, 0
    %s61 = sadd.s32 %s60, 1
    %s62 = scalar_select %p59, %s60, %s61
    %p65 = pneg %p59
    %p66 = scmp.eq.s32.totalorder %s10, 3
    %p67 = por %p65, %p66
    %p68 = scmp.ne.s32.totalorder %s60, %s63
    %p69 = scmp.eq.s32.totalorder %s10, 0
    %p70 = por %p68, %p69
    %p71 = scmp.ne.s32.totalorder %s60, %s63
    %p72 = scmp.eq.s32.totalorder %s15, 3
    %p73 = por %p71, %p72
    %p74 = scmp.ne.s32.totalorder %s63, %s64
    %p75 = scmp.eq.s32.totalorder %s15, 0
    %p76 = por %p74, %p75
    %p77 = scmp.ne.s32.totalorder %s63, %s64
    %p78 = scmp.eq.s32.totalorder %s16, 3
    %p79 = por %p77, %p78
    %p81 = scmp.ne.s32.totalorder %s64, %s80
    %p82 = scmp.eq.s32.totalorder %s16, 0
    %p83 = por %p81, %p82
    %s85 = sadd.s32 %s84, 1
    %p88 = scmp.eq.s32.totalorder %s10, 3
    %p89 = scmp.ne.s32.totalorder %s84, %s86
    %p90 = scmp.eq.s32.totalorder %s10, 0
    %p91 = por %p89, %p90
    %p92 = scmp.ne.s32.totalorder %s84, %s86
    %p93 = scmp.eq.s32.totalorder %s15, 3
    %p94 = por %p92, %p93
    %p95 = scmp.ne.s32.totalorder %s86, %s87
    %p96 = scmp.eq.s32.totalorder %s15, 0
    %p97 = por %p95, %p96
    %p98 = scmp.ne.s32.totalorder %s86, %s87
    %p99 = scmp.eq.s32.totalorder %s16, 3
    %p100 = por %p98, %p99
    %p102 = scmp.ne.s32.totalorder %s87, %s101
    %p103 = scmp.eq.s32.totalorder %s16, 0
    %p104 = por %p102, %p103
    %s106 = sadd.s32 %s105, 1
    %p109 = scmp.eq.s32.totalorder %s10, 3
    %p110 = scmp.ne.s32.totalorder %s105, %s107
    %p111 = scmp.eq.s32.totalorder %s10, 0
    %p112 = por %p110, %p111
    %p113 = scmp.ne.s32.totalorder %s105, %s107
    %p114 = scmp.eq.s32.totalorder %s15, 3
    %p115 = por %p113, %p114
    %p116 = scmp.ne.s32.totalorder %s107, %s108
    %p117 = scmp.eq.s32.totalorder %s15, 0
    %p118 = por %p116, %p117
    %p119 = scmp.ne.s32.totalorder %s107, %s108
    %p120 = scmp.eq.s32.totalorder %s16, 3
    %p121 = por %p119, %p120
    %p123 = scmp.ne.s32.totalorder %s108, %s122
    %p124 = scmp.eq.s32.totalorder %s16, 0
    %p125 = por %p123, %p124
    %s126 = ssub.s32 %s17, %s29
    %s127 = ssub.s32 %s18, %s25
    %s128 = sor.u32 %s126, %s127
    %p129 = scmp.eq.s32.totalorder %s128, 0
    %s131 = sadd.s32 %s130, 1
    %s132 = scalar_select %p129, %s130, %s131
    %p135 = pneg %p129
    %p136 = scmp.eq.s32.totalorder %s10, 3
    %p137 = por %p135, %p136
    %p138 = scmp.ne.s32.totalorder %s130, %s133
    %p139 = scmp.eq.s32.totalorder %s10, 0
    %p140 = por %p138, %p139
    %p141 = scmp.ne.s32.totalorder %s130, %s133
    %p142 = scmp.eq.s32.totalorder %s15, 3
    %p143 = por %p141, %p142
    %p144 = scmp.ne.s32.totalorder %s133, %s134
    %p145 = scmp.eq.s32.totalorder %s15, 0
    %p146 = por %p144, %p145
    %p147 = scmp.ne.s32.totalorder %s133, %s134
    %p148 = scmp.eq.s32.totalorder %s16, 3
    %p149 = por %p147, %p148
    %p151 = scmp.ne.s32.totalorder %s134, %s150
    %p152 = scmp.eq.s32.totalorder %s16, 0
    %p153 = por %p151, %p152
    %p154 = scmp.le.s32.totalorder 1, %s10
    %p155 = scmp.lt.s32.totalorder %s10, 5
    %p156 = pnand %p154, %p155
    %p157 = pneg %p156
    // Predicated region
    $region9: #{netG_forward.6} parent=5 // pred_check
      _
    $region10: #{netG_forward.6} parent=5 // pred_check_branch
      %159 = sbr.rel (%p156) target = $region12
    $region11: #{netG_forward.6} parent=5 // pred_region
      %s160 = ssub.s32 %s10, 1
      // Predicated region
      $region13: #{netG_forward.6} parent=11 // pred_check
        %p161 = pneg %p97
      $region14: #{netG_forward.6} parent=11 // pred_check_branch
        %163 = sbr.rel (%p161) target = $region16
      $region15: #{netG_forward.6} parent=11 // pred_region
        _
      $region16: #{netG_forward.6} parent=11 // pred_fallthru
        _
      // Predicated region
      $region17: #{netG_forward.6} parent=11 // pred_check
        %p164 = pneg %p118
      $region18: #{netG_forward.6} parent=11 // pred_check_branch
        %166 = sbr.rel (%p164) target = $region20
      $region19: #{netG_forward.6} parent=11 // pred_region
        _
      $region20: #{netG_forward.6} parent=11 // pred_fallthru
        _
    $region12: #{netG_forward.6} parent=5 // pred_fallthru
      _
    %p167 = scmp.lt.s32.totalorder %s10, 4
    // Predicated region
    $region21: #{netG_forward.6} parent=5 // pred_check
      %p168 = pneg %p167
    $region22: #{netG_forward.6} parent=5 // pred_check_branch
      %170 = sbr.rel (%p168) target = $region24
    $region23: #{netG_forward.6} parent=5 // pred_region
      // Predicated region
      $region25: #{netG_forward.6} parent=23 // pred_check
        %p171 = pneg %p42
      $region26: #{netG_forward.6} parent=23 // pred_check_branch
        %173 = sbr.rel (%p171) target = $region28
      $region27: #{netG_forward.6} parent=23 // pred_region
        %p174 = scmp.lt.s32.totalorder %s17, 3
        %s175 = scalar_select %p174, %s17, 3
        %s176 = smul.addr %s175, 32
        %s177 = smul.addr %s176, 4
        %s178 = scalar_lea.vmem %s0, %s177
      $region28: #{netG_forward.6} parent=23 // pred_fallthru
        _
      // Predicated region
      $region29: #{netG_forward.6} parent=23 // pred_check
        %p179 = pneg %p70
      $region30: #{netG_forward.6} parent=23 // pred_check_branch
        %181 = sbr.rel (%p179) target = $region32
      $region31: #{netG_forward.6} parent=23 // pred_region
        %p182 = scmp.lt.s32.totalorder %s17, 3
        %s183 = scalar_select %p182, %s17, 3
        %p184 = scmp.lt.s32.totalorder %s18, 0
        %s185 = scalar_select %p184, %s18, 0
        %s186 = smul.addr %s183, 64
        %s187 = sadd.s32 %s185, %s186
        %s188 = smul.addr %s187, 4
        %s189 = scalar_lea.vmem %s1, %s188
      $region32: #{netG_forward.6} parent=23 // pred_fallthru
        _
    $region24: #{netG_forward.6} parent=5 // pred_fallthru
      _
    %p190 = scmp.le.s32.totalorder 1, %s10
    %p191 = scmp.lt.s32.totalorder %s10, 5
    %p192 = pnand %p190, %p191
    %p193 = pneg %p192
    // Predicated region
    $region33: #{netG_forward.6} parent=5 // pred_check
      _
    $region34: #{netG_forward.6} parent=5 // pred_check_branch
      %195 = sbr.rel (%p192) target = $region36
    $region35: #{netG_forward.6} parent=5 // pred_region
      %s196 = ssub.s32 %s10, 1
      %p197 = scmp.lt.s32.totalorder %s19, 3
      %s198 = scalar_select %p197, %s19, 3
      %s199 = smul.addr %s198, 32
      %s200 = smul.addr %s199, 4
      %s201 = scalar_lea.vmem %s0, %s200
      %p202 = pneg %p48
      %p203 = pneg %p45
      %p204 = scmp.lt.s32.totalorder %s19, 3
      %s205 = scalar_select %p204, %s19, 3
      %p206 = scmp.lt.s32.totalorder %s20, 0
      %s207 = scalar_select %p206, %s20, 0
      %s208 = smul.addr %s205, 64
      %s209 = sadd.s32 %s207, %s208
      %s210 = smul.addr %s209, 4
      %s211 = scalar_lea.vmem %s1, %s210
      %p212 = pneg %p76
      %p213 = pneg %p73
      %p214 = pneg %p97
      %p215 = pneg %p94
      %p216 = pneg %p118
      %p217 = pneg %p115
      %p218 = pneg %p146
      %p219 = pneg %p143
      %p220 = scmp.lt.s32.totalorder %s19, 3
      %s221 = scalar_select %p220, %s19, 3
      %p222 = scmp.lt.s32.totalorder %s20, 0
      %s223 = scalar_select %p222, %s20, 0
      %s224 = smul.addr %s221, 8
      %s225 = sadd.s32 %s223, %s224
      %s226 = smul.addr %s225, 4
      %s227 = scalar_lea.vmem %s4, %s226
      %p228 = scmp.lt.s32.totalorder %s19, 3
      %s229 = scalar_select %p228, %s19, 3
      %s230 = smul.addr %s229, 32
      %s231 = smul.addr %s230, 4
      %s232 = scalar_lea.vmem %s0, %s231
      %p233 = scmp.lt.s32.totalorder %s19, 3
      %s234 = scalar_select %p233, %s19, 3
      %p235 = scmp.lt.s32.totalorder %s20, 0
      %s236 = scalar_select %p235, %s20, 0
      %s237 = smul.addr %s234, 64
      %s238 = sadd.s32 %s236, %s237
      %s239 = smul.addr %s238, 4
      %s240 = scalar_lea.vmem %s1, %s239
      %p241 = scmp.lt.s32.totalorder %s19, 3
      %s242 = scalar_select %p241, %s19, 3
      %p243 = scmp.lt.s32.totalorder %s20, 0
      %s244 = scalar_select %p243, %s20, 0
      %s245 = smul.addr %s242, 8
      %s246 = sadd.s32 %s244, %s245
      %s247 = smul.addr %s246, 4
      %s248 = scalar_lea.vmem %s4, %s247
      %v250 = vld [vmem:[%s232] sm:$0xff]
      %v251 = vld [vmem:[%s232 + $0x8] sm:$0xff]
      %v252 = vld [vmem:[%s232 + $0x10] sm:$0xff]
      %v253 = vld [vmem:[%s232 + $0x18] sm:$0xff]
      %v254 = vld [vmem:[%s232 + $0x20] sm:$0xff]
      %v255 = vld [vmem:[%s232 + $0x28] sm:$0xff]
      %v256 = vld [vmem:[%s232 + $0x30] sm:$0xff]
      %v257 = vld [vmem:[%s232 + $0x38] sm:$0xff]
      %v258 = vld [vmem:[%s232 + $0x40] sm:$0xff]
      %v259 = vld [vmem:[%s232 + $0x48] sm:$0xff]
      %v260 = vld [vmem:[%s232 + $0x50] sm:$0xff]
      %v261 = vld [vmem:[%s232 + $0x58] sm:$0xff]
      %v262 = vld [vmem:[%s232 + $0x60] sm:$0xff]
      %v263 = vld [vmem:[%s232 + $0x68] sm:$0xff]
      %v264 = vld [vmem:[%s232 + $0x70] sm:$0xff]
      %v265 = vld [vmem:[%s232 + $0x78] sm:$0xff]
      %v266 = vld [vmem:[%s240] sm:$0xf]
      %v267 = vld [vmem:[%s240 + $0x4] sm:$0xf]
      %v268 = vld [vmem:[%s240 + $0x8] sm:$0xf]
      %v269 = vld [vmem:[%s240 + $0xc] sm:$0xf]
      %v270 = vld [vmem:[%s240 + $0x10] sm:$0xf]
      %v271 = vld [vmem:[%s240 + $0x14] sm:$0xf]
      %v272 = vld [vmem:[%s240 + $0x18] sm:$0xf]
      %v273 = vld [vmem:[%s240 + $0x1c] sm:$0xf]
      %v274 = vld [vmem:[%s240 + $0x20] sm:$0xf]
      %v275 = vld [vmem:[%s240 + $0x24] sm:$0xf]
      %v276 = vld [vmem:[%s240 + $0x28] sm:$0xf]
      %v277 = vld [vmem:[%s240 + $0x2c] sm:$0xf]
      %v278 = vld [vmem:[%s240 + $0x30] sm:$0xf]
      %v279 = vld [vmem:[%s240 + $0x34] sm:$0xf]
      %v280 = vld [vmem:[%s240 + $0x38] sm:$0xf]
      %v281 = vld [vmem:[%s240 + $0x3c] sm:$0xf]
      %v282 = vld [vmem:[%s240 + $0x40] sm:$0xf]
      %v283 = vld [vmem:[%s240 + $0x44] sm:$0xf]
      %v284 = vld [vmem:[%s240 + $0x48] sm:$0xf]
      %v285 = vld [vmem:[%s240 + $0x4c] sm:$0xf]
      %v286 = vld [vmem:[%s240 + $0x50] sm:$0xf]
      %v287 = vld [vmem:[%s240 + $0x54] sm:$0xf]
      %v288 = vld [vmem:[%s240 + $0x58] sm:$0xf]
      %v289 = vld [vmem:[%s240 + $0x5c] sm:$0xf]
      %v290 = vld [vmem:[%s240 + $0x60] sm:$0xf]
      %v291 = vld [vmem:[%s240 + $0x64] sm:$0xf]
      %v292 = vld [vmem:[%s240 + $0x68] sm:$0xf]
      %v293 = vld [vmem:[%s240 + $0x6c] sm:$0xf]
      %v294 = vld [vmem:[%s240 + $0x70] sm:$0xf]
      %v295 = vld [vmem:[%s240 + $0x74] sm:$0xf]
      %v296 = vld [vmem:[%s240 + $0x78] sm:$0xf]
      %v297 = vld [vmem:[%s240 + $0x7c] sm:$0xf]
      %v298 = vld [vmem:[%s240 + $0x80] sm:$0xf]
      %v299 = vld [vmem:[%s240 + $0x84] sm:$0xf]
      %v300 = vld [vmem:[%s240 + $0x88] sm:$0xf]
      %v301 = vld [vmem:[%s240 + $0x8c] sm:$0xf]
      %v302 = vld [vmem:[%s240 + $0x90] sm:$0xf]
      %v303 = vld [vmem:[%s240 + $0x94] sm:$0xf]
      %v304 = vld [vmem:[%s240 + $0x98] sm:$0xf]
      %v305 = vld [vmem:[%s240 + $0x9c] sm:$0xf]
      %v306 = vld [vmem:[%s240 + $0xa0] sm:$0xf]
      %v307 = vld [vmem:[%s240 + $0xa4] sm:$0xf]
      %v308 = vld [vmem:[%s240 + $0xa8] sm:$0xf]
      %v309 = vld [vmem:[%s240 + $0xac] sm:$0xf]
      %v310 = vld [vmem:[%s240 + $0xb0] sm:$0xf]
      %v311 = vld [vmem:[%s240 + $0xb4] sm:$0xf]
      %v312 = vld [vmem:[%s240 + $0xb8] sm:$0xf]
      %v313 = vld [vmem:[%s240 + $0xbc] sm:$0xf]
      %v314 = vld [vmem:[%s240 + $0xc0] sm:$0xf]
      %v315 = vld [vmem:[%s240 + $0xc4] sm:$0xf]
      %v316 = vld [vmem:[%s240 + $0xc8] sm:$0xf]
      %v317 = vld [vmem:[%s240 + $0xcc] sm:$0xf]
      %v318 = vld [vmem:[%s240 + $0xd0] sm:$0xf]
      %v319 = vld [vmem:[%s240 + $0xd4] sm:$0xf]
      %v320 = vld [vmem:[%s240 + $0xd8] sm:$0xf]
      %v321 = vld [vmem:[%s240 + $0xdc] sm:$0xf]
      %v322 = vld [vmem:[%s240 + $0xe0] sm:$0xf]
      %v323 = vld [vmem:[%s240 + $0xe4] sm:$0xf]
      %v324 = vld [vmem:[%s240 + $0xe8] sm:$0xf]
      %v325 = vld [vmem:[%s240 + $0xec] sm:$0xf]
      %v326 = vld [vmem:[%s240 + $0xf0] sm:$0xf]
      %v327 = vld [vmem:[%s240 + $0xf4] sm:$0xf]
      %v328 = vld [vmem:[%s240 + $0xf8] sm:$0xf]
      %v329 = vld [vmem:[%s240 + $0xfc] sm:$0xf]
      %v346 = vunpack.c.l.b16 %v250
      %v347 = vunpack.c.h.b16 %v250
      %v348 = vunpack.c.l.b16 %v251
      %v349 = vunpack.c.h.b16 %v251
      %v350 = vunpack.c.l.b16 %v252
      %v351 = vunpack.c.h.b16 %v252
      %v352 = vunpack.c.l.b16 %v253
      %v353 = vunpack.c.h.b16 %v253
      %v354 = vunpack.c.l.b16 %v254
      %v355 = vunpack.c.h.b16 %v254
      %v356 = vunpack.c.l.b16 %v255
      %v357 = vunpack.c.h.b16 %v255
      %v358 = vunpack.c.l.b16 %v256
      %v359 = vunpack.c.h.b16 %v256
      %v360 = vunpack.c.l.b16 %v257
      %v361 = vunpack.c.h.b16 %v257
      %v362 = vunpack.c.l.b16 %v258
      %v363 = vunpack.c.h.b16 %v258
      %v364 = vunpack.c.l.b16 %v259
      %v365 = vunpack.c.h.b16 %v259
      %v366 = vunpack.c.l.b16 %v260
      %v367 = vunpack.c.h.b16 %v260
      %v368 = vunpack.c.l.b16 %v261
      %v369 = vunpack.c.h.b16 %v261
      %v370 = vunpack.c.l.b16 %v262
      %v371 = vunpack.c.h.b16 %v262
      %v372 = vunpack.c.l.b16 %v263
      %v373 = vunpack.c.h.b16 %v263
      %v374 = vunpack.c.l.b16 %v264
      %v375 = vunpack.c.h.b16 %v264
      %v376 = vunpack.c.l.b16 %v265
      %v377 = vunpack.c.h.b16 %v265
      %v378 = vpack.c.b16 %v350, %v346
      %v379 = vpack.c.b16 %v351, %v347
      %v380 = vpack.c.b16 %v352, %v348
      %v381 = vpack.c.b16 %v353, %v349
      %v382 = vpack.c.b16 %v358, %v354
      %v383 = vpack.c.b16 %v359, %v355
      %v384 = vpack.c.b16 %v360, %v356
      %v385 = vpack.c.b16 %v361, %v357
      %v386 = vpack.c.b16 %v366, %v362
      %v387 = vpack.c.b16 %v367, %v363
      %v388 = vpack.c.b16 %v368, %v364
      %v389 = vpack.c.b16 %v369, %v365
      %v390 = vpack.c.b16 %v374, %v370
      %v391 = vpack.c.b16 %v375, %v371
      %v392 = vpack.c.b16 %v376, %v372
      %v393 = vpack.c.b16 %v377, %v373
      %v474 = vunpack.c.l.b16 %v266
      %v475 = vunpack.c.l.b16 %v267
      %v476 = vunpack.c.l.b16 %v268
      %v477 = vunpack.c.l.b16 %v269
      %v478 = vunpack.c.l.b16 %v270
      %v479 = vunpack.c.l.b16 %v271
      %v480 = vunpack.c.l.b16 %v272
      %v481 = vunpack.c.l.b16 %v273
      %v482 = vunpack.c.l.b16 %v274
      %v483 = vunpack.c.l.b16 %v275
      %v484 = vunpack.c.l.b16 %v276
      %v485 = vunpack.c.l.b16 %v277
      %v486 = vunpack.c.l.b16 %v278
      %v487 = vunpack.c.l.b16 %v279
      %v488 = vunpack.c.l.b16 %v280
      %v489 = vunpack.c.l.b16 %v281
      %v490 = vunpack.c.l.b16 %v282
      %v491 = vunpack.c.l.b16 %v283
      %v492 = vunpack.c.l.b16 %v284
      %v493 = vunpack.c.l.b16 %v285
      %v494 = vunpack.c.l.b16 %v286
      %v495 = vunpack.c.l.b16 %v287
      %v496 = vunpack.c.l.b16 %v288
      %v497 = vunpack.c.l.b16 %v289
      %v498 = vunpack.c.l.b16 %v290
      %v499 = vunpack.c.l.b16 %v291
      %v500 = vunpack.c.l.b16 %v292
      %v501 = vunpack.c.l.b16 %v293
      %v502 = vunpack.c.l.b16 %v294
      %v503 = vunpack.c.l.b16 %v295
      %v504 = vunpack.c.l.b16 %v296
      %v505 = vunpack.c.l.b16 %v297
      %v506 = vunpack.c.l.b16 %v298
      %v507 = vunpack.c.l.b16 %v299
      %v508 = vunpack.c.l.b16 %v300
      %v509 = vunpack.c.l.b16 %v301
      %v510 = vunpack.c.l.b16 %v302
      %v511 = vunpack.c.l.b16 %v303
      %v512 = vunpack.c.l.b16 %v304
      %v513 = vunpack.c.l.b16 %v305
      %v514 = vunpack.c.l.b16 %v306
      %v515 = vunpack.c.l.b16 %v307
      %v516 = vunpack.c.l.b16 %v308
      %v517 = vunpack.c.l.b16 %v309
      %v518 = vunpack.c.l.b16 %v310
      %v519 = vunpack.c.l.b16 %v311
      %v520 = vunpack.c.l.b16 %v312
      %v521 = vunpack.c.l.b16 %v313
      %v522 = vunpack.c.l.b16 %v314
      %v523 = vunpack.c.l.b16 %v315
      %v524 = vunpack.c.l.b16 %v316
      %v525 = vunpack.c.l.b16 %v317
      %v526 = vunpack.c.l.b16 %v318
      %v527 = vunpack.c.l.b16 %v319
      %v528 = vunpack.c.l.b16 %v320
      %v529 = vunpack.c.l.b16 %v321
      %v530 = vunpack.c.l.b16 %v322
      %v531 = vunpack.c.l.b16 %v323
      %v532 = vunpack.c.l.b16 %v324
      %v533 = vunpack.c.l.b16 %v325
      %v534 = vunpack.c.l.b16 %v326
      %v535 = vunpack.c.l.b16 %v327
      %v536 = vunpack.c.l.b16 %v328
      %v537 = vunpack.c.l.b16 %v329
      %v538 = vpack.c.b16 %v475, %v474
      %v539 = vpack.c.b16 %v477, %v476
      %v540 = vpack.c.b16 %v479, %v478
      %v541 = vpack.c.b16 %v481, %v480
      %v542 = vpack.c.b16 %v483, %v482
      %v543 = vpack.c.b16 %v485, %v484
      %v544 = vpack.c.b16 %v487, %v486
      %v545 = vpack.c.b16 %v489, %v488
      %v546 = vpack.c.b16 %v491, %v490
      %v547 = vpack.c.b16 %v493, %v492
      %v548 = vpack.c.b16 %v495, %v494
      %v549 = vpack.c.b16 %v497, %v496
      %v550 = vpack.c.b16 %v499, %v498
      %v551 = vpack.c.b16 %v501, %v500
      %v552 = vpack.c.b16 %v503, %v502
      %v553 = vpack.c.b16 %v505, %v504
      %v554 = vpack.c.b16 %v507, %v506
      %v555 = vpack.c.b16 %v509, %v508
      %v556 = vpack.c.b16 %v511, %v510
      %v557 = vpack.c.b16 %v513, %v512
      %v558 = vpack.c.b16 %v515, %v514
      %v559 = vpack.c.b16 %v517, %v516
      %v560 = vpack.c.b16 %v519, %v518
      %v561 = vpack.c.b16 %v521, %v520
      %v562 = vpack.c.b16 %v523, %v522
      %v563 = vpack.c.b16 %v525, %v524
      %v564 = vpack.c.b16 %v527, %v526
      %v565 = vpack.c.b16 %v529, %v528
      %v566 = vpack.c.b16 %v531, %v530
      %v567 = vpack.c.b16 %v533, %v532
      %v568 = vpack.c.b16 %v535, %v534
      %v569 = vpack.c.b16 %v537, %v536
      %602 = vmatprep.subr.bf16.mxu0 0
      %603 = vmatpush1.bf16.msra.mxu0 %v545
      %604 = vmatprep.subr.bf16.mxu0 0
      %605 = vmatpush1.bf16.msra.mxu0 %v544
      %606 = vmatprep.subr.bf16.mxu0 0
      %607 = vmatpush1.bf16.msra.mxu0 %v543
      %608 = vmatprep.subr.bf16.mxu0 0
      %609 = vmatpush1.bf16.msra.mxu0 %v542
      %610 = vmatprep.subr.bf16.mxu0 0
      %611 = vmatpush1.bf16.msra.mxu0 %v541
      %612 = vmatprep.subr.bf16.mxu0 0
      %613 = vmatpush1.bf16.msra.mxu0 %v540
      %614 = vmatprep.subr.bf16.mxu0 0
      %615 = vmatpush1.bf16.msra.mxu0 %v539
      %616 = vmatprep.subr.bf16.mxu0 0
      %617 = vmatpush1.bf16.msra.mxu0 %v538
      %618 = vmatprep.subr.bf16.mxu0 0
      %619 = vmatpush2.bf16.msra.mxu0 %v553
      %620 = vmatprep.subr.bf16.mxu0 0
      %621 = vmatpush2.bf16.msra.mxu0 %v552
      %622 = vmatprep.subr.bf16.mxu0 0
      %623 = vmatpush2.bf16.msra.mxu0 %v551
      %624 = vmatprep.subr.bf16.mxu0 0
      %625 = vmatpush2.bf16.msra.mxu0 %v550
      %626 = vmatprep.subr.bf16.mxu0 0
      %627 = vmatpush2.bf16.msra.mxu0 %v549
      %628 = vmatprep.subr.bf16.mxu0 0
      %629 = vmatpush2.bf16.msra.mxu0 %v548
      %630 = vmatprep.subr.bf16.mxu0 0
      %631 = vmatpush2.bf16.msra.mxu0 %v547
      %632 = vmatprep.subr.bf16.mxu0 0
      %633 = vmatpush2.bf16.msra.mxu0 %v546
      %634 = vmatprep.mubr.bf16.mxu0 %v379
      %635 = vmatmul.mubr.bf16.gmra.mxu0 %v378
      %v636 = vpop.f32.mrf.mxu0
      %v637 = vadd.f32 0.0, %v636
      %v638 = vpop.f32.mrf.mxu0
      %v639 = vpop.f32.mrf.mxu0
      %v640 = vadd.f32 0.0, %v639
      %v641 = vpop.f32.mrf.mxu0
      %642 = vmatprep.mubr.bf16.mxu0 %v383
      %643 = vmatmul.mubr.bf16.gmra.mxu0 %v382
      %v644 = vpop.f32.mrf.mxu0
      %v645 = vadd.f32 0.0, %v644
      %v646 = vpop.f32.mrf.mxu0
      %v647 = vpop.f32.mrf.mxu0
      %v648 = vadd.f32 0.0, %v647
      %v649 = vpop.f32.mrf.mxu0
      %650 = vmatprep.mubr.bf16.mxu0 %v387
      %651 = vmatmul.mubr.bf16.gmra.mxu0 %v386
      %v652 = vpop.f32.mrf.mxu0
      %v653 = vadd.f32 0.0, %v652
      %v654 = vpop.f32.mrf.mxu0
      %v655 = vpop.f32.mrf.mxu0
      %v656 = vadd.f32 0.0, %v655
      %v657 = vpop.f32.mrf.mxu0
      %658 = vmatprep.mubr.bf16.mxu0 %v391
      %659 = vmatmul.mubr.bf16.gmra.mxu0 %v390
      %v660 = vpop.f32.mrf.mxu0
      %v661 = vadd.f32 0.0, %v660
      %v662 = vpop.f32.mrf.mxu0
      %v663 = vpop.f32.mrf.mxu0
      %v664 = vadd.f32 0.0, %v663
      %v665 = vpop.f32.mrf.mxu0
      %666 = vdwg.mxu0
      %667 = vmatprep.subr.bf16.mxu0 0
      %668 = vmatpush1.bf16.msra.mxu0 %v561
      %669 = vmatprep.subr.bf16.mxu0 0
      %670 = vmatpush1.bf16.msra.mxu0 %v560
      %671 = vmatprep.subr.bf16.mxu0 0
      %672 = vmatpush1.bf16.msra.mxu0 %v559
      %673 = vmatprep.subr.bf16.mxu0 0
      %674 = vmatpush1.bf16.msra.mxu0 %v558
      %675 = vmatprep.subr.bf16.mxu0 0
      %676 = vmatpush1.bf16.msra.mxu0 %v557
      %677 = vmatprep.subr.bf16.mxu0 0
      %678 = vmatpush1.bf16.msra.mxu0 %v556
      %679 = vmatprep.subr.bf16.mxu0 0
      %680 = vmatpush1.bf16.msra.mxu0 %v555
      %681 = vmatprep.subr.bf16.mxu0 0
      %682 = vmatpush1.bf16.msra.mxu0 %v554
      %683 = vmatprep.subr.bf16.mxu0 0
      %684 = vmatpush2.bf16.msra.mxu0 %v569
      %685 = vmatprep.subr.bf16.mxu0 0
      %686 = vmatpush2.bf16.msra.mxu0 %v568
      %687 = vmatprep.subr.bf16.mxu0 0
      %688 = vmatpush2.bf16.msra.mxu0 %v567
      %689 = vmatprep.subr.bf16.mxu0 0
      %690 = vmatpush2.bf16.msra.mxu0 %v566
      %691 = vmatprep.subr.bf16.mxu0 0
      %692 = vmatpush2.bf16.msra.mxu0 %v565
      %693 = vmatprep.subr.bf16.mxu0 0
      %694 = vmatpush2.bf16.msra.mxu0 %v564
      %695 = vmatprep.subr.bf16.mxu0 0
      %696 = vmatpush2.bf16.msra.mxu0 %v563
      %697 = vmatprep.subr.bf16.mxu0 0
      %698 = vmatpush2.bf16.msra.mxu0 %v562
      %699 = vmatprep.mubr.bf16.mxu0 %v381
      %700 = vmatmul.mubr.bf16.gmra.mxu0 %v380
      %v701 = vpop.f32.mrf.mxu0
      %v702 = vadd.f32 %v637, %v701
      %v703 = vpop.f32.mrf.mxu0
      %v704 = vpop.f32.mrf.mxu0
      %v705 = vadd.f32 %v640, %v704
      %v706 = vpop.f32.mrf.mxu0
      %707 = vmatprep.mubr.bf16.mxu0 %v385
      %708 = vmatmul.mubr.bf16.gmra.mxu0 %v384
      %v709 = vpop.f32.mrf.mxu0
      %v710 = vadd.f32 %v645, %v709
      %v711 = vpop.f32.mrf.mxu0
      %v712 = vpop.f32.mrf.mxu0
      %v713 = vadd.f32 %v648, %v712
      %v714 = vpop.f32.mrf.mxu0
      %715 = vmatprep.mubr.bf16.mxu0 %v389
      %716 = vmatmul.mubr.bf16.gmra.mxu0 %v388
      %v717 = vpop.f32.mrf.mxu0
      %v718 = vadd.f32 %v653, %v717
      %v719 = vpop.f32.mrf.mxu0
      %v720 = vpop.f32.mrf.mxu0
      %v721 = vadd.f32 %v656, %v720
      %v722 = vpop.f32.mrf.mxu0
      %723 = vmatprep.mubr.bf16.mxu0 %v393
      %724 = vmatmul.mubr.bf16.gmra.mxu0 %v392
      %v725 = vpop.f32.mrf.mxu0
      %v726 = vadd.f32 %v661, %v725
      %v727 = vpop.f32.mrf.mxu0
      %v728 = vpop.f32.mrf.mxu0
      %v729 = vadd.f32 %v664, %v728
      %v730 = vpop.f32.mrf.mxu0
      %731 = vdwg.mxu0
      %v732 = vld [vmem:[%s2] sm:$0xff]
      %v733 = vld [vmem:[%s2 + $0x8] sm:$0xff]
      %v734 = vld [vmem:[%s2 + $0x10] sm:$0xff]
      %v735 = vld [vmem:[%s2 + $0x18] sm:$0xff]
      %v736 = vld [vmem:[%s2 + $0x20] sm:$0xff]
      %v737 = vld [vmem:[%s2 + $0x28] sm:$0xff]
      %v738 = vld [vmem:[%s2 + $0x30] sm:$0xff]
      %v739 = vld [vmem:[%s2 + $0x38] sm:$0xff]
      %741 = vset.pattern.permute.xlu0 0
      %742 = vperm.xlu0 %741, %v732
      %v743 = vpop.permute.xlu0 %742
      %746 = vset.pattern.permute.xlu0 0
      %747 = vperm.xlu0 %746, %v733
      %v748 = vpop.permute.xlu0 %747
      %751 = vset.pattern.permute.xlu0 0
      %752 = vperm.xlu0 %751, %v734
      %v753 = vpop.permute.xlu0 %752
      %756 = vset.pattern.permute.xlu0 0
      %757 = vperm.xlu0 %756, %v735
      %v758 = vpop.permute.xlu0 %757
      %761 = vset.pattern.permute.xlu0 0
      %762 = vperm.xlu0 %761, %v736
      %v763 = vpop.permute.xlu0 %762
      %766 = vset.pattern.permute.xlu0 0
      %767 = vperm.xlu0 %766, %v737
      %v768 = vpop.permute.xlu0 %767
      %771 = vset.pattern.permute.xlu0 0
      %772 = vperm.xlu0 %771, %v738
      %v773 = vpop.permute.xlu0 %772
      %776 = vset.pattern.permute.xlu0 0
      %777 = vperm.xlu0 %776, %v739
      %v778 = vpop.permute.xlu0 %777
      %v780 = vmul.f32 %v702, %v743
      %v781 = vmul.f32 %v705, %v748
      %v782 = vmul.f32 %v710, %v753
      %v783 = vmul.f32 %v713, %v758
      %v784 = vmul.f32 %v718, %v763
      %v785 = vmul.f32 %v721, %v768
      %v786 = vmul.f32 %v726, %v773
      %v787 = vmul.f32 %v729, %v778
      %v788 = vld [vmem:[%s3] sm:$0xff]
      %v789 = vld [vmem:[%s3 + $0x8] sm:$0xff]
      %v790 = vld [vmem:[%s3 + $0x10] sm:$0xff]
      %v791 = vld [vmem:[%s3 + $0x18] sm:$0xff]
      %v792 = vld [vmem:[%s3 + $0x20] sm:$0xff]
      %v793 = vld [vmem:[%s3 + $0x28] sm:$0xff]
      %v794 = vld [vmem:[%s3 + $0x30] sm:$0xff]
      %v795 = vld [vmem:[%s3 + $0x38] sm:$0xff]
      %797 = vset.pattern.permute.xlu0 0
      %798 = vperm.xlu0 %797, %v788
      %v799 = vpop.permute.xlu0 %798
      %802 = vset.pattern.permute.xlu0 0
      %803 = vperm.xlu0 %802, %v789
      %v804 = vpop.permute.xlu0 %803
      %807 = vset.pattern.permute.xlu0 0
      %808 = vperm.xlu0 %807, %v790
      %v809 = vpop.permute.xlu0 %808
      %812 = vset.pattern.permute.xlu0 0
      %813 = vperm.xlu0 %812, %v791
      %v814 = vpop.permute.xlu0 %813
      %817 = vset.pattern.permute.xlu0 0
      %818 = vperm.xlu0 %817, %v792
      %v819 = vpop.permute.xlu0 %818
      %822 = vset.pattern.permute.xlu0 0
      %823 = vperm.xlu0 %822, %v793
      %v824 = vpop.permute.xlu0 %823
      %827 = vset.pattern.permute.xlu0 0
      %828 = vperm.xlu0 %827, %v794
      %v829 = vpop.permute.xlu0 %828
      %832 = vset.pattern.permute.xlu0 0
      %833 = vperm.xlu0 %832, %v795
      %v834 = vpop.permute.xlu0 %833
      %v836 = vadd.f32 %v780, %v799
      %v837 = vadd.f32 %v781, %v804
      %v838 = vadd.f32 %v782, %v809
      %v839 = vadd.f32 %v783, %v814
      %v840 = vadd.f32 %v784, %v819
      %v841 = vadd.f32 %v785, %v824
      %v842 = vadd.f32 %v786, %v829
      %v843 = vadd.f32 %v787, %v834
      %v844 = vmax.f32 %v836, 0.0
      %v845 = vmax.f32 %v837, 0.0
      %v846 = vmax.f32 %v838, 0.0
      %v847 = vmax.f32 %v839, 0.0
      %v848 = vmax.f32 %v840, 0.0
      %v849 = vmax.f32 %v841, 0.0
      %v850 = vmax.f32 %v842, 0.0
      %v851 = vmax.f32 %v843, 0.0
      %v852 = vpack.c.bf16 %v845, %v844
      %v853 = vpack.c.bf16 %v847, %v846
      %v854 = vpack.c.bf16 %v849, %v848
      %v855 = vpack.c.bf16 %v851, %v850
      %v860 = vunpack.c.l.b16 %v852
      %v861 = vunpack.c.h.b16 %v852
      %v862 = vunpack.c.l.b16 %v853
      %v863 = vunpack.c.h.b16 %v853
      %v864 = vunpack.c.l.b16 %v854
      %v865 = vunpack.c.h.b16 %v854
      %v866 = vunpack.c.l.b16 %v855
      %v867 = vunpack.c.h.b16 %v855
      %v868 = vpack.c.b16 %v860, %v860
      %v869 = vpack.c.b16 %v861, %v861
      %v870 = vpack.c.b16 %v862, %v862
      %v871 = vpack.c.b16 %v863, %v863
      %v872 = vpack.c.b16 %v864, %v864
      %v873 = vpack.c.b16 %v865, %v865
      %v874 = vpack.c.b16 %v866, %v866
      %v875 = vpack.c.b16 %v867, %v867
      %vm884 = vcmask 257024
      %885 = vst.msk [vmem:[%s248] sm:$0xf] %vm884, %v868
      %886 = vst.msk [vmem:[%s248 + $0x4] sm:$0xf] %vm884, %v869
      %887 = vst.msk [vmem:[%s248 + $0x8] sm:$0xf] %vm884, %v870
      %888 = vst.msk [vmem:[%s248 + $0xc] sm:$0xf] %vm884, %v871
      %889 = vst.msk [vmem:[%s248 + $0x10] sm:$0xf] %vm884, %v872
      %890 = vst.msk [vmem:[%s248 + $0x14] sm:$0xf] %vm884, %v873
      %891 = vst.msk [vmem:[%s248 + $0x18] sm:$0xf] %vm884, %v874
      %892 = vst.msk [vmem:[%s248 + $0x1c] sm:$0xf] %vm884, %v875
      %p893 = scmp.lt.s32.totalorder %s19, 3
      %s894 = scalar_select %p893, %s19, 3
      %p895 = scmp.lt.s32.totalorder %s20, 0
      %s896 = scalar_select %p895, %s20, 0
      %s897 = smul.addr %s894, 8
      %s898 = sadd.s32 %s896, %s897
      %s899 = smul.addr %s898, 4
      %s900 = scalar_lea.vmem %s4, %s899
      // Predicated region
      $region37: #{netG_forward.6} parent=35 // pred_check
        %p901 = pneg %p143
      $region38: #{netG_forward.6} parent=35 // pred_check_branch
        %903 = sbr.rel (%p901) target = $region40
      $region39: #{netG_forward.6} parent=35 // pred_region
        _
      $region40: #{netG_forward.6} parent=35 // pred_fallthru
        _
    $region36: #{netG_forward.6} parent=5 // pred_fallthru
      _
    %p904 = scmp.le.s32.totalorder 2, %s10
    // Predicated region
    $region41: #{netG_forward.6} parent=5 // pred_check
      %p905 = pneg %p904
    $region42: #{netG_forward.6} parent=5 // pred_check_branch
      %907 = sbr.rel (%p905) target = $region44
    $region43: #{netG_forward.6} parent=5 // pred_region
      %s908 = ssub.s32 %s10, 2
      // Predicated region
      $region45: #{netG_forward.6} parent=43 // pred_check
        %p909 = pneg %p149
      $region46: #{netG_forward.6} parent=43 // pred_check_branch
        %911 = sbr.rel (%p909) target = $region48
      $region47: #{netG_forward.6} parent=43 // pred_region
        %p912 = scmp.lt.s32.totalorder %s21, 3
        %s913 = scalar_select %p912, %s21, 3
        %p914 = scmp.lt.s32.totalorder %s22, 0
        %s915 = scalar_select %p914, %s22, 0
        %s916 = smul.addr %s913, 8
        %s917 = sadd.s32 %s915, %s916
        %s918 = smul.addr %s917, 4
        %s919 = scalar_lea.vmem %s4, %s918
      $region48: #{netG_forward.6} parent=43 // pred_fallthru
        _
    $region44: #{netG_forward.6} parent=5 // pred_fallthru
      _
  $region6: #{netG_forward.6} parent=0 // loop_footer
    %s14 = sadd.s32 1, %s10
  $region7: #{netG_forward.6} parent=0 // loop_footer_branch
    %9 = sbr.rel target = $region3
  $region8: #{netG_forward.6} parent=0 // loop_exit
    _

// kernel: netG_forward.7
$region0: #{netG_forward.7}
  #allocation0 [shape = 'u32[]', space=smem, size = 0x4, offset = 0x4, fixed_abs, tag = 'smem constant byte address 0x4 - core index']
  #allocation1 [shape = 'u32[144,128]{1,0:T(1,128)}', space=vmem, size = 0x12000, scoped, tag = 'internal scratch']
  %s0 = inlined_call_operand.vmem [shape: bf16[4,32,256], index: 0, kind: input, shape index: {}]
  %s1 = inlined_call_operand.vmem [shape: bf16[4,256,128], index: 1, kind: input, shape index: {}]
  %s2 = inlined_call_operand.vmem [shape: f32[32,1], index: 2, kind: input, shape index: {}]
  %s3 = inlined_call_operand.vmem [shape: f32[32,1], index: 3, kind: input, shape index: {}]
  %s4 = inlined_call_operand.vmem [shape: bf16[4,32,128], index: 4, kind: output, shape index: {}]
  %s5 = sld [smem:[#allocation0]]
  $region49: #{netG_forward.7} parent=0
    _
  %s7 = ssub.s32 1, %s5
  %s8 = scalar_select 0, %s7, %s5
  loop: start=0, step=1, limit=6
  $region2: #{netG_forward.7} parent=0 // loop_pre_header
    _
  $region3: #{netG_forward.7} parent=0 // loop_header
    %s10 = sphi 0, %s14
    %p11 = scmp.ge.s32.totalorder %s10, 6
    %s17 = sphi 0, %s29
    %s18 = sphi 0, %s25
    %s19 = sphi 0, %s17
    %s20 = sphi 0, %s18
    %s21 = sphi 0, %s19
    %s22 = sphi 0, %s20
    %s32 = sphi 0, %s34
    %s35 = sphi 0, %s32
    %s36 = sphi 0, %s35
    %s52 = sphi 0, %s36
    %s60 = sphi 0, %s62
    %s63 = sphi 0, %s60
    %s64 = sphi 0, %s63
    %s80 = sphi 0, %s64
    %s84 = sphi 0, %s84
    %s86 = sphi 0, %s84
    %s87 = sphi 0, %s86
    %s101 = sphi 0, %s87
    %s105 = sphi 0, %s105
    %s107 = sphi 0, %s105
    %s108 = sphi 0, %s107
    %s122 = sphi 0, %s108
    %s130 = sphi 0, %s132
    %s133 = sphi 0, %s130
    %s134 = sphi 0, %s133
    %s150 = sphi 0, %s134
  $region4: #{netG_forward.7} parent=0 // loop_header_branch
    %13 = sbr.rel (%p11) target = $region8
  $region5: #{netG_forward.7} parent=0 // loop_body
    %s15 = ssub.s32 %s10, 1
    %s16 = ssub.s32 %s10, 2
    %s23 = sadd.s32 1, %s18
    %p24 = scmp.ge.s32.totalorder %s23, 1
    %s25 = scalar_select %p24, 0, %s23
    %s26 = sadd.s32 1, %s17
    %s27 = scalar_select %p24, %s26, %s17
    %p28 = scmp.ge.s32.totalorder %s27, 4
    %s29 = scalar_select %p28, 0, %s27
    %s30 = ssub.s32 %s17, %s29
    %p31 = scmp.eq.s32.totalorder %s30, 0
    %s33 = sadd.s32 %s32, 1
    %s34 = scalar_select %p31, %s32, %s33
    %p37 = pneg %p31
    %p38 = scmp.eq.s32.totalorder %s10, 3
    %p39 = por %p37, %p38
    %p40 = scmp.ne.s32.totalorder %s32, %s35
    %p41 = scmp.eq.s32.totalorder %s10, 0
    %p42 = por %p40, %p41
    %p43 = scmp.ne.s32.totalorder %s32, %s35
    %p44 = scmp.eq.s32.totalorder %s15, 3
    %p45 = por %p43, %p44
    %p46 = scmp.ne.s32.totalorder %s35, %s36
    %p47 = scmp.eq.s32.totalorder %s15, 0
    %p48 = por %p46, %p47
    %p49 = scmp.ne.s32.totalorder %s35, %s36
    %p50 = scmp.eq.s32.totalorder %s16, 3
    %p51 = por %p49, %p50
    %p53 = scmp.ne.s32.totalorder %s36, %s52
    %p54 = scmp.eq.s32.totalorder %s16, 0
    %p55 = por %p53, %p54
    %s56 = ssub.s32 %s17, %s29
    %s57 = ssub.s32 %s18, %s25
    %s58 = sor.u32 %s56, %s57
    %p59 = scmp.eq.s32.totalorder %s58, 0
    %s61 = sadd.s32 %s60, 1
    %s62 = scalar_select %p59, %s60, %s61
    %p65 = pneg %p59
    %p66 = scmp.eq.s32.totalorder %s10, 3
    %p67 = por %p65, %p66
    %p68 = scmp.ne.s32.totalorder %s60, %s63
    %p69 = scmp.eq.s32.totalorder %s10, 0
    %p70 = por %p68, %p69
    %p71 = scmp.ne.s32.totalorder %s60, %s63
    %p72 = scmp.eq.s32.totalorder %s15, 3
    %p73 = por %p71, %p72
    %p74 = scmp.ne.s32.totalorder %s63, %s64
    %p75 = scmp.eq.s32.totalorder %s15, 0
    %p76 = por %p74, %p75
    %p77 = scmp.ne.s32.totalorder %s63, %s64
    %p78 = scmp.eq.s32.totalorder %s16, 3
    %p79 = por %p77, %p78
    %p81 = scmp.ne.s32.totalorder %s64, %s80
    %p82 = scmp.eq.s32.totalorder %s16, 0
    %p83 = por %p81, %p82
    %s85 = sadd.s32 %s84, 1
    %p88 = scmp.eq.s32.totalorder %s10, 3
    %p89 = scmp.ne.s32.totalorder %s84, %s86
    %p90 = scmp.eq.s32.totalorder %s10, 0
    %p91 = por %p89, %p90
    %p92 = scmp.ne.s32.totalorder %s84, %s86
    %p93 = scmp.eq.s32.totalorder %s15, 3
    %p94 = por %p92, %p93
    %p95 = scmp.ne.s32.totalorder %s86, %s87
    %p96 = scmp.eq.s32.totalorder %s15, 0
    %p97 = por %p95, %p96
    %p98 = scmp.ne.s32.totalorder %s86, %s87
    %p99 = scmp.eq.s32.totalorder %s16, 3
    %p100 = por %p98, %p99
    %p102 = scmp.ne.s32.totalorder %s87, %s101
    %p103 = scmp.eq.s32.totalorder %s16, 0
    %p104 = por %p102, %p103
    %s106 = sadd.s32 %s105, 1
    %p109 = scmp.eq.s32.totalorder %s10, 3
    %p110 = scmp.ne.s32.totalorder %s105, %s107
    %p111 = scmp.eq.s32.totalorder %s10, 0
    %p112 = por %p110, %p111
    %p113 = scmp.ne.s32.totalorder %s105, %s107
    %p114 = scmp.eq.s32.totalorder %s15, 3
    %p115 = por %p113, %p114
    %p116 = scmp.ne.s32.totalorder %s107, %s108
    %p117 = scmp.eq.s32.totalorder %s15, 0
    %p118 = por %p116, %p117
    %p119 = scmp.ne.s32.totalorder %s107, %s108
    %p120 = scmp.eq.s32.totalorder %s16, 3
    %p121 = por %p119, %p120
    %p123 = scmp.ne.s32.totalorder %s108, %s122
    %p124 = scmp.eq.s32.totalorder %s16, 0
    %p125 = por %p123, %p124
    %s126 = ssub.s32 %s17, %s29
    %s127 = ssub.s32 %s18, %s25
    %s128 = sor.u32 %s126, %s127
    %p129 = scmp.eq.s32.totalorder %s128, 0
    %s131 = sadd.s32 %s130, 1
    %s132 = scalar_select %p129, %s130, %s131
    %p135 = pneg %p129
    %p136 = scmp.eq.s32.totalorder %s10, 3
    %p137 = por %p135, %p136
    %p138 = scmp.ne.s32.totalorder %s130, %s133
    %p139 = scmp.eq.s32.totalorder %s10, 0
    %p140 = por %p138, %p139
    %p141 = scmp.ne.s32.totalorder %s130, %s133
    %p142 = scmp.eq.s32.totalorder %s15, 3
    %p143 = por %p141, %p142
    %p144 = scmp.ne.s32.totalorder %s133, %s134
    %p145 = scmp.eq.s32.totalorder %s15, 0
    %p146 = por %p144, %p145
    %p147 = scmp.ne.s32.totalorder %s133, %s134
    %p148 = scmp.eq.s32.totalorder %s16, 3
    %p149 = por %p147, %p148
    %p151 = scmp.ne.s32.totalorder %s134, %s150
    %p152 = scmp.eq.s32.totalorder %s16, 0
    %p153 = por %p151, %p152
    %p154 = scmp.le.s32.totalorder 1, %s10
    %p155 = scmp.lt.s32.totalorder %s10, 5
    %p156 = pnand %p154, %p155
    %p157 = pneg %p156
    // Predicated region
    $region9: #{netG_forward.7} parent=5 // pred_check
      _
    $region10: #{netG_forward.7} parent=5 // pred_check_branch
      %159 = sbr.rel (%p156) target = $region12
    $region11: #{netG_forward.7} parent=5 // pred_region
      %s160 = ssub.s32 %s10, 1
      // Predicated region
      $region13: #{netG_forward.7} parent=11 // pred_check
        %p161 = pneg %p97
      $region14: #{netG_forward.7} parent=11 // pred_check_branch
        %163 = sbr.rel (%p161) target = $region16
      $region15: #{netG_forward.7} parent=11 // pred_region
        _
      $region16: #{netG_forward.7} parent=11 // pred_fallthru
        _
      // Predicated region
      $region17: #{netG_forward.7} parent=11 // pred_check
        %p164 = pneg %p118
      $region18: #{netG_forward.7} parent=11 // pred_check_branch
        %166 = sbr.rel (%p164) target = $region20
      $region19: #{netG_forward.7} parent=11 // pred_region
        _
      $region20: #{netG_forward.7} parent=11 // pred_fallthru
        _
    $region12: #{netG_forward.7} parent=5 // pred_fallthru
      _
    %p167 = scmp.lt.s32.totalorder %s10, 4
    // Predicated region
    $region21: #{netG_forward.7} parent=5 // pred_check
      %p168 = pneg %p167
    $region22: #{netG_forward.7} parent=5 // pred_check_branch
      %170 = sbr.rel (%p168) target = $region24
    $region23: #{netG_forward.7} parent=5 // pred_region
      // Predicated region
      $region25: #{netG_forward.7} parent=23 // pred_check
        %p171 = pneg %p42
      $region26: #{netG_forward.7} parent=23 // pred_check_branch
        %173 = sbr.rel (%p171) target = $region28
      $region27: #{netG_forward.7} parent=23 // pred_region
        %p174 = scmp.lt.s32.totalorder %s17, 3
        %s175 = scalar_select %p174, %s17, 3
        %s176 = smul.addr %s175, 8
        %s177 = smul.addr %s176, 4
        %s178 = scalar_lea.vmem %s0, %s177
      $region28: #{netG_forward.7} parent=23 // pred_fallthru
        _
      // Predicated region
      $region29: #{netG_forward.7} parent=23 // pred_check
        %p179 = pneg %p70
      $region30: #{netG_forward.7} parent=23 // pred_check_branch
        %181 = sbr.rel (%p179) target = $region32
      $region31: #{netG_forward.7} parent=23 // pred_region
        %p182 = scmp.lt.s32.totalorder %s17, 3
        %s183 = scalar_select %p182, %s17, 3
        %p184 = scmp.lt.s32.totalorder %s18, 0
        %s185 = scalar_select %p184, %s18, 0
        %s186 = smul.addr %s183, 32
        %s187 = sadd.s32 %s185, %s186
        %s188 = smul.addr %s187, 4
        %s189 = scalar_lea.vmem %s1, %s188
      $region32: #{netG_forward.7} parent=23 // pred_fallthru
        _
    $region24: #{netG_forward.7} parent=5 // pred_fallthru
      _
    %p190 = scmp.le.s32.totalorder 1, %s10
    %p191 = scmp.lt.s32.totalorder %s10, 5
    %p192 = pnand %p190, %p191
    %p193 = pneg %p192
    // Predicated region
    $region33: #{netG_forward.7} parent=5 // pred_check
      _
    $region34: #{netG_forward.7} parent=5 // pred_check_branch
      %195 = sbr.rel (%p192) target = $region36
    $region35: #{netG_forward.7} parent=5 // pred_region
      %s196 = ssub.s32 %s10, 1
      %p197 = scmp.lt.s32.totalorder %s19, 3
      %s198 = scalar_select %p197, %s19, 3
      %s199 = smul.addr %s198, 8
      %s200 = smul.addr %s199, 4
      %s201 = scalar_lea.vmem %s0, %s200
      %p202 = pneg %p48
      %p203 = pneg %p45
      %p204 = scmp.lt.s32.totalorder %s19, 3
      %s205 = scalar_select %p204, %s19, 3
      %p206 = scmp.lt.s32.totalorder %s20, 0
      %s207 = scalar_select %p206, %s20, 0
      %s208 = smul.addr %s205, 32
      %s209 = sadd.s32 %s207, %s208
      %s210 = smul.addr %s209, 4
      %s211 = scalar_lea.vmem %s1, %s210
      %p212 = pneg %p76
      %p213 = pneg %p73
      %p214 = pneg %p97
      %p215 = pneg %p94
      %p216 = pneg %p118
      %p217 = pneg %p115
      %p218 = pneg %p146
      %p219 = pneg %p143
      %p220 = scmp.lt.s32.totalorder %s19, 3
      %s221 = scalar_select %p220, %s19, 3
      %p222 = scmp.lt.s32.totalorder %s20, 0
      %s223 = scalar_select %p222, %s20, 0
      %s224 = smul.addr %s221, 4
      %s225 = sadd.s32 %s223, %s224
      %s226 = smul.addr %s225, 4
      %s227 = scalar_lea.vmem %s4, %s226
      %p228 = scmp.lt.s32.totalorder %s19, 3
      %s229 = scalar_select %p228, %s19, 3
      %s230 = smul.addr %s229, 8
      %s231 = smul.addr %s230, 4
      %s232 = scalar_lea.vmem %s0, %s231
      %p233 = scmp.lt.s32.totalorder %s19, 3
      %s234 = scalar_select %p233, %s19, 3
      %p235 = scmp.lt.s32.totalorder %s20, 0
      %s236 = scalar_select %p235, %s20, 0
      %s237 = smul.addr %s234, 32
      %s238 = sadd.s32 %s236, %s237
      %s239 = smul.addr %s238, 4
      %s240 = scalar_lea.vmem %s1, %s239
      %p241 = scmp.lt.s32.totalorder %s19, 3
      %s242 = scalar_select %p241, %s19, 3
      %p243 = scmp.lt.s32.totalorder %s20, 0
      %s244 = scalar_select %p243, %s20, 0
      %s245 = smul.addr %s242, 4
      %s246 = sadd.s32 %s244, %s245
      %s247 = smul.addr %s246, 4
      %s248 = scalar_lea.vmem %s4, %s247
      %v250 = vld [vmem:[%s232] sm:$0xff]
      %v251 = vld [vmem:[%s232 + $0x8] sm:$0xff]
      %v252 = vld [vmem:[%s232 + $0x10] sm:$0xff]
      %v253 = vld [vmem:[%s232 + $0x18] sm:$0xff]
      %v254 = vld [vmem:[%s240] sm:$0xf]
      %v255 = vld [vmem:[%s240 + $0x4] sm:$0xf]
      %v256 = vld [vmem:[%s240 + $0x8] sm:$0xf]
      %v257 = vld [vmem:[%s240 + $0xc] sm:$0xf]
      %v258 = vld [vmem:[%s240 + $0x10] sm:$0xf]
      %v259 = vld [vmem:[%s240 + $0x14] sm:$0xf]
      %v260 = vld [vmem:[%s240 + $0x18] sm:$0xf]
      %v261 = vld [vmem:[%s240 + $0x1c] sm:$0xf]
      %v262 = vld [vmem:[%s240 + $0x20] sm:$0xf]
      %v263 = vld [vmem:[%s240 + $0x24] sm:$0xf]
      %v264 = vld [vmem:[%s240 + $0x28] sm:$0xf]
      %v265 = vld [vmem:[%s240 + $0x2c] sm:$0xf]
      %v266 = vld [vmem:[%s240 + $0x30] sm:$0xf]
      %v267 = vld [vmem:[%s240 + $0x34] sm:$0xf]
      %v268 = vld [vmem:[%s240 + $0x38] sm:$0xf]
      %v269 = vld [vmem:[%s240 + $0x3c] sm:$0xf]
      %v270 = vld [vmem:[%s240 + $0x40] sm:$0xf]
      %v271 = vld [vmem:[%s240 + $0x44] sm:$0xf]
      %v272 = vld [vmem:[%s240 + $0x48] sm:$0xf]
      %v273 = vld [vmem:[%s240 + $0x4c] sm:$0xf]
      %v274 = vld [vmem:[%s240 + $0x50] sm:$0xf]
      %v275 = vld [vmem:[%s240 + $0x54] sm:$0xf]
      %v276 = vld [vmem:[%s240 + $0x58] sm:$0xf]
      %v277 = vld [vmem:[%s240 + $0x5c] sm:$0xf]
      %v278 = vld [vmem:[%s240 + $0x60] sm:$0xf]
      %v279 = vld [vmem:[%s240 + $0x64] sm:$0xf]
      %v280 = vld [vmem:[%s240 + $0x68] sm:$0xf]
      %v281 = vld [vmem:[%s240 + $0x6c] sm:$0xf]
      %v282 = vld [vmem:[%s240 + $0x70] sm:$0xf]
      %v283 = vld [vmem:[%s240 + $0x74] sm:$0xf]
      %v284 = vld [vmem:[%s240 + $0x78] sm:$0xf]
      %v285 = vld [vmem:[%s240 + $0x7c] sm:$0xf]
      %v290 = vunpack.c.l.b16 %v250
      %v291 = vunpack.c.h.b16 %v250
      %v292 = vunpack.c.l.b16 %v251
      %v293 = vunpack.c.h.b16 %v251
      %v294 = vunpack.c.l.b16 %v252
      %v295 = vunpack.c.h.b16 %v252
      %v296 = vunpack.c.l.b16 %v253
      %v297 = vunpack.c.h.b16 %v253
      %v298 = vpack.c.b16 %v292, %v290
      %v299 = vpack.c.b16 %v293, %v291
      %v300 = vpack.c.b16 %v296, %v294
      %v301 = vpack.c.b16 %v297, %v295
      %v338 = vunpack.c.l.b16 %v254
      %v339 = vunpack.c.l.b16 %v255
      %v340 = vunpack.c.l.b16 %v256
      %v341 = vunpack.c.l.b16 %v257
      %v342 = vunpack.c.l.b16 %v258
      %v343 = vunpack.c.l.b16 %v259
      %v344 = vunpack.c.l.b16 %v260
      %v345 = vunpack.c.l.b16 %v261
      %v346 = vunpack.c.l.b16 %v262
      %v347 = vunpack.c.l.b16 %v263
      %v348 = vunpack.c.l.b16 %v264
      %v349 = vunpack.c.l.b16 %v265
      %v350 = vunpack.c.l.b16 %v266
      %v351 = vunpack.c.l.b16 %v267
      %v352 = vunpack.c.l.b16 %v268
      %v353 = vunpack.c.l.b16 %v269
      %v354 = vunpack.c.l.b16 %v270
      %v355 = vunpack.c.l.b16 %v271
      %v356 = vunpack.c.l.b16 %v272
      %v357 = vunpack.c.l.b16 %v273
      %v358 = vunpack.c.l.b16 %v274
      %v359 = vunpack.c.l.b16 %v275
      %v360 = vunpack.c.l.b16 %v276
      %v361 = vunpack.c.l.b16 %v277
      %v362 = vunpack.c.l.b16 %v278
      %v363 = vunpack.c.l.b16 %v279
      %v364 = vunpack.c.l.b16 %v280
      %v365 = vunpack.c.l.b16 %v281
      %v366 = vunpack.c.l.b16 %v282
      %v367 = vunpack.c.l.b16 %v283
      %v368 = vunpack.c.l.b16 %v284
      %v369 = vunpack.c.l.b16 %v285
      %v370 = vpack.c.b16 %v339, %v338
      %v371 = vpack.c.b16 %v341, %v340
      %v372 = vpack.c.b16 %v343, %v342
      %v373 = vpack.c.b16 %v345, %v344
      %v374 = vpack.c.b16 %v347, %v346
      %v375 = vpack.c.b16 %v349, %v348
      %v376 = vpack.c.b16 %v351, %v350
      %v377 = vpack.c.b16 %v353, %v352
      %v378 = vpack.c.b16 %v355, %v354
      %v379 = vpack.c.b16 %v357, %v356
      %v380 = vpack.c.b16 %v359, %v358
      %v381 = vpack.c.b16 %v361, %v360
      %v382 = vpack.c.b16 %v363, %v362
      %v383 = vpack.c.b16 %v365, %v364
      %v384 = vpack.c.b16 %v367, %v366
      %v385 = vpack.c.b16 %v369, %v368
      %402 = vmatprep.subr.bf16.mxu0 0
      %403 = vmatpush1.bf16.msra.mxu0 %v377
      %404 = vmatprep.subr.bf16.mxu0 0
      %405 = vmatpush1.bf16.msra.mxu0 %v376
      %406 = vmatprep.subr.bf16.mxu0 0
      %407 = vmatpush1.bf16.msra.mxu0 %v375
      %408 = vmatprep.subr.bf16.mxu0 0
      %409 = vmatpush1.bf16.msra.mxu0 %v374
      %410 = vmatprep.subr.bf16.mxu0 0
      %411 = vmatpush1.bf16.msra.mxu0 %v373
      %412 = vmatprep.subr.bf16.mxu0 0
      %413 = vmatpush1.bf16.msra.mxu0 %v372
      %414 = vmatprep.subr.bf16.mxu0 0
      %415 = vmatpush1.bf16.msra.mxu0 %v371
      %416 = vmatprep.subr.bf16.mxu0 0
      %417 = vmatpush1.bf16.msra.mxu0 %v370
      %418 = vmatprep.subr.bf16.mxu0 0
      %419 = vmatpush2.bf16.msra.mxu0 %v385
      %420 = vmatprep.subr.bf16.mxu0 0
      %421 = vmatpush2.bf16.msra.mxu0 %v384
      %422 = vmatprep.subr.bf16.mxu0 0
      %423 = vmatpush2.bf16.msra.mxu0 %v383
      %424 = vmatprep.subr.bf16.mxu0 0
      %425 = vmatpush2.bf16.msra.mxu0 %v382
      %426 = vmatprep.subr.bf16.mxu0 0
      %427 = vmatpush2.bf16.msra.mxu0 %v381
      %428 = vmatprep.subr.bf16.mxu0 0
      %429 = vmatpush2.bf16.msra.mxu0 %v380
      %430 = vmatprep.subr.bf16.mxu0 0
      %431 = vmatpush2.bf16.msra.mxu0 %v379
      %432 = vmatprep.subr.bf16.mxu0 0
      %433 = vmatpush2.bf16.msra.mxu0 %v378
      %434 = vmatprep.mubr.bf16.mxu0 %v299
      %435 = vmatmul.mubr.bf16.gmra.mxu0 %v298
      %v436 = vpop.f32.mrf.mxu0
      %v437 = vadd.f32 0.0, %v436
      %v438 = vpop.f32.mrf.mxu0
      %v439 = vpop.f32.mrf.mxu0
      %v440 = vadd.f32 0.0, %v439
      %v441 = vpop.f32.mrf.mxu0
      %442 = vmatprep.mubr.bf16.mxu0 %v301
      %443 = vmatmul.mubr.bf16.gmra.mxu0 %v300
      %v444 = vpop.f32.mrf.mxu0
      %v445 = vadd.f32 0.0, %v444
      %v446 = vpop.f32.mrf.mxu0
      %v447 = vpop.f32.mrf.mxu0
      %v448 = vadd.f32 0.0, %v447
      %v449 = vpop.f32.mrf.mxu0
      %450 = vdwg.mxu0
      %v451 = vld [vmem:[%s2] sm:$0xff]
      %v452 = vld [vmem:[%s2 + $0x8] sm:$0xff]
      %v453 = vld [vmem:[%s2 + $0x10] sm:$0xff]
      %v454 = vld [vmem:[%s2 + $0x18] sm:$0xff]
      %456 = vset.pattern.permute.xlu0 0
      %457 = vperm.xlu0 %456, %v451
      %v458 = vpop.permute.xlu0 %457
      %461 = vset.pattern.permute.xlu0 0
      %462 = vperm.xlu0 %461, %v452
      %v463 = vpop.permute.xlu0 %462
      %466 = vset.pattern.permute.xlu0 0
      %467 = vperm.xlu0 %466, %v453
      %v468 = vpop.permute.xlu0 %467
      %471 = vset.pattern.permute.xlu0 0
      %472 = vperm.xlu0 %471, %v454
      %v473 = vpop.permute.xlu0 %472
      %v475 = vmul.f32 %v437, %v458
      %v476 = vmul.f32 %v440, %v463
      %v477 = vmul.f32 %v445, %v468
      %v478 = vmul.f32 %v448, %v473
      %v479 = vld [vmem:[%s3] sm:$0xff]
      %v480 = vld [vmem:[%s3 + $0x8] sm:$0xff]
      %v481 = vld [vmem:[%s3 + $0x10] sm:$0xff]
      %v482 = vld [vmem:[%s3 + $0x18] sm:$0xff]
      %484 = vset.pattern.permute.xlu0 0
      %485 = vperm.xlu0 %484, %v479
      %v486 = vpop.permute.xlu0 %485
      %489 = vset.pattern.permute.xlu0 0
      %490 = vperm.xlu0 %489, %v480
      %v491 = vpop.permute.xlu0 %490
      %494 = vset.pattern.permute.xlu0 0
      %495 = vperm.xlu0 %494, %v481
      %v496 = vpop.permute.xlu0 %495
      %499 = vset.pattern.permute.xlu0 0
      %500 = vperm.xlu0 %499, %v482
      %v501 = vpop.permute.xlu0 %500
      %v503 = vadd.f32 %v475, %v486
      %v504 = vadd.f32 %v476, %v491
      %v505 = vadd.f32 %v477, %v496
      %v506 = vadd.f32 %v478, %v501
      %v507 = vmax.f32 %v503, 0.0
      %v508 = vmax.f32 %v504, 0.0
      %v509 = vmax.f32 %v505, 0.0
      %v510 = vmax.f32 %v506, 0.0
      %v511 = vpack.c.bf16 %v508, %v507
      %v512 = vpack.c.bf16 %v510, %v509
      %v515 = vunpack.c.l.b16 %v511
      %v516 = vunpack.c.h.b16 %v511
      %v517 = vunpack.c.l.b16 %v512
      %v518 = vunpack.c.h.b16 %v512
      %v519 = vpack.c.b16 %v515, %v515
      %v520 = vpack.c.b16 %v516, %v516
      %v521 = vpack.c.b16 %v517, %v517
      %v522 = vpack.c.b16 %v518, %v518
      %527 = vst [vmem:[%s248] sm:$0xf] %v519
      %528 = vst [vmem:[%s248 + $0x4] sm:$0xf] %v520
      %529 = vst [vmem:[%s248 + $0x8] sm:$0xf] %v521
      %530 = vst [vmem:[%s248 + $0xc] sm:$0xf] %v522
      %p531 = scmp.lt.s32.totalorder %s19, 3
      %s532 = scalar_select %p531, %s19, 3
      %p533 = scmp.lt.s32.totalorder %s20, 0
      %s534 = scalar_select %p533, %s20, 0
      %s535 = smul.addr %s532, 4
      %s536 = sadd.s32 %s534, %s535
      %s537 = smul.addr %s536, 4
      %s538 = scalar_lea.vmem %s4, %s537
      // Predicated region
      $region37: #{netG_forward.7} parent=35 // pred_check
        %p539 = pneg %p143
      $region38: #{netG_forward.7} parent=35 // pred_check_branch
        %541 = sbr.rel (%p539) target = $region40
      $region39: #{netG_forward.7} parent=35 // pred_region
        _
      $region40: #{netG_forward.7} parent=35 // pred_fallthru
        _
    $region36: #{netG_forward.7} parent=5 // pred_fallthru
      _
    %p542 = scmp.le.s32.totalorder 2, %s10
    // Predicated region
    $region41: #{netG_forward.7} parent=5 // pred_check
      %p543 = pneg %p542
    $region42: #{netG_forward.7} parent=5 // pred_check_branch
      %545 = sbr.rel (%p543) target = $region44
    $region43: #{netG_forward.7} parent=5 // pred_region
      %s546 = ssub.s32 %s10, 2
      // Predicated region
      $region45: #{netG_forward.7} parent=43 // pred_check
        %p547 = pneg %p149
      $region46: #{netG_forward.7} parent=43 // pred_check_branch
        %549 = sbr.rel (%p547) target = $region48
      $region47: #{netG_forward.7} parent=43 // pred_region
        %p550 = scmp.lt.s32.totalorder %s21, 3
        %s551 = scalar_select %p550, %s21, 3
        %p552 = scmp.lt.s32.totalorder %s22, 0
        %s553 = scalar_select %p552, %s22, 0
        %s554 = smul.addr %s551, 4
        %s555 = sadd.s32 %s553, %s554
        %s556 = smul.addr %s555, 4
        %s557 = scalar_lea.vmem %s4, %s556
      $region48: #{netG_forward.7} parent=43 // pred_fallthru
        _
    $region44: #{netG_forward.7} parent=5 // pred_fallthru
      _
  $region6: #{netG_forward.7} parent=0 // loop_footer
    %s14 = sadd.s32 1, %s10
  $region7: #{netG_forward.7} parent=0 // loop_footer_branch
    %9 = sbr.rel target = $region3
  $region8: #{netG_forward.7} parent=0 // loop_exit
    _

// kernel: netG_forward.8
$region0: #{netG_forward.8}
  #allocation0 [shape = 'u32[]', space=smem, size = 0x4, offset = 0x4, fixed_abs, tag = 'smem constant byte address 0x4 - core index']
  #allocation1 [shape = 'u32[144,128]{1,0:T(1,128)}', space=vmem, size = 0x12000, scoped, tag = 'internal scratch']
  %s0 = inlined_call_operand.vmem [shape: bf16[4,16,128], index: 0, kind: input, shape index: {}]
  %s1 = inlined_call_operand.vmem [shape: bf16[4,128,512], index: 1, kind: input, shape index: {}]
  %s2 = inlined_call_operand.vmem [shape: f32[16,1], index: 2, kind: input, shape index: {}]
  %s3 = inlined_call_operand.vmem [shape: f32[16,1], index: 3, kind: input, shape index: {}]
  %s4 = inlined_call_operand.vmem [shape: bf16[4,16,512], index: 4, kind: output, shape index: {}]
  %s5 = sld [smem:[#allocation0]]
  $region49: #{netG_forward.8} parent=0
    _
  %s7 = ssub.s32 1, %s5
  %s8 = scalar_select 0, %s7, %s5
  loop: start=0, step=1, limit=6
  $region2: #{netG_forward.8} parent=0 // loop_pre_header
    _
  $region3: #{netG_forward.8} parent=0 // loop_header
    %s10 = sphi 0, %s14
    %p11 = scmp.ge.s32.totalorder %s10, 6
    %s17 = sphi 0, %s29
    %s18 = sphi 0, %s25
    %s19 = sphi 0, %s17
    %s20 = sphi 0, %s18
    %s21 = sphi 0, %s19
    %s22 = sphi 0, %s20
    %s32 = sphi 0, %s34
    %s35 = sphi 0, %s32
    %s36 = sphi 0, %s35
    %s52 = sphi 0, %s36
    %s60 = sphi 0, %s62
    %s63 = sphi 0, %s60
    %s64 = sphi 0, %s63
    %s80 = sphi 0, %s64
    %s84 = sphi 0, %s84
    %s86 = sphi 0, %s84
    %s87 = sphi 0, %s86
    %s101 = sphi 0, %s87
    %s105 = sphi 0, %s105
    %s107 = sphi 0, %s105
    %s108 = sphi 0, %s107
    %s122 = sphi 0, %s108
    %s130 = sphi 0, %s132
    %s133 = sphi 0, %s130
    %s134 = sphi 0, %s133
    %s150 = sphi 0, %s134
  $region4: #{netG_forward.8} parent=0 // loop_header_branch
    %13 = sbr.rel (%p11) target = $region8
  $region5: #{netG_forward.8} parent=0 // loop_body
    %s15 = ssub.s32 %s10, 1
    %s16 = ssub.s32 %s10, 2
    %s23 = sadd.s32 1, %s18
    %p24 = scmp.ge.s32.totalorder %s23, 1
    %s25 = scalar_select %p24, 0, %s23
    %s26 = sadd.s32 1, %s17
    %s27 = scalar_select %p24, %s26, %s17
    %p28 = scmp.ge.s32.totalorder %s27, 4
    %s29 = scalar_select %p28, 0, %s27
    %s30 = ssub.s32 %s17, %s29
    %p31 = scmp.eq.s32.totalorder %s30, 0
    %s33 = sadd.s32 %s32, 1
    %s34 = scalar_select %p31, %s32, %s33
    %p37 = pneg %p31
    %p38 = scmp.eq.s32.totalorder %s10, 3
    %p39 = por %p37, %p38
    %p40 = scmp.ne.s32.totalorder %s32, %s35
    %p41 = scmp.eq.s32.totalorder %s10, 0
    %p42 = por %p40, %p41
    %p43 = scmp.ne.s32.totalorder %s32, %s35
    %p44 = scmp.eq.s32.totalorder %s15, 3
    %p45 = por %p43, %p44
    %p46 = scmp.ne.s32.totalorder %s35, %s36
    %p47 = scmp.eq.s32.totalorder %s15, 0
    %p48 = por %p46, %p47
    %p49 = scmp.ne.s32.totalorder %s35, %s36
    %p50 = scmp.eq.s32.totalorder %s16, 3
    %p51 = por %p49, %p50
    %p53 = scmp.ne.s32.totalorder %s36, %s52
    %p54 = scmp.eq.s32.totalorder %s16, 0
    %p55 = por %p53, %p54
    %s56 = ssub.s32 %s17, %s29
    %s57 = ssub.s32 %s18, %s25
    %s58 = sor.u32 %s56, %s57
    %p59 = scmp.eq.s32.totalorder %s58, 0
    %s61 = sadd.s32 %s60, 1
    %s62 = scalar_select %p59, %s60, %s61
    %p65 = pneg %p59
    %p66 = scmp.eq.s32.totalorder %s10, 3
    %p67 = por %p65, %p66
    %p68 = scmp.ne.s32.totalorder %s60, %s63
    %p69 = scmp.eq.s32.totalorder %s10, 0
    %p70 = por %p68, %p69
    %p71 = scmp.ne.s32.totalorder %s60, %s63
    %p72 = scmp.eq.s32.totalorder %s15, 3
    %p73 = por %p71, %p72
    %p74 = scmp.ne.s32.totalorder %s63, %s64
    %p75 = scmp.eq.s32.totalorder %s15, 0
    %p76 = por %p74, %p75
    %p77 = scmp.ne.s32.totalorder %s63, %s64
    %p78 = scmp.eq.s32.totalorder %s16, 3
    %p79 = por %p77, %p78
    %p81 = scmp.ne.s32.totalorder %s64, %s80
    %p82 = scmp.eq.s32.totalorder %s16, 0
    %p83 = por %p81, %p82
    %s85 = sadd.s32 %s84, 1
    %p88 = scmp.eq.s32.totalorder %s10, 3
    %p89 = scmp.ne.s32.totalorder %s84, %s86
    %p90 = scmp.eq.s32.totalorder %s10, 0
    %p91 = por %p89, %p90
    %p92 = scmp.ne.s32.totalorder %s84, %s86
    %p93 = scmp.eq.s32.totalorder %s15, 3
    %p94 = por %p92, %p93
    %p95 = scmp.ne.s32.totalorder %s86, %s87
    %p96 = scmp.eq.s32.totalorder %s15, 0
    %p97 = por %p95, %p96
    %p98 = scmp.ne.s32.totalorder %s86, %s87
    %p99 = scmp.eq.s32.totalorder %s16, 3
    %p100 = por %p98, %p99
    %p102 = scmp.ne.s32.totalorder %s87, %s101
    %p103 = scmp.eq.s32.totalorder %s16, 0
    %p104 = por %p102, %p103
    %s106 = sadd.s32 %s105, 1
    %p109 = scmp.eq.s32.totalorder %s10, 3
    %p110 = scmp.ne.s32.totalorder %s105, %s107
    %p111 = scmp.eq.s32.totalorder %s10, 0
    %p112 = por %p110, %p111
    %p113 = scmp.ne.s32.totalorder %s105, %s107
    %p114 = scmp.eq.s32.totalorder %s15, 3
    %p115 = por %p113, %p114
    %p116 = scmp.ne.s32.totalorder %s107, %s108
    %p117 = scmp.eq.s32.totalorder %s15, 0
    %p118 = por %p116, %p117
    %p119 = scmp.ne.s32.totalorder %s107, %s108
    %p120 = scmp.eq.s32.totalorder %s16, 3
    %p121 = por %p119, %p120
    %p123 = scmp.ne.s32.totalorder %s108, %s122
    %p124 = scmp.eq.s32.totalorder %s16, 0
    %p125 = por %p123, %p124
    %s126 = ssub.s32 %s17, %s29
    %s127 = ssub.s32 %s18, %s25
    %s128 = sor.u32 %s126, %s127
    %p129 = scmp.eq.s32.totalorder %s128, 0
    %s131 = sadd.s32 %s130, 1
    %s132 = scalar_select %p129, %s130, %s131
    %p135 = pneg %p129
    %p136 = scmp.eq.s32.totalorder %s10, 3
    %p137 = por %p135, %p136
    %p138 = scmp.ne.s32.totalorder %s130, %s133
    %p139 = scmp.eq.s32.totalorder %s10, 0
    %p140 = por %p138, %p139
    %p141 = scmp.ne.s32.totalorder %s130, %s133
    %p142 = scmp.eq.s32.totalorder %s15, 3
    %p143 = por %p141, %p142
    %p144 = scmp.ne.s32.totalorder %s133, %s134
    %p145 = scmp.eq.s32.totalorder %s15, 0
    %p146 = por %p144, %p145
    %p147 = scmp.ne.s32.totalorder %s133, %s134
    %p148 = scmp.eq.s32.totalorder %s16, 3
    %p149 = por %p147, %p148
    %p151 = scmp.ne.s32.totalorder %s134, %s150
    %p152 = scmp.eq.s32.totalorder %s16, 0
    %p153 = por %p151, %p152
    %p154 = scmp.le.s32.totalorder 1, %s10
    %p155 = scmp.lt.s32.totalorder %s10, 5
    %p156 = pnand %p154, %p155
    %p157 = pneg %p156
    // Predicated region
    $region9: #{netG_forward.8} parent=5 // pred_check
      _
    $region10: #{netG_forward.8} parent=5 // pred_check_branch
      %159 = sbr.rel (%p156) target = $region12
    $region11: #{netG_forward.8} parent=5 // pred_region
      %s160 = ssub.s32 %s10, 1
      // Predicated region
      $region13: #{netG_forward.8} parent=11 // pred_check
        %p161 = pneg %p97
      $region14: #{netG_forward.8} parent=11 // pred_check_branch
        %163 = sbr.rel (%p161) target = $region16
      $region15: #{netG_forward.8} parent=11 // pred_region
        _
      $region16: #{netG_forward.8} parent=11 // pred_fallthru
        _
      // Predicated region
      $region17: #{netG_forward.8} parent=11 // pred_check
        %p164 = pneg %p118
      $region18: #{netG_forward.8} parent=11 // pred_check_branch
        %166 = sbr.rel (%p164) target = $region20
      $region19: #{netG_forward.8} parent=11 // pred_region
        _
      $region20: #{netG_forward.8} parent=11 // pred_fallthru
        _
    $region12: #{netG_forward.8} parent=5 // pred_fallthru
      _
    %p167 = scmp.lt.s32.totalorder %s10, 4
    // Predicated region
    $region21: #{netG_forward.8} parent=5 // pred_check
      %p168 = pneg %p167
    $region22: #{netG_forward.8} parent=5 // pred_check_branch
      %170 = sbr.rel (%p168) target = $region24
    $region23: #{netG_forward.8} parent=5 // pred_region
      // Predicated region
      $region25: #{netG_forward.8} parent=23 // pred_check
        %p171 = pneg %p42
      $region26: #{netG_forward.8} parent=23 // pred_check_branch
        %173 = sbr.rel (%p171) target = $region28
      $region27: #{netG_forward.8} parent=23 // pred_region
        %p174 = scmp.lt.s32.totalorder %s17, 3
        %s175 = scalar_select %p174, %s17, 3
        %s176 = smul.addr %s175, 2
        %s177 = smul.addr %s176, 4
        %s178 = scalar_lea.vmem %s0, %s177
      $region28: #{netG_forward.8} parent=23 // pred_fallthru
        _
      // Predicated region
      $region29: #{netG_forward.8} parent=23 // pred_check
        %p179 = pneg %p70
      $region30: #{netG_forward.8} parent=23 // pred_check_branch
        %181 = sbr.rel (%p179) target = $region32
      $region31: #{netG_forward.8} parent=23 // pred_region
        %s182 = smul.u32 4, %s18
        %p183 = scmp.lt.s32.totalorder %s17, 3
        %s184 = scalar_select %p183, %s17, 3
        %p185 = scmp.lt.s32.totalorder %s182, 3
        %s186 = scalar_select %p185, %s182, 3
        %s187 = smul.addr %s184, 64
        %s188 = sadd.s32 %s186, %s187
        %s189 = smul.addr %s188, 4
        %s190 = scalar_lea.vmem %s1, %s189
        %s191 = smul.u32 4, %s18
      $region32: #{netG_forward.8} parent=23 // pred_fallthru
        _
    $region24: #{netG_forward.8} parent=5 // pred_fallthru
      _
    %p192 = scmp.le.s32.totalorder 1, %s10
    %p193 = scmp.lt.s32.totalorder %s10, 5
    %p194 = pnand %p192, %p193
    %p195 = pneg %p194
    // Predicated region
    $region33: #{netG_forward.8} parent=5 // pred_check
      _
    $region34: #{netG_forward.8} parent=5 // pred_check_branch
      %197 = sbr.rel (%p194) target = $region36
    $region35: #{netG_forward.8} parent=5 // pred_region
      %s198 = ssub.s32 %s10, 1
      %p199 = scmp.lt.s32.totalorder %s19, 3
      %s200 = scalar_select %p199, %s19, 3
      %s201 = smul.addr %s200, 2
      %s202 = smul.addr %s201, 4
      %s203 = scalar_lea.vmem %s0, %s202
      %p204 = pneg %p48
      %p205 = pneg %p45
      %s206 = smul.u32 4, %s20
      %p207 = scmp.lt.s32.totalorder %s19, 3
      %s208 = scalar_select %p207, %s19, 3
      %p209 = scmp.lt.s32.totalorder %s206, 3
      %s210 = scalar_select %p209, %s206, 3
      %s211 = smul.addr %s208, 64
      %s212 = sadd.s32 %s210, %s211
      %s213 = smul.addr %s212, 4
      %s214 = scalar_lea.vmem %s1, %s213
      %p215 = pneg %p76
      %p216 = pneg %p73
      %p217 = pneg %p97
      %p218 = pneg %p94
      %p219 = pneg %p118
      %p220 = pneg %p115
      %p221 = pneg %p146
      %p222 = pneg %p143
      %s223 = smul.u32 4, %s20
      %p224 = scmp.lt.s32.totalorder %s19, 3
      %s225 = scalar_select %p224, %s19, 3
      %p226 = scmp.lt.s32.totalorder %s223, 3
      %s227 = scalar_select %p226, %s223, 3
      %s228 = smul.addr %s225, 8
      %s229 = sadd.s32 %s227, %s228
      %s230 = smul.addr %s229, 4
      %s231 = scalar_lea.vmem %s4, %s230
      %p232 = scmp.lt.s32.totalorder %s19, 3
      %s233 = scalar_select %p232, %s19, 3
      %s234 = smul.addr %s233, 2
      %s235 = smul.addr %s234, 4
      %s236 = scalar_lea.vmem %s0, %s235
      %s237 = smul.u32 4, %s20
      %p238 = scmp.lt.s32.totalorder %s19, 3
      %s239 = scalar_select %p238, %s19, 3
      %p240 = scmp.lt.s32.totalorder %s237, 3
      %s241 = scalar_select %p240, %s237, 3
      %s242 = smul.addr %s239, 64
      %s243 = sadd.s32 %s241, %s242
      %s244 = smul.addr %s243, 4
      %s245 = scalar_lea.vmem %s1, %s244
      %s246 = smul.u32 4, %s20
      %s247 = smul.u32 4, %s20
      %p248 = scmp.lt.s32.totalorder %s19, 3
      %s249 = scalar_select %p248, %s19, 3
      %p250 = scmp.lt.s32.totalorder %s247, 3
      %s251 = scalar_select %p250, %s247, 3
      %s252 = smul.addr %s249, 8
      %s253 = sadd.s32 %s251, %s252
      %s254 = smul.addr %s253, 4
      %s255 = scalar_lea.vmem %s4, %s254
      %s256 = smul.u32 4, %s20
      %v258 = vld [vmem:[%s236] sm:$0xf]
      %v259 = vld [vmem:[%s236 + $0x4] sm:$0xf]
      %v260 = vld [vmem:[%s245] sm:$0xff]
      %v261 = vld [vmem:[%s245 + $0x8] sm:$0xff]
      %v262 = vld [vmem:[%s245 + $0x10] sm:$0xff]
      %v263 = vld [vmem:[%s245 + $0x18] sm:$0xff]
      %v264 = vld [vmem:[%s245 + $0x20] sm:$0xff]
      %v265 = vld [vmem:[%s245 + $0x28] sm:$0xff]
      %v266 = vld [vmem:[%s245 + $0x30] sm:$0xff]
      %v267 = vld [vmem:[%s245 + $0x38] sm:$0xff]
      %v268 = vld [vmem:[%s245 + $0x40] sm:$0xff]
      %v269 = vld [vmem:[%s245 + $0x48] sm:$0xff]
      %v270 = vld [vmem:[%s245 + $0x50] sm:$0xff]
      %v271 = vld [vmem:[%s245 + $0x58] sm:$0xff]
      %v272 = vld [vmem:[%s245 + $0x60] sm:$0xff]
      %v273 = vld [vmem:[%s245 + $0x68] sm:$0xff]
      %v274 = vld [vmem:[%s245 + $0x70] sm:$0xff]
      %v275 = vld [vmem:[%s245 + $0x78] sm:$0xff]
      %v276 = vld [vmem:[%s245 + $0x80] sm:$0xff]
      %v277 = vld [vmem:[%s245 + $0x88] sm:$0xff]
      %v278 = vld [vmem:[%s245 + $0x90] sm:$0xff]
      %v279 = vld [vmem:[%s245 + $0x98] sm:$0xff]
      %v280 = vld [vmem:[%s245 + $0xa0] sm:$0xff]
      %v281 = vld [vmem:[%s245 + $0xa8] sm:$0xff]
      %v282 = vld [vmem:[%s245 + $0xb0] sm:$0xff]
      %v283 = vld [vmem:[%s245 + $0xb8] sm:$0xff]
      %v284 = vld [vmem:[%s245 + $0xc0] sm:$0xff]
      %v285 = vld [vmem:[%s245 + $0xc8] sm:$0xff]
      %v286 = vld [vmem:[%s245 + $0xd0] sm:$0xff]
      %v287 = vld [vmem:[%s245 + $0xd8] sm:$0xff]
      %v288 = vld [vmem:[%s245 + $0xe0] sm:$0xff]
      %v289 = vld [vmem:[%s245 + $0xe8] sm:$0xff]
      %v290 = vld [vmem:[%s245 + $0xf0] sm:$0xff]
      %v291 = vld [vmem:[%s245 + $0xf8] sm:$0xff]
      %v294 = vunpack.c.l.b16 %v258
      %v295 = vunpack.c.l.b16 %v259
      %v296 = vpack.c.b16 %v295, %v294
      %v330 = vunpack.c.l.b16 %v260
      %v331 = vunpack.c.h.b16 %v260
      %v332 = vunpack.c.l.b16 %v261
      %v333 = vunpack.c.h.b16 %v261
      %v334 = vunpack.c.l.b16 %v262
      %v335 = vunpack.c.h.b16 %v262
      %v336 = vunpack.c.l.b16 %v263
      %v337 = vunpack.c.h.b16 %v263
      %v338 = vunpack.c.l.b16 %v264
      %v339 = vunpack.c.h.b16 %v264
      %v340 = vunpack.c.l.b16 %v265
      %v341 = vunpack.c.h.b16 %v265
      %v342 = vunpack.c.l.b16 %v266
      %v343 = vunpack.c.h.b16 %v266
      %v344 = vunpack.c.l.b16 %v267
      %v345 = vunpack.c.h.b16 %v267
      %v346 = vunpack.c.l.b16 %v268
      %v347 = vunpack.c.h.b16 %v268
      %v348 = vunpack.c.l.b16 %v269
      %v349 = vunpack.c.h.b16 %v269
      %v350 = vunpack.c.l.b16 %v270
      %v351 = vunpack.c.h.b16 %v270
      %v352 = vunpack.c.l.b16 %v271
      %v353 = vunpack.c.h.b16 %v271
      %v354 = vunpack.c.l.b16 %v272
      %v355 = vunpack.c.h.b16 %v272
      %v356 = vunpack.c.l.b16 %v273
      %v357 = vunpack.c.h.b16 %v273
      %v358 = vunpack.c.l.b16 %v274
      %v359 = vunpack.c.h.b16 %v274
      %v360 = vunpack.c.l.b16 %v275
      %v361 = vunpack.c.h.b16 %v275
      %v362 = vunpack.c.l.b16 %v276
      %v363 = vunpack.c.h.b16 %v276
      %v364 = vunpack.c.l.b16 %v277
      %v365 = vunpack.c.h.b16 %v277
      %v366 = vunpack.c.l.b16 %v278
      %v367 = vunpack.c.h.b16 %v278
      %v368 = vunpack.c.l.b16 %v279
      %v369 = vunpack.c.h.b16 %v279
      %v370 = vunpack.c.l.b16 %v280
      %v371 = vunpack.c.h.b16 %v280
      %v372 = vunpack.c.l.b16 %v281
      %v373 = vunpack.c.h.b16 %v281
      %v374 = vunpack.c.l.b16 %v282
      %v375 = vunpack.c.h.b16 %v282
      %v376 = vunpack.c.l.b16 %v283
      %v377 = vunpack.c.h.b16 %v283
      %v378 = vunpack.c.l.b16 %v284
      %v379 = vunpack.c.h.b16 %v284
      %v380 = vunpack.c.l.b16 %v285
      %v381 = vunpack.c.h.b16 %v285
      %v382 = vunpack.c.l.b16 %v286
      %v383 = vunpack.c.h.b16 %v286
      %v384 = vunpack.c.l.b16 %v287
      %v385 = vunpack.c.h.b16 %v287
      %v386 = vunpack.c.l.b16 %v288
      %v387 = vunpack.c.h.b16 %v288
      %v388 = vunpack.c.l.b16 %v289
      %v389 = vunpack.c.h.b16 %v289
      %v390 = vunpack.c.l.b16 %v290
      %v391 = vunpack.c.h.b16 %v290
      %v392 = vunpack.c.l.b16 %v291
      %v393 = vunpack.c.h.b16 %v291
      %v394 = vpack.c.b16 %v334, %v330
      %v395 = vpack.c.b16 %v335, %v331
      %v396 = vpack.c.b16 %v336, %v332
      %v397 = vpack.c.b16 %v337, %v333
      %v398 = vpack.c.b16 %v342, %v338
      %v399 = vpack.c.b16 %v343, %v339
      %v400 = vpack.c.b16 %v344, %v340
      %v401 = vpack.c.b16 %v345, %v341
      %v402 = vpack.c.b16 %v350, %v346
      %v403 = vpack.c.b16 %v351, %v347
      %v404 = vpack.c.b16 %v352, %v348
      %v405 = vpack.c.b16 %v353, %v349
      %v406 = vpack.c.b16 %v358, %v354
      %v407 = vpack.c.b16 %v359, %v355
      %v408 = vpack.c.b16 %v360, %v356
      %v409 = vpack.c.b16 %v361, %v357
      %v410 = vpack.c.b16 %v366, %v362
      %v411 = vpack.c.b16 %v367, %v363
      %v412 = vpack.c.b16 %v368, %v364
      %v413 = vpack.c.b16 %v369, %v365
      %v414 = vpack.c.b16 %v374, %v370
      %v415 = vpack.c.b16 %v375, %v371
      %v416 = vpack.c.b16 %v376, %v372
      %v417 = vpack.c.b16 %v377, %v373
      %v418 = vpack.c.b16 %v382, %v378
      %v419 = vpack.c.b16 %v383, %v379
      %v420 = vpack.c.b16 %v384, %v380
      %v421 = vpack.c.b16 %v385, %v381
      %v422 = vpack.c.b16 %v390, %v386
      %v423 = vpack.c.b16 %v391, %v387
      %v424 = vpack.c.b16 %v392, %v388
      %v425 = vpack.c.b16 %v393, %v389
      %458 = vmatprep.subr.bf16.mxu0 %v423
      %459 = vmatpush1.bf16.msra.mxu0 %v422
      %460 = vmatprep.subr.bf16.mxu0 %v419
      %461 = vmatpush1.bf16.msra.mxu0 %v418
      %462 = vmatprep.subr.bf16.mxu0 %v415
      %463 = vmatpush1.bf16.msra.mxu0 %v414
      %464 = vmatprep.subr.bf16.mxu0 %v411
      %465 = vmatpush1.bf16.msra.mxu0 %v410
      %466 = vmatprep.subr.bf16.mxu0 %v407
      %467 = vmatpush1.bf16.msra.mxu0 %v406
      %468 = vmatprep.subr.bf16.mxu0 %v403
      %469 = vmatpush1.bf16.msra.mxu0 %v402
      %470 = vmatprep.subr.bf16.mxu0 %v399
      %471 = vmatpush1.bf16.msra.mxu0 %v398
      %472 = vmatprep.subr.bf16.mxu0 %v395
      %473 = vmatpush1.bf16.msra.mxu0 %v394
      %474 = vmatprep.subr.bf16.mxu0 0
      %475 = vmatpush2.bf16.msra.mxu0 0
      %476 = vmatprep.subr.bf16.mxu0 0
      %477 = vmatpush2.bf16.msra.mxu0 0
      %478 = vmatprep.subr.bf16.mxu0 0
      %479 = vmatpush2.bf16.msra.mxu0 0
      %480 = vmatprep.subr.bf16.mxu0 0
      %481 = vmatpush2.bf16.msra.mxu0 0
      %482 = vmatprep.subr.bf16.mxu0 0
      %483 = vmatpush2.bf16.msra.mxu0 0
      %484 = vmatprep.subr.bf16.mxu0 0
      %485 = vmatpush2.bf16.msra.mxu0 0
      %486 = vmatprep.subr.bf16.mxu0 0
      %487 = vmatpush2.bf16.msra.mxu0 0
      %488 = vmatprep.subr.bf16.mxu0 0
      %489 = vmatpush2.bf16.msra.mxu0 0
      %490 = vmatprep.mubr.bf16.mxu0 0
      %491 = vmatmul.mubr.bf16.gmra.mxu0 %v296
      %v492 = vpop.f32.mrf.mxu0
      %v493 = vadd.f32 0.0, %v492
      %v494 = vpop.f32.mrf.mxu0
      %v495 = vadd.f32 0.0, %v494
      %v496 = vpop.f32.mrf.mxu0
      %v497 = vadd.f32 0.0, %v496
      %v498 = vpop.f32.mrf.mxu0
      %v499 = vadd.f32 0.0, %v498
      %500 = vdwg.mxu0
      %501 = vmatprep.subr.bf16.mxu0 %v425
      %502 = vmatpush1.bf16.msra.mxu0 %v424
      %503 = vmatprep.subr.bf16.mxu0 %v421
      %504 = vmatpush1.bf16.msra.mxu0 %v420
      %505 = vmatprep.subr.bf16.mxu0 %v417
      %506 = vmatpush1.bf16.msra.mxu0 %v416
      %507 = vmatprep.subr.bf16.mxu0 %v413
      %508 = vmatpush1.bf16.msra.mxu0 %v412
      %509 = vmatprep.subr.bf16.mxu0 %v409
      %510 = vmatpush1.bf16.msra.mxu0 %v408
      %511 = vmatprep.subr.bf16.mxu0 %v405
      %512 = vmatpush1.bf16.msra.mxu0 %v404
      %513 = vmatprep.subr.bf16.mxu0 %v401
      %514 = vmatpush1.bf16.msra.mxu0 %v400
      %515 = vmatprep.subr.bf16.mxu0 %v397
      %516 = vmatpush1.bf16.msra.mxu0 %v396
      %517 = vmatprep.subr.bf16.mxu0 0
      %518 = vmatpush2.bf16.msra.mxu0 0
      %519 = vmatprep.subr.bf16.mxu0 0
      %520 = vmatpush2.bf16.msra.mxu0 0
      %521 = vmatprep.subr.bf16.mxu0 0
      %522 = vmatpush2.bf16.msra.mxu0 0
      %523 = vmatprep.subr.bf16.mxu0 0
      %524 = vmatpush2.bf16.msra.mxu0 0
      %525 = vmatprep.subr.bf16.mxu0 0
      %526 = vmatpush2.bf16.msra.mxu0 0
      %527 = vmatprep.subr.bf16.mxu0 0
      %528 = vmatpush2.bf16.msra.mxu0 0
      %529 = vmatprep.subr.bf16.mxu0 0
      %530 = vmatpush2.bf16.msra.mxu0 0
      %531 = vmatprep.subr.bf16.mxu0 0
      %532 = vmatpush2.bf16.msra.mxu0 0
      %533 = vmatprep.mubr.bf16.mxu0 0
      %534 = vmatmul.mubr.bf16.gmra.mxu0 %v296
      %v535 = vpop.f32.mrf.mxu0
      %v536 = vadd.f32 0.0, %v535
      %v537 = vpop.f32.mrf.mxu0
      %v538 = vadd.f32 0.0, %v537
      %v539 = vpop.f32.mrf.mxu0
      %v540 = vadd.f32 0.0, %v539
      %v541 = vpop.f32.mrf.mxu0
      %v542 = vadd.f32 0.0, %v541
      %543 = vdwg.mxu0
      %v544 = vld [vmem:[%s2] sm:$0xff]
      %v545 = vld [vmem:[%s2 + $0x8] sm:$0xff]
      %547 = vset.pattern.permute.xlu0 0
      %548 = vperm.xlu0 %547, %v544
      %v549 = vpop.permute.xlu0 %548
      %552 = vset.pattern.permute.xlu0 0
      %553 = vperm.xlu0 %552, %v545
      %v554 = vpop.permute.xlu0 %553
      %v556 = vmul.f32 %v493, %v549
      %v557 = vmul.f32 %v495, %v549
      %v558 = vmul.f32 %v536, %v549
      %v559 = vmul.f32 %v538, %v549
      %v560 = vmul.f32 %v497, %v554
      %v561 = vmul.f32 %v499, %v554
      %v562 = vmul.f32 %v540, %v554
      %v563 = vmul.f32 %v542, %v554
      %v564 = vld [vmem:[%s3] sm:$0xff]
      %v565 = vld [vmem:[%s3 + $0x8] sm:$0xff]
      %567 = vset.pattern.permute.xlu0 0
      %568 = vperm.xlu0 %567, %v564
      %v569 = vpop.permute.xlu0 %568
      %572 = vset.pattern.permute.xlu0 0
      %573 = vperm.xlu0 %572, %v565
      %v574 = vpop.permute.xlu0 %573
      %v576 = vadd.f32 %v556, %v569
      %v577 = vadd.f32 %v557, %v569
      %v578 = vadd.f32 %v558, %v569
      %v579 = vadd.f32 %v559, %v569
      %v580 = vadd.f32 %v560, %v574
      %v581 = vadd.f32 %v561, %v574
      %v582 = vadd.f32 %v562, %v574
      %v583 = vadd.f32 %v563, %v574
      %v584 = vmax.f32 %v576, 0.0
      %v585 = vmax.f32 %v577, 0.0
      %v586 = vmax.f32 %v578, 0.0
      %v587 = vmax.f32 %v579, 0.0
      %v588 = vmax.f32 %v580, 0.0
      %v589 = vmax.f32 %v581, 0.0
      %v590 = vmax.f32 %v582, 0.0
      %v591 = vmax.f32 %v583, 0.0
      %v592 = vpack.c.bf16 %v588, %v584
      %v593 = vpack.c.bf16 %v589, %v585
      %v594 = vpack.c.bf16 %v590, %v586
      %v595 = vpack.c.bf16 %v591, %v587
      %v600 = vunpack.c.l.b16 %v592
      %v601 = vunpack.c.l.b16 %v593
      %v602 = vunpack.c.l.b16 %v594
      %v603 = vunpack.c.l.b16 %v595
      %v604 = vunpack.c.h.b16 %v592
      %v605 = vunpack.c.h.b16 %v593
      %v606 = vunpack.c.h.b16 %v594
      %v607 = vunpack.c.h.b16 %v595
      %v608 = vpack.c.b16 %v601, %v600
      %v609 = vpack.c.b16 %v603, %v602
      %v610 = vpack.c.b16 %v605, %v604
      %v611 = vpack.c.b16 %v607, %v606
      %616 = vst [vmem:[%s255] sm:$0xff] %v608
      %617 = vst [vmem:[%s255 + $0x8] sm:$0xff] %v609
      %618 = vst [vmem:[%s255 + $0x10] sm:$0xff] %v610
      %619 = vst [vmem:[%s255 + $0x18] sm:$0xff] %v611
      %s620 = smul.u32 4, %s20
      %p621 = scmp.lt.s32.totalorder %s19, 3
      %s622 = scalar_select %p621, %s19, 3
      %p623 = scmp.lt.s32.totalorder %s620, 3
      %s624 = scalar_select %p623, %s620, 3
      %s625 = smul.addr %s622, 8
      %s626 = sadd.s32 %s624, %s625
      %s627 = smul.addr %s626, 4
      %s628 = scalar_lea.vmem %s4, %s627
      // Predicated region
      $region37: #{netG_forward.8} parent=35 // pred_check
        %p629 = pneg %p143
      $region38: #{netG_forward.8} parent=35 // pred_check_branch
        %631 = sbr.rel (%p629) target = $region40
      $region39: #{netG_forward.8} parent=35 // pred_region
        %s632 = smul.u32 4, %s20
      $region40: #{netG_forward.8} parent=35 // pred_fallthru
        _
    $region36: #{netG_forward.8} parent=5 // pred_fallthru
      _
    %p633 = scmp.le.s32.totalorder 2, %s10
    // Predicated region
    $region41: #{netG_forward.8} parent=5 // pred_check
      %p634 = pneg %p633
    $region42: #{netG_forward.8} parent=5 // pred_check_branch
      %636 = sbr.rel (%p634) target = $region44
    $region43: #{netG_forward.8} parent=5 // pred_region
      %s637 = ssub.s32 %s10, 2
      // Predicated region
      $region45: #{netG_forward.8} parent=43 // pred_check
        %p638 = pneg %p149
      $region46: #{netG_forward.8} parent=43 // pred_check_branch
        %640 = sbr.rel (%p638) target = $region48
      $region47: #{netG_forward.8} parent=43 // pred_region
        %s641 = smul.u32 4, %s22
        %p642 = scmp.lt.s32.totalorder %s21, 3
        %s643 = scalar_select %p642, %s21, 3
        %p644 = scmp.lt.s32.totalorder %s641, 3
        %s645 = scalar_select %p644, %s641, 3
        %s646 = smul.addr %s643, 8
        %s647 = sadd.s32 %s645, %s646
        %s648 = smul.addr %s647, 4
        %s649 = scalar_lea.vmem %s4, %s648
      $region48: #{netG_forward.8} parent=43 // pred_fallthru
        _
    $region44: #{netG_forward.8} parent=5 // pred_fallthru
      _
  $region6: #{netG_forward.8} parent=0 // loop_footer
    %s14 = sadd.s32 1, %s10
  $region7: #{netG_forward.8} parent=0 // loop_footer_branch
    %9 = sbr.rel target = $region3
  $region8: #{netG_forward.8} parent=0 // loop_exit
    _

// kernel: netG_forward.9
$region0: #{netG_forward.9}
  #allocation0 [shape = 'u32[]', space=smem, size = 0x4, offset = 0x4, fixed_abs, tag = 'smem constant byte address 0x4 - core index']
  #allocation1 [shape = 'u32[144,128]{1,0:T(1,128)}', space=vmem, size = 0x12000, scoped, tag = 'internal scratch']
  %s0 = inlined_call_operand.vmem [shape: bf16[4,3,64], index: 0, kind: input, shape index: {}]
  %s1 = inlined_call_operand.vmem [shape: bf16[4,64,2048], index: 1, kind: input, shape index: {}]
  %s2 = inlined_call_operand.vmem [shape: f32[3,1], index: 2, kind: input, shape index: {}]
  %s3 = inlined_call_operand.vmem [shape: f32[3,1], index: 3, kind: input, shape index: {}]
  %s4 = inlined_call_operand.vmem [shape: f32[4,3,2048], index: 4, kind: output, shape index: {}]
  %s5 = sld [smem:[#allocation0]]
  $region49: #{netG_forward.9} parent=0
    _
  %s7 = ssub.s32 1, %s5
  %s8 = scalar_select 0, %s7, %s5
  loop: start=0, step=1, limit=6
  $region2: #{netG_forward.9} parent=0 // loop_pre_header
    _
  $region3: #{netG_forward.9} parent=0 // loop_header
    %s10 = sphi 0, %s14
    %p11 = scmp.ge.s32.totalorder %s10, 6
    %s17 = sphi 0, %s29
    %s18 = sphi 0, %s25
    %s19 = sphi 0, %s17
    %s20 = sphi 0, %s18
    %s21 = sphi 0, %s19
    %s22 = sphi 0, %s20
    %s32 = sphi 0, %s34
    %s35 = sphi 0, %s32
    %s36 = sphi 0, %s35
    %s52 = sphi 0, %s36
    %s60 = sphi 0, %s62
    %s63 = sphi 0, %s60
    %s64 = sphi 0, %s63
    %s80 = sphi 0, %s64
    %s84 = sphi 0, %s84
    %s86 = sphi 0, %s84
    %s87 = sphi 0, %s86
    %s101 = sphi 0, %s87
    %s105 = sphi 0, %s105
    %s107 = sphi 0, %s105
    %s108 = sphi 0, %s107
    %s122 = sphi 0, %s108
    %s130 = sphi 0, %s132
    %s133 = sphi 0, %s130
    %s134 = sphi 0, %s133
    %s150 = sphi 0, %s134
  $region4: #{netG_forward.9} parent=0 // loop_header_branch
    %13 = sbr.rel (%p11) target = $region8
  $region5: #{netG_forward.9} parent=0 // loop_body
    %s15 = ssub.s32 %s10, 1
    %s16 = ssub.s32 %s10, 2
    %s23 = sadd.s32 1, %s18
    %p24 = scmp.ge.s32.totalorder %s23, 1
    %s25 = scalar_select %p24, 0, %s23
    %s26 = sadd.s32 1, %s17
    %s27 = scalar_select %p24, %s26, %s17
    %p28 = scmp.ge.s32.totalorder %s27, 4
    %s29 = scalar_select %p28, 0, %s27
    %s30 = ssub.s32 %s17, %s29
    %p31 = scmp.eq.s32.totalorder %s30, 0
    %s33 = sadd.s32 %s32, 1
    %s34 = scalar_select %p31, %s32, %s33
    %p37 = pneg %p31
    %p38 = scmp.eq.s32.totalorder %s10, 3
    %p39 = por %p37, %p38
    %p40 = scmp.ne.s32.totalorder %s32, %s35
    %p41 = scmp.eq.s32.totalorder %s10, 0
    %p42 = por %p40, %p41
    %p43 = scmp.ne.s32.totalorder %s32, %s35
    %p44 = scmp.eq.s32.totalorder %s15, 3
    %p45 = por %p43, %p44
    %p46 = scmp.ne.s32.totalorder %s35, %s36
    %p47 = scmp.eq.s32.totalorder %s15, 0
    %p48 = por %p46, %p47
    %p49 = scmp.ne.s32.totalorder %s35, %s36
    %p50 = scmp.eq.s32.totalorder %s16, 3
    %p51 = por %p49, %p50
    %p53 = scmp.ne.s32.totalorder %s36, %s52
    %p54 = scmp.eq.s32.totalorder %s16, 0
    %p55 = por %p53, %p54
    %s56 = ssub.s32 %s17, %s29
    %s57 = ssub.s32 %s18, %s25
    %s58 = sor.u32 %s56, %s57
    %p59 = scmp.eq.s32.totalorder %s58, 0
    %s61 = sadd.s32 %s60, 1
    %s62 = scalar_select %p59, %s60, %s61
    %p65 = pneg %p59
    %p66 = scmp.eq.s32.totalorder %s10, 3
    %p67 = por %p65, %p66
    %p68 = scmp.ne.s32.totalorder %s60, %s63
    %p69 = scmp.eq.s32.totalorder %s10, 0
    %p70 = por %p68, %p69
    %p71 = scmp.ne.s32.totalorder %s60, %s63
    %p72 = scmp.eq.s32.totalorder %s15, 3
    %p73 = por %p71, %p72
    %p74 = scmp.ne.s32.totalorder %s63, %s64
    %p75 = scmp.eq.s32.totalorder %s15, 0
    %p76 = por %p74, %p75
    %p77 = scmp.ne.s32.totalorder %s63, %s64
    %p78 = scmp.eq.s32.totalorder %s16, 3
    %p79 = por %p77, %p78
    %p81 = scmp.ne.s32.totalorder %s64, %s80
    %p82 = scmp.eq.s32.totalorder %s16, 0
    %p83 = por %p81, %p82
    %s85 = sadd.s32 %s84, 1
    %p88 = scmp.eq.s32.totalorder %s10, 3
    %p89 = scmp.ne.s32.totalorder %s84, %s86
    %p90 = scmp.eq.s32.totalorder %s10, 0
    %p91 = por %p89, %p90
    %p92 = scmp.ne.s32.totalorder %s84, %s86
    %p93 = scmp.eq.s32.totalorder %s15, 3
    %p94 = por %p92, %p93
    %p95 = scmp.ne.s32.totalorder %s86, %s87
    %p96 = scmp.eq.s32.totalorder %s15, 0
    %p97 = por %p95, %p96
    %p98 = scmp.ne.s32.totalorder %s86, %s87
    %p99 = scmp.eq.s32.totalorder %s16, 3
    %p100 = por %p98, %p99
    %p102 = scmp.ne.s32.totalorder %s87, %s101
    %p103 = scmp.eq.s32.totalorder %s16, 0
    %p104 = por %p102, %p103
    %s106 = sadd.s32 %s105, 1
    %p109 = scmp.eq.s32.totalorder %s10, 3
    %p110 = scmp.ne.s32.totalorder %s105, %s107
    %p111 = scmp.eq.s32.totalorder %s10, 0
    %p112 = por %p110, %p111
    %p113 = scmp.ne.s32.totalorder %s105, %s107
    %p114 = scmp.eq.s32.totalorder %s15, 3
    %p115 = por %p113, %p114
    %p116 = scmp.ne.s32.totalorder %s107, %s108
    %p117 = scmp.eq.s32.totalorder %s15, 0
    %p118 = por %p116, %p117
    %p119 = scmp.ne.s32.totalorder %s107, %s108
    %p120 = scmp.eq.s32.totalorder %s16, 3
    %p121 = por %p119, %p120
    %p123 = scmp.ne.s32.totalorder %s108, %s122
    %p124 = scmp.eq.s32.totalorder %s16, 0
    %p125 = por %p123, %p124
    %s126 = ssub.s32 %s17, %s29
    %s127 = ssub.s32 %s18, %s25
    %s128 = sor.u32 %s126, %s127
    %p129 = scmp.eq.s32.totalorder %s128, 0
    %s131 = sadd.s32 %s130, 1
    %s132 = scalar_select %p129, %s130, %s131
    %p135 = pneg %p129
    %p136 = scmp.eq.s32.totalorder %s10, 3
    %p137 = por %p135, %p136
    %p138 = scmp.ne.s32.totalorder %s130, %s133
    %p139 = scmp.eq.s32.totalorder %s10, 0
    %p140 = por %p138, %p139
    %p141 = scmp.ne.s32.totalorder %s130, %s133
    %p142 = scmp.eq.s32.totalorder %s15, 3
    %p143 = por %p141, %p142
    %p144 = scmp.ne.s32.totalorder %s133, %s134
    %p145 = scmp.eq.s32.totalorder %s15, 0
    %p146 = por %p144, %p145
    %p147 = scmp.ne.s32.totalorder %s133, %s134
    %p148 = scmp.eq.s32.totalorder %s16, 3
    %p149 = por %p147, %p148
    %p151 = scmp.ne.s32.totalorder %s134, %s150
    %p152 = scmp.eq.s32.totalorder %s16, 0
    %p153 = por %p151, %p152
    %p154 = scmp.le.s32.totalorder 1, %s10
    %p155 = scmp.lt.s32.totalorder %s10, 5
    %p156 = pnand %p154, %p155
    %p157 = pneg %p156
    // Predicated region
    $region9: #{netG_forward.9} parent=5 // pred_check
      _
    $region10: #{netG_forward.9} parent=5 // pred_check_branch
      %159 = sbr.rel (%p156) target = $region12
    $region11: #{netG_forward.9} parent=5 // pred_region
      %s160 = ssub.s32 %s10, 1
      // Predicated region
      $region13: #{netG_forward.9} parent=11 // pred_check
        %p161 = pneg %p97
      $region14: #{netG_forward.9} parent=11 // pred_check_branch
        %163 = sbr.rel (%p161) target = $region16
      $region15: #{netG_forward.9} parent=11 // pred_region
        _
      $region16: #{netG_forward.9} parent=11 // pred_fallthru
        _
      // Predicated region
      $region17: #{netG_forward.9} parent=11 // pred_check
        %p164 = pneg %p118
      $region18: #{netG_forward.9} parent=11 // pred_check_branch
        %166 = sbr.rel (%p164) target = $region20
      $region19: #{netG_forward.9} parent=11 // pred_region
        _
      $region20: #{netG_forward.9} parent=11 // pred_fallthru
        _
    $region12: #{netG_forward.9} parent=5 // pred_fallthru
      _
    %p167 = scmp.lt.s32.totalorder %s10, 4
    // Predicated region
    $region21: #{netG_forward.9} parent=5 // pred_check
      %p168 = pneg %p167
    $region22: #{netG_forward.9} parent=5 // pred_check_branch
      %170 = sbr.rel (%p168) target = $region24
    $region23: #{netG_forward.9} parent=5 // pred_region
      // Predicated region
      $region25: #{netG_forward.9} parent=23 // pred_check
        %p171 = pneg %p42
      $region26: #{netG_forward.9} parent=23 // pred_check_branch
        %173 = sbr.rel (%p171) target = $region28
      $region27: #{netG_forward.9} parent=23 // pred_region
        %p174 = scmp.lt.s32.totalorder %s17, 3
        %s175 = scalar_select %p174, %s17, 3
        %s176 = smul.addr %s175, 2
        %s177 = scalar_lea.vmem %s0, %s176
      $region28: #{netG_forward.9} parent=23 // pred_fallthru
        _
      // Predicated region
      $region29: #{netG_forward.9} parent=23 // pred_check
        %p178 = pneg %p70
      $region30: #{netG_forward.9} parent=23 // pred_check_branch
        %180 = sbr.rel (%p178) target = $region32
      $region31: #{netG_forward.9} parent=23 // pred_region
        %s181 = smul.u32 16, %s18
        %p182 = scmp.lt.s32.totalorder %s17, 3
        %s183 = scalar_select %p182, %s17, 3
        %p184 = scmp.lt.s32.totalorder %s181, 15
        %s185 = scalar_select %p184, %s181, 15
        %s186 = smul.addr %s183, 128
        %s187 = sadd.s32 %s185, %s186
        %s188 = smul.addr %s187, 4
        %s189 = scalar_lea.vmem %s1, %s188
        %s190 = smul.u32 16, %s18
      $region32: #{netG_forward.9} parent=23 // pred_fallthru
        _
    $region24: #{netG_forward.9} parent=5 // pred_fallthru
      _
    %p191 = scmp.le.s32.totalorder 1, %s10
    %p192 = scmp.lt.s32.totalorder %s10, 5
    %p193 = pnand %p191, %p192
    %p194 = pneg %p193
    // Predicated region
    $region33: #{netG_forward.9} parent=5 // pred_check
      _
    $region34: #{netG_forward.9} parent=5 // pred_check_branch
      %196 = sbr.rel (%p193) target = $region36
    $region35: #{netG_forward.9} parent=5 // pred_region
      %s197 = ssub.s32 %s10, 1
      %p198 = scmp.lt.s32.totalorder %s19, 3
      %s199 = scalar_select %p198, %s19, 3
      %s200 = smul.addr %s199, 2
      %s201 = scalar_lea.vmem %s0, %s200
      %p202 = pneg %p48
      %p203 = pneg %p45
      %s204 = smul.u32 16, %s20
      %p205 = scmp.lt.s32.totalorder %s19, 3
      %s206 = scalar_select %p205, %s19, 3
      %p207 = scmp.lt.s32.totalorder %s204, 15
      %s208 = scalar_select %p207, %s204, 15
      %s209 = smul.addr %s206, 128
      %s210 = sadd.s32 %s208, %s209
      %s211 = smul.addr %s210, 4
      %s212 = scalar_lea.vmem %s1, %s211
      %p213 = pneg %p76
      %p214 = pneg %p73
      %p215 = pneg %p97
      %p216 = pneg %p94
      %p217 = pneg %p118
      %p218 = pneg %p115
      %p219 = pneg %p146
      %p220 = pneg %p143
      %s221 = smul.u32 16, %s20
      %p222 = scmp.lt.s32.totalorder %s19, 3
      %s223 = scalar_select %p222, %s19, 3
      %p224 = scmp.lt.s32.totalorder %s221, 15
      %s225 = scalar_select %p224, %s221, 15
      %s226 = smul.addr %s223, 16
      %s227 = sadd.s32 %s225, %s226
      %s228 = smul.addr %s227, 4
      %s229 = scalar_lea.vmem %s4, %s228
      %p230 = scmp.lt.s32.totalorder %s19, 3
      %s231 = scalar_select %p230, %s19, 3
      %s232 = smul.addr %s231, 2
      %s233 = scalar_lea.vmem %s0, %s232
      %s234 = smul.u32 16, %s20
      %p235 = scmp.lt.s32.totalorder %s19, 3
      %s236 = scalar_select %p235, %s19, 3
      %p237 = scmp.lt.s32.totalorder %s234, 15
      %s238 = scalar_select %p237, %s234, 15
      %s239 = smul.addr %s236, 128
      %s240 = sadd.s32 %s238, %s239
      %s241 = smul.addr %s240, 4
      %s242 = scalar_lea.vmem %s1, %s241
      %s243 = smul.u32 16, %s20
      %s244 = smul.u32 16, %s20
      %p245 = scmp.lt.s32.totalorder %s19, 3
      %s246 = scalar_select %p245, %s19, 3
      %p247 = scmp.lt.s32.totalorder %s244, 15
      %s248 = scalar_select %p247, %s244, 15
      %s249 = smul.addr %s246, 16
      %s250 = sadd.s32 %s248, %s249
      %s251 = smul.addr %s250, 4
      %s252 = scalar_lea.vmem %s4, %s251
      %s253 = smul.u32 16, %s20
      %v255 = vld [vmem:[%s233] sm:$0x3]
      %v256 = vld [vmem:[%s242] sm:$0xff]
      %v257 = vld [vmem:[%s242 + $0x8] sm:$0xff]
      %v258 = vld [vmem:[%s242 + $0x10] sm:$0xff]
      %v259 = vld [vmem:[%s242 + $0x18] sm:$0xff]
      %v260 = vld [vmem:[%s242 + $0x20] sm:$0xff]
      %v261 = vld [vmem:[%s242 + $0x28] sm:$0xff]
      %v262 = vld [vmem:[%s242 + $0x30] sm:$0xff]
      %v263 = vld [vmem:[%s242 + $0x38] sm:$0xff]
      %v264 = vld [vmem:[%s242 + $0x40] sm:$0xff]
      %v265 = vld [vmem:[%s242 + $0x48] sm:$0xff]
      %v266 = vld [vmem:[%s242 + $0x50] sm:$0xff]
      %v267 = vld [vmem:[%s242 + $0x58] sm:$0xff]
      %v268 = vld [vmem:[%s242 + $0x60] sm:$0xff]
      %v269 = vld [vmem:[%s242 + $0x68] sm:$0xff]
      %v270 = vld [vmem:[%s242 + $0x70] sm:$0xff]
      %v271 = vld [vmem:[%s242 + $0x78] sm:$0xff]
      %v272 = vld [vmem:[%s242 + $0x80] sm:$0xff]
      %v273 = vld [vmem:[%s242 + $0x88] sm:$0xff]
      %v274 = vld [vmem:[%s242 + $0x90] sm:$0xff]
      %v275 = vld [vmem:[%s242 + $0x98] sm:$0xff]
      %v276 = vld [vmem:[%s242 + $0xa0] sm:$0xff]
      %v277 = vld [vmem:[%s242 + $0xa8] sm:$0xff]
      %v278 = vld [vmem:[%s242 + $0xb0] sm:$0xff]
      %v279 = vld [vmem:[%s242 + $0xb8] sm:$0xff]
      %v280 = vld [vmem:[%s242 + $0xc0] sm:$0xff]
      %v281 = vld [vmem:[%s242 + $0xc8] sm:$0xff]
      %v282 = vld [vmem:[%s242 + $0xd0] sm:$0xff]
      %v283 = vld [vmem:[%s242 + $0xd8] sm:$0xff]
      %v284 = vld [vmem:[%s242 + $0xe0] sm:$0xff]
      %v285 = vld [vmem:[%s242 + $0xe8] sm:$0xff]
      %v286 = vld [vmem:[%s242 + $0xf0] sm:$0xff]
      %v287 = vld [vmem:[%s242 + $0xf8] sm:$0xff]
      %v288 = vld [vmem:[%s242 + $0x100] sm:$0xff]
      %v289 = vld [vmem:[%s242 + $0x108] sm:$0xff]
      %v290 = vld [vmem:[%s242 + $0x110] sm:$0xff]
      %v291 = vld [vmem:[%s242 + $0x118] sm:$0xff]
      %v292 = vld [vmem:[%s242 + $0x120] sm:$0xff]
      %v293 = vld [vmem:[%s242 + $0x128] sm:$0xff]
      %v294 = vld [vmem:[%s242 + $0x130] sm:$0xff]
      %v295 = vld [vmem:[%s242 + $0x138] sm:$0xff]
      %v296 = vld [vmem:[%s242 + $0x140] sm:$0xff]
      %v297 = vld [vmem:[%s242 + $0x148] sm:$0xff]
      %v298 = vld [vmem:[%s242 + $0x150] sm:$0xff]
      %v299 = vld [vmem:[%s242 + $0x158] sm:$0xff]
      %v300 = vld [vmem:[%s242 + $0x160] sm:$0xff]
      %v301 = vld [vmem:[%s242 + $0x168] sm:$0xff]
      %v302 = vld [vmem:[%s242 + $0x170] sm:$0xff]
      %v303 = vld [vmem:[%s242 + $0x178] sm:$0xff]
      %v304 = vld [vmem:[%s242 + $0x180] sm:$0xff]
      %v305 = vld [vmem:[%s242 + $0x188] sm:$0xff]
      %v306 = vld [vmem:[%s242 + $0x190] sm:$0xff]
      %v307 = vld [vmem:[%s242 + $0x198] sm:$0xff]
      %v308 = vld [vmem:[%s242 + $0x1a0] sm:$0xff]
      %v309 = vld [vmem:[%s242 + $0x1a8] sm:$0xff]
      %v310 = vld [vmem:[%s242 + $0x1b0] sm:$0xff]
      %v311 = vld [vmem:[%s242 + $0x1b8] sm:$0xff]
      %v312 = vld [vmem:[%s242 + $0x1c0] sm:$0xff]
      %v313 = vld [vmem:[%s242 + $0x1c8] sm:$0xff]
      %v314 = vld [vmem:[%s242 + $0x1d0] sm:$0xff]
      %v315 = vld [vmem:[%s242 + $0x1d8] sm:$0xff]
      %v316 = vld [vmem:[%s242 + $0x1e0] sm:$0xff]
      %v317 = vld [vmem:[%s242 + $0x1e8] sm:$0xff]
      %v318 = vld [vmem:[%s242 + $0x1f0] sm:$0xff]
      %v319 = vld [vmem:[%s242 + $0x1f8] sm:$0xff]
      %v384 = vunpack.c.l.b16 %v256
      %v385 = vunpack.c.h.b16 %v256
      %v386 = vunpack.c.l.b16 %v257
      %v387 = vunpack.c.h.b16 %v257
      %v388 = vunpack.c.l.b16 %v258
      %v389 = vunpack.c.h.b16 %v258
      %v390 = vunpack.c.l.b16 %v259
      %v391 = vunpack.c.h.b16 %v259
      %v392 = vunpack.c.l.b16 %v260
      %v393 = vunpack.c.h.b16 %v260
      %v394 = vunpack.c.l.b16 %v261
      %v395 = vunpack.c.h.b16 %v261
      %v396 = vunpack.c.l.b16 %v262
      %v397 = vunpack.c.h.b16 %v262
      %v398 = vunpack.c.l.b16 %v263
      %v399 = vunpack.c.h.b16 %v263
      %v400 = vunpack.c.l.b16 %v264
      %v401 = vunpack.c.h.b16 %v264
      %v402 = vunpack.c.l.b16 %v265
      %v403 = vunpack.c.h.b16 %v265
      %v404 = vunpack.c.l.b16 %v266
      %v405 = vunpack.c.h.b16 %v266
      %v406 = vunpack.c.l.b16 %v267
      %v407 = vunpack.c.h.b16 %v267
      %v408 = vunpack.c.l.b16 %v268
      %v409 = vunpack.c.h.b16 %v268
      %v410 = vunpack.c.l.b16 %v269
      %v411 = vunpack.c.h.b16 %v269
      %v412 = vunpack.c.l.b16 %v270
      %v413 = vunpack.c.h.b16 %v270
      %v414 = vunpack.c.l.b16 %v271
      %v415 = vunpack.c.h.b16 %v271
      %v416 = vunpack.c.l.b16 %v272
      %v417 = vunpack.c.h.b16 %v272
      %v418 = vunpack.c.l.b16 %v273
      %v419 = vunpack.c.h.b16 %v273
      %v420 = vunpack.c.l.b16 %v274
      %v421 = vunpack.c.h.b16 %v274
      %v422 = vunpack.c.l.b16 %v275
      %v423 = vunpack.c.h.b16 %v275
      %v424 = vunpack.c.l.b16 %v276
      %v425 = vunpack.c.h.b16 %v276
      %v426 = vunpack.c.l.b16 %v277
      %v427 = vunpack.c.h.b16 %v277
      %v428 = vunpack.c.l.b16 %v278
      %v429 = vunpack.c.h.b16 %v278
      %v430 = vunpack.c.l.b16 %v279
      %v431 = vunpack.c.h.b16 %v279
      %v432 = vunpack.c.l.b16 %v280
      %v433 = vunpack.c.h.b16 %v280
      %v434 = vunpack.c.l.b16 %v281
      %v435 = vunpack.c.h.b16 %v281
      %v436 = vunpack.c.l.b16 %v282
      %v437 = vunpack.c.h.b16 %v282
      %v438 = vunpack.c.l.b16 %v283
      %v439 = vunpack.c.h.b16 %v283
      %v440 = vunpack.c.l.b16 %v284
      %v441 = vunpack.c.h.b16 %v284
      %v442 = vunpack.c.l.b16 %v285
      %v443 = vunpack.c.h.b16 %v285
      %v444 = vunpack.c.l.b16 %v286
      %v445 = vunpack.c.h.b16 %v286
      %v446 = vunpack.c.l.b16 %v287
      %v447 = vunpack.c.h.b16 %v287
      %v448 = vunpack.c.l.b16 %v288
      %v449 = vunpack.c.h.b16 %v288
      %v450 = vunpack.c.l.b16 %v289
      %v451 = vunpack.c.h.b16 %v289
      %v452 = vunpack.c.l.b16 %v290
      %v453 = vunpack.c.h.b16 %v290
      %v454 = vunpack.c.l.b16 %v291
      %v455 = vunpack.c.h.b16 %v291
      %v456 = vunpack.c.l.b16 %v292
      %v457 = vunpack.c.h.b16 %v292
      %v458 = vunpack.c.l.b16 %v293
      %v459 = vunpack.c.h.b16 %v293
      %v460 = vunpack.c.l.b16 %v294
      %v461 = vunpack.c.h.b16 %v294
      %v462 = vunpack.c.l.b16 %v295
      %v463 = vunpack.c.h.b16 %v295
      %v464 = vunpack.c.l.b16 %v296
      %v465 = vunpack.c.h.b16 %v296
      %v466 = vunpack.c.l.b16 %v297
      %v467 = vunpack.c.h.b16 %v297
      %v468 = vunpack.c.l.b16 %v298
      %v469 = vunpack.c.h.b16 %v298
      %v470 = vunpack.c.l.b16 %v299
      %v471 = vunpack.c.h.b16 %v299
      %v472 = vunpack.c.l.b16 %v300
      %v473 = vunpack.c.h.b16 %v300
      %v474 = vunpack.c.l.b16 %v301
      %v475 = vunpack.c.h.b16 %v301
      %v476 = vunpack.c.l.b16 %v302
      %v477 = vunpack.c.h.b16 %v302
      %v478 = vunpack.c.l.b16 %v303
      %v479 = vunpack.c.h.b16 %v303
      %v480 = vunpack.c.l.b16 %v304
      %v481 = vunpack.c.h.b16 %v304
      %v482 = vunpack.c.l.b16 %v305
      %v483 = vunpack.c.h.b16 %v305
      %v484 = vunpack.c.l.b16 %v306
      %v485 = vunpack.c.h.b16 %v306
      %v486 = vunpack.c.l.b16 %v307
      %v487 = vunpack.c.h.b16 %v307
      %v488 = vunpack.c.l.b16 %v308
      %v489 = vunpack.c.h.b16 %v308
      %v490 = vunpack.c.l.b16 %v309
      %v491 = vunpack.c.h.b16 %v309
      %v492 = vunpack.c.l.b16 %v310
      %v493 = vunpack.c.h.b16 %v310
      %v494 = vunpack.c.l.b16 %v311
      %v495 = vunpack.c.h.b16 %v311
      %v496 = vunpack.c.l.b16 %v312
      %v497 = vunpack.c.h.b16 %v312
      %v498 = vunpack.c.l.b16 %v313
      %v499 = vunpack.c.h.b16 %v313
      %v500 = vunpack.c.l.b16 %v314
      %v501 = vunpack.c.h.b16 %v314
      %v502 = vunpack.c.l.b16 %v315
      %v503 = vunpack.c.h.b16 %v315
      %v504 = vunpack.c.l.b16 %v316
      %v505 = vunpack.c.h.b16 %v316
      %v506 = vunpack.c.l.b16 %v317
      %v507 = vunpack.c.h.b16 %v317
      %v508 = vunpack.c.l.b16 %v318
      %v509 = vunpack.c.h.b16 %v318
      %v510 = vunpack.c.l.b16 %v319
      %v511 = vunpack.c.h.b16 %v319
      %v512 = vpack.c.b16 %v400, %v384
      %v513 = vpack.c.b16 %v401, %v385
      %v514 = vpack.c.b16 %v402, %v386
      %v515 = vpack.c.b16 %v403, %v387
      %v516 = vpack.c.b16 %v404, %v388
      %v517 = vpack.c.b16 %v405, %v389
      %v518 = vpack.c.b16 %v406, %v390
      %v519 = vpack.c.b16 %v407, %v391
      %v520 = vpack.c.b16 %v408, %v392
      %v521 = vpack.c.b16 %v409, %v393
      %v522 = vpack.c.b16 %v410, %v394
      %v523 = vpack.c.b16 %v411, %v395
      %v524 = vpack.c.b16 %v412, %v396
      %v525 = vpack.c.b16 %v413, %v397
      %v526 = vpack.c.b16 %v414, %v398
      %v527 = vpack.c.b16 %v415, %v399
      %v528 = vpack.c.b16 %v432, %v416
      %v529 = vpack.c.b16 %v433, %v417
      %v530 = vpack.c.b16 %v434, %v418
      %v531 = vpack.c.b16 %v435, %v419
      %v532 = vpack.c.b16 %v436, %v420
      %v533 = vpack.c.b16 %v437, %v421
      %v534 = vpack.c.b16 %v438, %v422
      %v535 = vpack.c.b16 %v439, %v423
      %v536 = vpack.c.b16 %v440, %v424
      %v537 = vpack.c.b16 %v441, %v425
      %v538 = vpack.c.b16 %v442, %v426
      %v539 = vpack.c.b16 %v443, %v427
      %v540 = vpack.c.b16 %v444, %v428
      %v541 = vpack.c.b16 %v445, %v429
      %v542 = vpack.c.b16 %v446, %v430
      %v543 = vpack.c.b16 %v447, %v431
      %v544 = vpack.c.b16 %v464, %v448
      %v545 = vpack.c.b16 %v465, %v449
      %v546 = vpack.c.b16 %v466, %v450
      %v547 = vpack.c.b16 %v467, %v451
      %v548 = vpack.c.b16 %v468, %v452
      %v549 = vpack.c.b16 %v469, %v453
      %v550 = vpack.c.b16 %v470, %v454
      %v551 = vpack.c.b16 %v471, %v455
      %v552 = vpack.c.b16 %v472, %v456
      %v553 = vpack.c.b16 %v473, %v457
      %v554 = vpack.c.b16 %v474, %v458
      %v555 = vpack.c.b16 %v475, %v459
      %v556 = vpack.c.b16 %v476, %v460
      %v557 = vpack.c.b16 %v477, %v461
      %v558 = vpack.c.b16 %v478, %v462
      %v559 = vpack.c.b16 %v479, %v463
      %v560 = vpack.c.b16 %v496, %v480
      %v561 = vpack.c.b16 %v497, %v481
      %v562 = vpack.c.b16 %v498, %v482
      %v563 = vpack.c.b16 %v499, %v483
      %v564 = vpack.c.b16 %v500, %v484
      %v565 = vpack.c.b16 %v501, %v485
      %v566 = vpack.c.b16 %v502, %v486
      %v567 = vpack.c.b16 %v503, %v487
      %v568 = vpack.c.b16 %v504, %v488
      %v569 = vpack.c.b16 %v505, %v489
      %v570 = vpack.c.b16 %v506, %v490
      %v571 = vpack.c.b16 %v507, %v491
      %v572 = vpack.c.b16 %v508, %v492
      %v573 = vpack.c.b16 %v509, %v493
      %v574 = vpack.c.b16 %v510, %v494
      %v575 = vpack.c.b16 %v511, %v495
      %vm640 = vcmask 523264
      %v642 = vsel %vm640, %v255, 0
      %644 = vmatprep.subr.bf16.mxu0 0
      %645 = vmatpush1.bf16.msra.mxu0 0
      %646 = vmatprep.subr.bf16.mxu0 0
      %647 = vmatpush1.bf16.msra.mxu0 0
      %648 = vmatprep.subr.bf16.mxu0 0
      %649 = vmatpush1.bf16.msra.mxu0 0
      %650 = vmatprep.subr.bf16.mxu0 0
      %651 = vmatpush1.bf16.msra.mxu0 0
      %652 = vmatprep.subr.bf16.mxu0 %v561
      %653 = vmatpush1.bf16.msra.mxu0 %v560
      %654 = vmatprep.subr.bf16.mxu0 %v545
      %655 = vmatpush1.bf16.msra.mxu0 %v544
      %656 = vmatprep.subr.bf16.mxu0 %v529
      %657 = vmatpush1.bf16.msra.mxu0 %v528
      %658 = vmatprep.subr.bf16.mxu0 %v513
      %659 = vmatpush1.bf16.msra.mxu0 %v512
      %660 = vmatprep.subr.bf16.mxu0 0
      %661 = vmatpush2.bf16.msra.mxu0 0
      %662 = vmatprep.subr.bf16.mxu0 0
      %663 = vmatpush2.bf16.msra.mxu0 0
      %664 = vmatprep.subr.bf16.mxu0 0
      %665 = vmatpush2.bf16.msra.mxu0 0
      %666 = vmatprep.subr.bf16.mxu0 0
      %667 = vmatpush2.bf16.msra.mxu0 0
      %668 = vmatprep.subr.bf16.mxu0 0
      %669 = vmatpush2.bf16.msra.mxu0 0
      %670 = vmatprep.subr.bf16.mxu0 0
      %671 = vmatpush2.bf16.msra.mxu0 0
      %672 = vmatprep.subr.bf16.mxu0 0
      %673 = vmatpush2.bf16.msra.mxu0 0
      %674 = vmatprep.subr.bf16.mxu0 0
      %675 = vmatpush2.bf16.msra.mxu0 0
      %676 = vmatprep.mubr.bf16.mxu0 0
      %677 = vmatmul.mubr.bf16.gmra.mxu0 %v642
      %v678 = vpop.f32.mrf.mxu0
      %v679 = vadd.f32 0.0, %v678
      %v680 = vpop.f32.mrf.mxu0
      %v681 = vadd.f32 0.0, %v680
      %v682 = vpop.f32.mrf.mxu0
      %v683 = vpop.f32.mrf.mxu0
      %684 = vdwg.mxu0
      %685 = vmatprep.subr.bf16.mxu0 0
      %686 = vmatpush1.bf16.msra.mxu0 0
      %687 = vmatprep.subr.bf16.mxu0 0
      %688 = vmatpush1.bf16.msra.mxu0 0
      %689 = vmatprep.subr.bf16.mxu0 0
      %690 = vmatpush1.bf16.msra.mxu0 0
      %691 = vmatprep.subr.bf16.mxu0 0
      %692 = vmatpush1.bf16.msra.mxu0 0
      %693 = vmatprep.subr.bf16.mxu0 %v563
      %694 = vmatpush1.bf16.msra.mxu0 %v562
      %695 = vmatprep.subr.bf16.mxu0 %v547
      %696 = vmatpush1.bf16.msra.mxu0 %v546
      %697 = vmatprep.subr.bf16.mxu0 %v531
      %698 = vmatpush1.bf16.msra.mxu0 %v530
      %699 = vmatprep.subr.bf16.mxu0 %v515
      %700 = vmatpush1.bf16.msra.mxu0 %v514
      %701 = vmatprep.subr.bf16.mxu0 0
      %702 = vmatpush2.bf16.msra.mxu0 0
      %703 = vmatprep.subr.bf16.mxu0 0
      %704 = vmatpush2.bf16.msra.mxu0 0
      %705 = vmatprep.subr.bf16.mxu0 0
      %706 = vmatpush2.bf16.msra.mxu0 0
      %707 = vmatprep.subr.bf16.mxu0 0
      %708 = vmatpush2.bf16.msra.mxu0 0
      %709 = vmatprep.subr.bf16.mxu0 0
      %710 = vmatpush2.bf16.msra.mxu0 0
      %711 = vmatprep.subr.bf16.mxu0 0
      %712 = vmatpush2.bf16.msra.mxu0 0
      %713 = vmatprep.subr.bf16.mxu0 0
      %714 = vmatpush2.bf16.msra.mxu0 0
      %715 = vmatprep.subr.bf16.mxu0 0
      %716 = vmatpush2.bf16.msra.mxu0 0
      %717 = vmatprep.mubr.bf16.mxu0 0
      %718 = vmatmul.mubr.bf16.gmra.mxu0 %v642
      %v719 = vpop.f32.mrf.mxu0
      %v720 = vadd.f32 0.0, %v719
      %v721 = vpop.f32.mrf.mxu0
      %v722 = vadd.f32 0.0, %v721
      %v723 = vpop.f32.mrf.mxu0
      %v724 = vpop.f32.mrf.mxu0
      %725 = vdwg.mxu0
      %726 = vmatprep.subr.bf16.mxu0 0
      %727 = vmatpush1.bf16.msra.mxu0 0
      %728 = vmatprep.subr.bf16.mxu0 0
      %729 = vmatpush1.bf16.msra.mxu0 0
      %730 = vmatprep.subr.bf16.mxu0 0
      %731 = vmatpush1.bf16.msra.mxu0 0
      %732 = vmatprep.subr.bf16.mxu0 0
      %733 = vmatpush1.bf16.msra.mxu0 0
      %734 = vmatprep.subr.bf16.mxu0 %v565
      %735 = vmatpush1.bf16.msra.mxu0 %v564
      %736 = vmatprep.subr.bf16.mxu0 %v549
      %737 = vmatpush1.bf16.msra.mxu0 %v548
      %738 = vmatprep.subr.bf16.mxu0 %v533
      %739 = vmatpush1.bf16.msra.mxu0 %v532
      %740 = vmatprep.subr.bf16.mxu0 %v517
      %741 = vmatpush1.bf16.msra.mxu0 %v516
      %742 = vmatprep.subr.bf16.mxu0 0
      %743 = vmatpush2.bf16.msra.mxu0 0
      %744 = vmatprep.subr.bf16.mxu0 0
      %745 = vmatpush2.bf16.msra.mxu0 0
      %746 = vmatprep.subr.bf16.mxu0 0
      %747 = vmatpush2.bf16.msra.mxu0 0
      %748 = vmatprep.subr.bf16.mxu0 0
      %749 = vmatpush2.bf16.msra.mxu0 0
      %750 = vmatprep.subr.bf16.mxu0 0
      %751 = vmatpush2.bf16.msra.mxu0 0
      %752 = vmatprep.subr.bf16.mxu0 0
      %753 = vmatpush2.bf16.msra.mxu0 0
      %754 = vmatprep.subr.bf16.mxu0 0
      %755 = vmatpush2.bf16.msra.mxu0 0
      %756 = vmatprep.subr.bf16.mxu0 0
      %757 = vmatpush2.bf16.msra.mxu0 0
      %758 = vmatprep.mubr.bf16.mxu0 0
      %759 = vmatmul.mubr.bf16.gmra.mxu0 %v642
      %v760 = vpop.f32.mrf.mxu0
      %v761 = vadd.f32 0.0, %v760
      %v762 = vpop.f32.mrf.mxu0
      %v763 = vadd.f32 0.0, %v762
      %v764 = vpop.f32.mrf.mxu0
      %v765 = vpop.f32.mrf.mxu0
      %766 = vdwg.mxu0
      %767 = vmatprep.subr.bf16.mxu0 0
      %768 = vmatpush1.bf16.msra.mxu0 0
      %769 = vmatprep.subr.bf16.mxu0 0
      %770 = vmatpush1.bf16.msra.mxu0 0
      %771 = vmatprep.subr.bf16.mxu0 0
      %772 = vmatpush1.bf16.msra.mxu0 0
      %773 = vmatprep.subr.bf16.mxu0 0
      %774 = vmatpush1.bf16.msra.mxu0 0
      %775 = vmatprep.subr.bf16.mxu0 %v567
      %776 = vmatpush1.bf16.msra.mxu0 %v566
      %777 = vmatprep.subr.bf16.mxu0 %v551
      %778 = vmatpush1.bf16.msra.mxu0 %v550
      %779 = vmatprep.subr.bf16.mxu0 %v535
      %780 = vmatpush1.bf16.msra.mxu0 %v534
      %781 = vmatprep.subr.bf16.mxu0 %v519
      %782 = vmatpush1.bf16.msra.mxu0 %v518
      %783 = vmatprep.subr.bf16.mxu0 0
      %784 = vmatpush2.bf16.msra.mxu0 0
      %785 = vmatprep.subr.bf16.mxu0 0
      %786 = vmatpush2.bf16.msra.mxu0 0
      %787 = vmatprep.subr.bf16.mxu0 0
      %788 = vmatpush2.bf16.msra.mxu0 0
      %789 = vmatprep.subr.bf16.mxu0 0
      %790 = vmatpush2.bf16.msra.mxu0 0
      %791 = vmatprep.subr.bf16.mxu0 0
      %792 = vmatpush2.bf16.msra.mxu0 0
      %793 = vmatprep.subr.bf16.mxu0 0
      %794 = vmatpush2.bf16.msra.mxu0 0
      %795 = vmatprep.subr.bf16.mxu0 0
      %796 = vmatpush2.bf16.msra.mxu0 0
      %797 = vmatprep.subr.bf16.mxu0 0
      %798 = vmatpush2.bf16.msra.mxu0 0
      %799 = vmatprep.mubr.bf16.mxu0 0
      %800 = vmatmul.mubr.bf16.gmra.mxu0 %v642
      %v801 = vpop.f32.mrf.mxu0
      %v802 = vadd.f32 0.0, %v801
      %v803 = vpop.f32.mrf.mxu0
      %v804 = vadd.f32 0.0, %v803
      %v805 = vpop.f32.mrf.mxu0
      %v806 = vpop.f32.mrf.mxu0
      %807 = vdwg.mxu0
      %808 = vmatprep.subr.bf16.mxu0 0
      %809 = vmatpush1.bf16.msra.mxu0 0
      %810 = vmatprep.subr.bf16.mxu0 0
      %811 = vmatpush1.bf16.msra.mxu0 0
      %812 = vmatprep.subr.bf16.mxu0 0
      %813 = vmatpush1.bf16.msra.mxu0 0
      %814 = vmatprep.subr.bf16.mxu0 0
      %815 = vmatpush1.bf16.msra.mxu0 0
      %816 = vmatprep.subr.bf16.mxu0 %v569
      %817 = vmatpush1.bf16.msra.mxu0 %v568
      %818 = vmatprep.subr.bf16.mxu0 %v553
      %819 = vmatpush1.bf16.msra.mxu0 %v552
      %820 = vmatprep.subr.bf16.mxu0 %v537
      %821 = vmatpush1.bf16.msra.mxu0 %v536
      %822 = vmatprep.subr.bf16.mxu0 %v521
      %823 = vmatpush1.bf16.msra.mxu0 %v520
      %824 = vmatprep.subr.bf16.mxu0 0
      %825 = vmatpush2.bf16.msra.mxu0 0
      %826 = vmatprep.subr.bf16.mxu0 0
      %827 = vmatpush2.bf16.msra.mxu0 0
      %828 = vmatprep.subr.bf16.mxu0 0
      %829 = vmatpush2.bf16.msra.mxu0 0
      %830 = vmatprep.subr.bf16.mxu0 0
      %831 = vmatpush2.bf16.msra.mxu0 0
      %832 = vmatprep.subr.bf16.mxu0 0
      %833 = vmatpush2.bf16.msra.mxu0 0
      %834 = vmatprep.subr.bf16.mxu0 0
      %835 = vmatpush2.bf16.msra.mxu0 0
      %836 = vmatprep.subr.bf16.mxu0 0
      %837 = vmatpush2.bf16.msra.mxu0 0
      %838 = vmatprep.subr.bf16.mxu0 0
      %839 = vmatpush2.bf16.msra.mxu0 0
      %840 = vmatprep.mubr.bf16.mxu0 0
      %841 = vmatmul.mubr.bf16.gmra.mxu0 %v642
      %v842 = vpop.f32.mrf.mxu0
      %v843 = vadd.f32 0.0, %v842
      %v844 = vpop.f32.mrf.mxu0
      %v845 = vadd.f32 0.0, %v844
      %v846 = vpop.f32.mrf.mxu0
      %v847 = vpop.f32.mrf.mxu0
      %848 = vdwg.mxu0
      %849 = vmatprep.subr.bf16.mxu0 0
      %850 = vmatpush1.bf16.msra.mxu0 0
      %851 = vmatprep.subr.bf16.mxu0 0
      %852 = vmatpush1.bf16.msra.mxu0 0
      %853 = vmatprep.subr.bf16.mxu0 0
      %854 = vmatpush1.bf16.msra.mxu0 0
      %855 = vmatprep.subr.bf16.mxu0 0
      %856 = vmatpush1.bf16.msra.mxu0 0
      %857 = vmatprep.subr.bf16.mxu0 %v571
      %858 = vmatpush1.bf16.msra.mxu0 %v570
      %859 = vmatprep.subr.bf16.mxu0 %v555
      %860 = vmatpush1.bf16.msra.mxu0 %v554
      %861 = vmatprep.subr.bf16.mxu0 %v539
      %862 = vmatpush1.bf16.msra.mxu0 %v538
      %863 = vmatprep.subr.bf16.mxu0 %v523
      %864 = vmatpush1.bf16.msra.mxu0 %v522
      %865 = vmatprep.subr.bf16.mxu0 0
      %866 = vmatpush2.bf16.msra.mxu0 0
      %867 = vmatprep.subr.bf16.mxu0 0
      %868 = vmatpush2.bf16.msra.mxu0 0
      %869 = vmatprep.subr.bf16.mxu0 0
      %870 = vmatpush2.bf16.msra.mxu0 0
      %871 = vmatprep.subr.bf16.mxu0 0
      %872 = vmatpush2.bf16.msra.mxu0 0
      %873 = vmatprep.subr.bf16.mxu0 0
      %874 = vmatpush2.bf16.msra.mxu0 0
      %875 = vmatprep.subr.bf16.mxu0 0
      %876 = vmatpush2.bf16.msra.mxu0 0
      %877 = vmatprep.subr.bf16.mxu0 0
      %878 = vmatpush2.bf16.msra.mxu0 0
      %879 = vmatprep.subr.bf16.mxu0 0
      %880 = vmatpush2.bf16.msra.mxu0 0
      %881 = vmatprep.mubr.bf16.mxu0 0
      %882 = vmatmul.mubr.bf16.gmra.mxu0 %v642
      %v883 = vpop.f32.mrf.mxu0
      %v884 = vadd.f32 0.0, %v883
      %v885 = vpop.f32.mrf.mxu0
      %v886 = vadd.f32 0.0, %v885
      %v887 = vpop.f32.mrf.mxu0
      %v888 = vpop.f32.mrf.mxu0
      %889 = vdwg.mxu0
      %890 = vmatprep.subr.bf16.mxu0 0
      %891 = vmatpush1.bf16.msra.mxu0 0
      %892 = vmatprep.subr.bf16.mxu0 0
      %893 = vmatpush1.bf16.msra.mxu0 0
      %894 = vmatprep.subr.bf16.mxu0 0
      %895 = vmatpush1.bf16.msra.mxu0 0
      %896 = vmatprep.subr.bf16.mxu0 0
      %897 = vmatpush1.bf16.msra.mxu0 0
      %898 = vmatprep.subr.bf16.mxu0 %v573
      %899 = vmatpush1.bf16.msra.mxu0 %v572
      %900 = vmatprep.subr.bf16.mxu0 %v557
      %901 = vmatpush1.bf16.msra.mxu0 %v556
      %902 = vmatprep.subr.bf16.mxu0 %v541
      %903 = vmatpush1.bf16.msra.mxu0 %v540
      %904 = vmatprep.subr.bf16.mxu0 %v525
      %905 = vmatpush1.bf16.msra.mxu0 %v524
      %906 = vmatprep.subr.bf16.mxu0 0
      %907 = vmatpush2.bf16.msra.mxu0 0
      %908 = vmatprep.subr.bf16.mxu0 0
      %909 = vmatpush2.bf16.msra.mxu0 0
      %910 = vmatprep.subr.bf16.mxu0 0
      %911 = vmatpush2.bf16.msra.mxu0 0
      %912 = vmatprep.subr.bf16.mxu0 0
      %913 = vmatpush2.bf16.msra.mxu0 0
      %914 = vmatprep.subr.bf16.mxu0 0
      %915 = vmatpush2.bf16.msra.mxu0 0
      %916 = vmatprep.subr.bf16.mxu0 0
      %917 = vmatpush2.bf16.msra.mxu0 0
      %918 = vmatprep.subr.bf16.mxu0 0
      %919 = vmatpush2.bf16.msra.mxu0 0
      %920 = vmatprep.subr.bf16.mxu0 0
      %921 = vmatpush2.bf16.msra.mxu0 0
      %922 = vmatprep.mubr.bf16.mxu0 0
      %923 = vmatmul.mubr.bf16.gmra.mxu0 %v642
      %v924 = vpop.f32.mrf.mxu0
      %v925 = vadd.f32 0.0, %v924
      %v926 = vpop.f32.mrf.mxu0
      %v927 = vadd.f32 0.0, %v926
      %v928 = vpop.f32.mrf.mxu0
      %v929 = vpop.f32.mrf.mxu0
      %930 = vdwg.mxu0
      %931 = vmatprep.subr.bf16.mxu0 0
      %932 = vmatpush1.bf16.msra.mxu0 0
      %933 = vmatprep.subr.bf16.mxu0 0
      %934 = vmatpush1.bf16.msra.mxu0 0
      %935 = vmatprep.subr.bf16.mxu0 0
      %936 = vmatpush1.bf16.msra.mxu0 0
      %937 = vmatprep.subr.bf16.mxu0 0
      %938 = vmatpush1.bf16.msra.mxu0 0
      %939 = vmatprep.subr.bf16.mxu0 %v575
      %940 = vmatpush1.bf16.msra.mxu0 %v574
      %941 = vmatprep.subr.bf16.mxu0 %v559
      %942 = vmatpush1.bf16.msra.mxu0 %v558
      %943 = vmatprep.subr.bf16.mxu0 %v543
      %944 = vmatpush1.bf16.msra.mxu0 %v542
      %945 = vmatprep.subr.bf16.mxu0 %v527
      %946 = vmatpush1.bf16.msra.mxu0 %v526
      %947 = vmatprep.subr.bf16.mxu0 0
      %948 = vmatpush2.bf16.msra.mxu0 0
      %949 = vmatprep.subr.bf16.mxu0 0
      %950 = vmatpush2.bf16.msra.mxu0 0
      %951 = vmatprep.subr.bf16.mxu0 0
      %952 = vmatpush2.bf16.msra.mxu0 0
      %953 = vmatprep.subr.bf16.mxu0 0
      %954 = vmatpush2.bf16.msra.mxu0 0
      %955 = vmatprep.subr.bf16.mxu0 0
      %956 = vmatpush2.bf16.msra.mxu0 0
      %957 = vmatprep.subr.bf16.mxu0 0
      %958 = vmatpush2.bf16.msra.mxu0 0
      %959 = vmatprep.subr.bf16.mxu0 0
      %960 = vmatpush2.bf16.msra.mxu0 0
      %961 = vmatprep.subr.bf16.mxu0 0
      %962 = vmatpush2.bf16.msra.mxu0 0
      %963 = vmatprep.mubr.bf16.mxu0 0
      %964 = vmatmul.mubr.bf16.gmra.mxu0 %v642
      %v965 = vpop.f32.mrf.mxu0
      %v966 = vadd.f32 0.0, %v965
      %v967 = vpop.f32.mrf.mxu0
      %v968 = vadd.f32 0.0, %v967
      %v969 = vpop.f32.mrf.mxu0
      %v970 = vpop.f32.mrf.mxu0
      %971 = vdwg.mxu0
      %v972 = vld [vmem:[%s2] sm:$0x7]
      %974 = vset.pattern.permute.xlu0 0
      %975 = vperm.xlu0 %974, %v972
      %v976 = vpop.permute.xlu0 %975
      %v978 = vmul.f32 %v679, %v976
      %v979 = vmul.f32 %v681, %v976
      %v980 = vmul.f32 %v720, %v976
      %v981 = vmul.f32 %v722, %v976
      %v982 = vmul.f32 %v761, %v976
      %v983 = vmul.f32 %v763, %v976
      %v984 = vmul.f32 %v802, %v976
      %v985 = vmul.f32 %v804, %v976
      %v986 = vmul.f32 %v843, %v976
      %v987 = vmul.f32 %v845, %v976
      %v988 = vmul.f32 %v884, %v976
      %v989 = vmul.f32 %v886, %v976
      %v990 = vmul.f32 %v925, %v976
      %v991 = vmul.f32 %v927, %v976
      %v992 = vmul.f32 %v966, %v976
      %v993 = vmul.f32 %v968, %v976
      %v994 = vld [vmem:[%s3] sm:$0x7]
      %996 = vset.pattern.permute.xlu0 0
      %997 = vperm.xlu0 %996, %v994
      %v998 = vpop.permute.xlu0 %997
      %v1000 = vadd.f32 %v978, %v998
      %v1001 = vadd.f32 %v979, %v998
      %v1002 = vadd.f32 %v980, %v998
      %v1003 = vadd.f32 %v981, %v998
      %v1004 = vadd.f32 %v982, %v998
      %v1005 = vadd.f32 %v983, %v998
      %v1006 = vadd.f32 %v984, %v998
      %v1007 = vadd.f32 %v985, %v998
      %v1008 = vadd.f32 %v986, %v998
      %v1009 = vadd.f32 %v987, %v998
      %v1010 = vadd.f32 %v988, %v998
      %v1011 = vadd.f32 %v989, %v998
      %v1012 = vadd.f32 %v990, %v998
      %v1013 = vadd.f32 %v991, %v998
      %v1014 = vadd.f32 %v992, %v998
      %v1015 = vadd.f32 %v993, %v998
      %v1016 = vtanh.pop %v1000
      %v1017 = vtanh.pop %v1001
      %v1018 = vtanh.pop %v1002
      %v1019 = vtanh.pop %v1003
      %v1020 = vtanh.pop %v1004
      %v1021 = vtanh.pop %v1005
      %v1022 = vtanh.pop %v1006
      %v1023 = vtanh.pop %v1007
      %v1024 = vtanh.pop %v1008
      %v1025 = vtanh.pop %v1009
      %v1026 = vtanh.pop %v1010
      %v1027 = vtanh.pop %v1011
      %v1028 = vtanh.pop %v1012
      %v1029 = vtanh.pop %v1013
      %v1030 = vtanh.pop %v1014
      %v1031 = vtanh.pop %v1015
      %v1048 = vcombine.low %v1016, %v1017
      %v1049 = vcombine.low %v1018, %v1019
      %v1050 = vcombine.low %v1020, %v1021
      %v1051 = vcombine.low %v1022, %v1023
      %v1052 = vcombine.low %v1024, %v1025
      %v1053 = vcombine.low %v1026, %v1027
      %v1054 = vcombine.low %v1028, %v1029
      %v1055 = vcombine.low %v1030, %v1031
      %1064 = vst [vmem:[%s252] sm:$0x77] %v1048
      %1065 = vst [vmem:[%s252 + $0x8] sm:$0x77] %v1049
      %1066 = vst [vmem:[%s252 + $0x10] sm:$0x77] %v1050
      %1067 = vst [vmem:[%s252 + $0x18] sm:$0x77] %v1051
      %1068 = vst [vmem:[%s252 + $0x20] sm:$0x77] %v1052
      %1069 = vst [vmem:[%s252 + $0x28] sm:$0x77] %v1053
      %1070 = vst [vmem:[%s252 + $0x30] sm:$0x77] %v1054
      %1071 = vst [vmem:[%s252 + $0x38] sm:$0x77] %v1055
      %s1072 = smul.u32 16, %s20
      %p1073 = scmp.lt.s32.totalorder %s19, 3
      %s1074 = scalar_select %p1073, %s19, 3
      %p1075 = scmp.lt.s32.totalorder %s1072, 15
      %s1076 = scalar_select %p1075, %s1072, 15
      %s1077 = smul.addr %s1074, 16
      %s1078 = sadd.s32 %s1076, %s1077
      %s1079 = smul.addr %s1078, 4
      %s1080 = scalar_lea.vmem %s4, %s1079
      // Predicated region
      $region37: #{netG_forward.9} parent=35 // pred_check
        %p1081 = pneg %p143
      $region38: #{netG_forward.9} parent=35 // pred_check_branch
        %1083 = sbr.rel (%p1081) target = $region40
      $region39: #{netG_forward.9} parent=35 // pred_region
        %s1084 = smul.u32 16, %s20
      $region40: #{netG_forward.9} parent=35 // pred_fallthru
        _
    $region36: #{netG_forward.9} parent=5 // pred_fallthru
      _
    %p1085 = scmp.le.s32.totalorder 2, %s10
    // Predicated region
    $region41: #{netG_forward.9} parent=5 // pred_check
      %p1086 = pneg %p1085
    $region42: #{netG_forward.9} parent=5 // pred_check_branch
      %1088 = sbr.rel (%p1086) target = $region44
    $region43: #{netG_forward.9} parent=5 // pred_region
      %s1089 = ssub.s32 %s10, 2
      // Predicated region
      $region45: #{netG_forward.9} parent=43 // pred_check
        %p1090 = pneg %p149
      $region46: #{netG_forward.9} parent=43 // pred_check_branch
        %1092 = sbr.rel (%p1090) target = $region48
      $region47: #{netG_forward.9} parent=43 // pred_region
        %s1093 = smul.u32 16, %s22
        %p1094 = scmp.lt.s32.totalorder %s21, 3
        %s1095 = scalar_select %p1094, %s21, 3
        %p1096 = scmp.lt.s32.totalorder %s1093, 15
        %s1097 = scalar_select %p1096, %s1093, 15
        %s1098 = smul.addr %s1095, 16
        %s1099 = sadd.s32 %s1097, %s1098
        %s1100 = smul.addr %s1099, 4
        %s1101 = scalar_lea.vmem %s4, %s1100
      $region48: #{netG_forward.9} parent=43 // pred_fallthru
        _
    $region44: #{netG_forward.9} parent=5 // pred_fallthru
      _
  $region6: #{netG_forward.9} parent=0 // loop_footer
    %s14 = sadd.s32 1, %s10
  $region7: #{netG_forward.9} parent=0 // loop_footer_branch
    %9 = sbr.rel target = $region3
  $region8: #{netG_forward.9} parent=0 // loop_exit
    _

</llo_original>
